<compile_context>
chip_gen: v7x
topology: tpu7x:2x2x1
jax: 0.10.0
libtpu: 0.0.40
codegen_flags: <defaults>
</compile_context>

<pallas_src>
import jax
import jax.numpy as jnp
from jax.experimental import pallas as pl
from jax.experimental.pallas import tpu as pltpu

BN_EPS = 1e-5

INPUT_SIZE = 3
HIDDEN = 32
NUM_HIDDEN_LAYERS = 18
OUTPUT_CHANNELS = 1
BATCH = 16

PAD = 128                                  # lane-dense feature width
NUM_BN_LAYERS = NUM_HIDDEN_LAYERS + 1      # initial + 18 middle = 19
SKIP_LAYERS = {7: 0, 13: 1}                # fused layer index -> skip-weight slot


# ---------------------------------------------------------------------------
# Single fused Pallas kernel: whole network, VMEM resident
# ---------------------------------------------------------------------------
def _mlp_fused_kernel(x_ref, w_ref, wskip_ref, vec_ref, wf_ref, bf_ref, o_ref):
    """x_ref   : (B, PAD)         zero-padded input (real cols [0, INPUT_SIZE))
       w_ref   : (19, PAD, PAD)   per-layer hidden weights, zero-padded
       wskip_ref:(2, PAD, PAD)    skip (input->hidden) weights for layers 7, 13
       vec_ref : (19, 8, PAD)     row 0 = bias, 1 = gamma, 2 = beta, rest zero
       wf_ref  : (PAD, PAD)       final linear weight, zero-padded
       bf_ref  : (1, PAD)         final linear bias, zero-padded
       o_ref   : (B, PAD)         padded output (real cols [0, OUTPUT_CHANNELS))
    """
    x = x_ref[...]                                   # (B, PAD)
    inv_b = jnp.float32(1.0 / x_ref.shape[0])
    h = x
    for layer in range(NUM_BN_LAYERS):               # statically unrolled
        y = jnp.dot(h, w_ref[layer], preferred_element_type=jnp.float32)
        if layer in SKIP_LAYERS:                     # skip-concat == split matmul
            y = y + jnp.dot(x, wskip_ref[SKIP_LAYERS[layer]],
                            preferred_element_type=jnp.float32)
        vec = vec_ref[layer]                         # (8, PAD)
        y = y + vec[0:1, :]                          # linear bias
        # Single-pass training-mode BatchNorm1d statistics (biased variance).
        mean = jnp.sum(y, axis=0, keepdims=True) * inv_b
        var = jnp.maximum(
            jnp.sum(y * y, axis=0, keepdims=True) * inv_b - mean * mean, 0.0)
        scale = vec[1:2, :] * jax.lax.rsqrt(var + BN_EPS)    # gamma folded in
        shift = vec[2:3, :] - mean * scale                   # beta folded in
        h = jnp.maximum(y * scale + shift, 0.0)              # BN + ReLU
    o_ref[...] = (jnp.dot(h, wf_ref[...], preferred_element_type=jnp.float32)
                  + bf_ref[...])


def _vmem_spec():
    return pl.BlockSpec(memory_space=pltpu.MemorySpace.VMEM)


@jax.jit
def neural_net_forward(x, packed):
    """x: (batch, INPUT_SIZE) -> (batch, OUTPUT_CHANNELS)."""
    w_all, wskip_all, vec_all, wf, bf = packed
    batch = x.shape[0]
    x_pad = jnp.zeros((batch, PAD), jnp.float32).at[:, :INPUT_SIZE].set(x)
    out_pad = pl.pallas_call(
        _mlp_fused_kernel,
        out_shape=jax.ShapeDtypeStruct((batch, PAD), jnp.float32),
        in_specs=[_vmem_spec() for _ in range(6)],
        out_specs=_vmem_spec(),
    )(x_pad, w_all, wskip_all, vec_all, wf, bf)
    return out_pad[:, :OUTPUT_CHANNELS]


# ---------------------------------------------------------------------------
# Parameters: raw (PyTorch-shaped, weights stored as (in, out)) and packed/padded
# ---------------------------------------------------------------------------
def init_raw_params(key):
    def linear_params(k, cin, cout):
        kw, kb = jax.random.split(k)
        bound = 1.0 / (cin ** 0.5)
        w = jax.random.uniform(kw, (cin, cout), jnp.float32, -bound, bound)
        b = jax.random.uniform(kb, (cout,), jnp.float32, -bound, bound)
        return w, b

    keys = jax.random.split(key, NUM_BN_LAYERS + 1)
    bn_layers = []
    # initial layer (index 0) + middle layers (indices 1..18)
    for layer in range(NUM_BN_LAYERS):
        if layer == 0:
            cin = INPUT_SIZE
        elif layer in SKIP_LAYERS:
            cin = INPUT_SIZE + HIDDEN        # concat(skip_input, hidden)
        else:
            cin = HIDDEN
        w, b = linear_params(keys[layer], cin, HIDDEN)
        gamma = jnp.ones((HIDDEN,), jnp.float32)
        beta = jnp.zeros((HIDDEN,), jnp.float32)
        bn_layers.append((w, b, gamma, beta))
    wf, bf = linear_params(keys[-1], HIDDEN, OUTPUT_CHANNELS)
    return bn_layers, (wf, bf)


def pack_params(raw):
    bn_layers, (wf_raw, bf_raw) = raw
    w_all = jnp.zeros((NUM_BN_LAYERS, PAD, PAD), jnp.float32)
    wskip_all = jnp.zeros((2, PAD, PAD), jnp.float32)
    vec_all = jnp.zeros((NUM_BN_LAYERS, 8, PAD), jnp.float32)

    for layer, (w, b, gamma, beta) in enumerate(bn_layers):
        if layer in SKIP_LAYERS:
            # torch.cat((skip_input, out)) puts the skip input first, so the
            # first INPUT_SIZE rows of the concatenated weight act on it.
            wskip_all = wskip_all.at[
                SKIP_LAYERS[layer], :INPUT_SIZE, :HIDDEN].set(w[:INPUT_SIZE])
            w_all = w_all.at[layer, :HIDDEN, :HIDDEN].set(w[INPUT_SIZE:])
        else:
            cin = w.shape[0]
            w_all = w_all.at[layer, :cin, :HIDDEN].set(w)
        vec_all = vec_all.at[layer, 0, :HIDDEN].set(b)
        vec_all = vec_all.at[layer, 1, :HIDDEN].set(gamma)
        vec_all = vec_all.at[layer, 2, :HIDDEN].set(beta)

    wf = jnp.zeros((PAD, PAD), jnp.float32).at[:HIDDEN, :OUTPUT_CHANNELS].set(wf_raw)
    bf = jnp.zeros((1, PAD), jnp.float32).at[0, :OUTPUT_CHANNELS].set(bf_raw)
    return (w_all, wskip_all, vec_all, wf, bf)


# ---------------------------------------------------------------------------
# Pure-JAX reference (mirrors the PyTorch forward, unpadded, with concat)
# ---------------------------------------------------------------------------
def reference_forward(x, raw):
    bn_layers, (wf, bf) = raw

    def block(h, w, b, gamma, beta):
        y = h @ w + b
        mean = jnp.mean(y, axis=0, keepdims=True)
        var = jnp.mean((y - mean) ** 2, axis=0, keepdims=True)
        y_hat = (y - mean) * jax.lax.rsqrt(var + BN_EPS)
        return jnp.maximum(y_hat * gamma + beta, 0.0)

    skip_input = x
    out = block(x, *bn_layers[0])
    for i in range(1, NUM_BN_LAYERS):
        if i in SKIP_LAYERS:
            out = jnp.concatenate((skip_input, out), axis=1)
        out = block(out, *bn_layers[i])
    return out @ wf + bf


# ---------------------------------------------------------------------------
if __name__ == "__main__":
    key = jax.random.PRNGKey(0)
    k_x, k_p = jax.random.split(key)
    x = jax.random.normal(k_x, (BATCH, INPUT_SIZE), jnp.float32)

    raw = init_raw_params(k_p)
    packed = pack_params(raw)

    out = neural_net_forward(x, packed)
    out = jax.block_until_ready(out)
    assert out.shape == (BATCH, OUTPUT_CHANNELS), out.shape
    assert bool(jnp.all(jnp.isfinite(out)))

    # Sanity check against the pure-JAX (concat-based) reference; loose
    # tolerance to absorb TPU matmul precision differences.
    ref = reference_forward(x, raw)
    max_diff = float(jnp.max(jnp.abs(out - ref)))
    assert max_diff < 5e-2, f"kernel vs reference max |diff| = {max_diff}"

    print("KERNEL_OK")
</pallas_src>

<mosaic_0001>
module attributes {stable_mosaic.version = 11 : i64} {
  func.func @_mlp_fused_kernel(%arg0: memref<16x128xf32, #tpu.memory_space<vmem>>, %arg1: memref<19x128x128xf32, #tpu.memory_space<vmem>>, %arg2: memref<2x128x128xf32, #tpu.memory_space<vmem>>, %arg3: memref<19x8x128xf32, #tpu.memory_space<vmem>>, %arg4: memref<128x128xf32, #tpu.memory_space<vmem>>, %arg5: memref<1x128xf32, #tpu.memory_space<vmem>>, %arg6: memref<16x128xf32, #tpu.memory_space<vmem>>) attributes {dimension_semantics = [], scalar_prefetch = 0 : i64, scratch_operands = 0 : i64, tpu.core_type = #tpu.core_type<tc>} {
    %c0 = arith.constant 0 : index
    %c0_0 = arith.constant 0 : index
    %0 = vector.load %arg0[%c0, %c0_0] : memref<16x128xf32, #tpu.memory_space<vmem>>, vector<16x128xf32>
    %c0_1 = arith.constant 0 : index
    %c0_2 = arith.constant 0 : index
    %c0_3 = arith.constant 0 : index
    %1 = vector.load %arg1[%c0_1, %c0_2, %c0_3] : memref<19x128x128xf32, #tpu.memory_space<vmem>>, vector<1x128x128xf32>
    %2 = vector.shape_cast %1 : vector<1x128x128xf32> to vector<128x128xf32>
    %cst = arith.constant dense<0.000000e+00> : vector<16x128xf32>
    %3 = tpu.matmul %0, %2, %cst {dimension_numbers = #tpu.dot_dimension_numbers<[1], [0], [0], [1], [0, 0, 1, 1], [], []>} : vector<16x128xf32>, vector<128x128xf32>, vector<16x128xf32> -> vector<16x128xf32>
    %c0_4 = arith.constant 0 : index
    %c0_5 = arith.constant 0 : index
    %c0_6 = arith.constant 0 : index
    %4 = vector.load %arg3[%c0_4, %c0_5, %c0_6] : memref<19x8x128xf32, #tpu.memory_space<vmem>>, vector<1x8x128xf32>
    %5 = vector.shape_cast %4 : vector<1x8x128xf32> to vector<8x128xf32>
    %6 = vector.extract_strided_slice %5 {offsets = [0, 0], sizes = [1, 128], strides = [1, 1]} : vector<8x128xf32> to vector<1x128xf32>
    %7 = vector.broadcast %6 : vector<1x128xf32> to vector<16x128xf32>
    %8 = arith.addf %3, %7 : vector<16x128xf32>
    %cst_7 = arith.constant dense<0.000000e+00> : vector<128xf32>
    %9 = vector.multi_reduction <add>, %8, %cst_7 [0] : vector<16x128xf32> to vector<128xf32>
    %10 = vector.shape_cast %9 : vector<128xf32> to vector<1x128xf32>
    %cst_8 = arith.constant 6.250000e-02 : f32
    %11 = vector.broadcast %cst_8 : f32 to vector<1x128xf32>
    %12 = arith.mulf %10, %11 : vector<1x128xf32>
    %13 = arith.mulf %8, %8 : vector<16x128xf32>
    %cst_9 = arith.constant dense<0.000000e+00> : vector<128xf32>
    %14 = vector.multi_reduction <add>, %13, %cst_9 [0] : vector<16x128xf32> to vector<128xf32>
    %15 = vector.shape_cast %14 : vector<128xf32> to vector<1x128xf32>
    %cst_10 = arith.constant 6.250000e-02 : f32
    %16 = vector.broadcast %cst_10 : f32 to vector<1x128xf32>
    %17 = arith.mulf %15, %16 : vector<1x128xf32>
    %18 = arith.mulf %12, %12 : vector<1x128xf32>
    %19 = arith.subf %17, %18 : vector<1x128xf32>
    %cst_11 = arith.constant 0.000000e+00 : f32
    %20 = vector.broadcast %cst_11 : f32 to vector<1x128xf32>
    %21 = arith.maximumf %19, %20 : vector<1x128xf32>
    %22 = vector.extract_strided_slice %5 {offsets = [1, 0], sizes = [1, 128], strides = [1, 1]} : vector<8x128xf32> to vector<1x128xf32>
    %cst_12 = arith.constant 9.99999974E-6 : f32
    %23 = vector.broadcast %cst_12 : f32 to vector<1x128xf32>
    %24 = arith.addf %21, %23 : vector<1x128xf32>
    %25 = math.rsqrt %24 : vector<1x128xf32>
    %26 = arith.mulf %22, %25 : vector<1x128xf32>
    %27 = vector.extract_strided_slice %5 {offsets = [2, 0], sizes = [1, 128], strides = [1, 1]} : vector<8x128xf32> to vector<1x128xf32>
    %28 = arith.mulf %12, %26 : vector<1x128xf32>
    %29 = arith.subf %27, %28 : vector<1x128xf32>
    %30 = vector.broadcast %26 : vector<1x128xf32> to vector<16x128xf32>
    %31 = arith.mulf %8, %30 : vector<16x128xf32>
    %32 = vector.broadcast %29 : vector<1x128xf32> to vector<16x128xf32>
    %33 = arith.addf %31, %32 : vector<16x128xf32>
    %cst_13 = arith.constant 0.000000e+00 : f32
    %34 = vector.broadcast %cst_13 : f32 to vector<16x128xf32>
    %35 = arith.maximumf %33, %34 : vector<16x128xf32>
    %c1 = arith.constant 1 : index
    %c0_14 = arith.constant 0 : index
    %c0_15 = arith.constant 0 : index
    %36 = vector.load %arg1[%c1, %c0_14, %c0_15] : memref<19x128x128xf32, #tpu.memory_space<vmem>>, vector<1x128x128xf32>
    %37 = vector.shape_cast %36 : vector<1x128x128xf32> to vector<128x128xf32>
    %cst_16 = arith.constant dense<0.000000e+00> : vector<16x128xf32>
    %38 = tpu.matmul %35, %37, %cst_16 {dimension_numbers = #tpu.dot_dimension_numbers<[1], [0], [0], [1], [0, 0, 1, 1], [], []>} : vector<16x128xf32>, vector<128x128xf32>, vector<16x128xf32> -> vector<16x128xf32>
    %c1_17 = arith.constant 1 : index
    %c0_18 = arith.constant 0 : index
    %c0_19 = arith.constant 0 : index
    %39 = vector.load %arg3[%c1_17, %c0_18, %c0_19] : memref<19x8x128xf32, #tpu.memory_space<vmem>>, vector<1x8x128xf32>
    %40 = vector.shape_cast %39 : vector<1x8x128xf32> to vector<8x128xf32>
    %41 = vector.extract_strided_slice %40 {offsets = [0, 0], sizes = [1, 128], strides = [1, 1]} : vector<8x128xf32> to vector<1x128xf32>
    %42 = vector.broadcast %41 : vector<1x128xf32> to vector<16x128xf32>
    %43 = arith.addf %38, %42 : vector<16x128xf32>
    %cst_20 = arith.constant dense<0.000000e+00> : vector<128xf32>
    %44 = vector.multi_reduction <add>, %43, %cst_20 [0] : vector<16x128xf32> to vector<128xf32>
    %45 = vector.shape_cast %44 : vector<128xf32> to vector<1x128xf32>
    %cst_21 = arith.constant 6.250000e-02 : f32
    %46 = vector.broadcast %cst_21 : f32 to vector<1x128xf32>
    %47 = arith.mulf %45, %46 : vector<1x128xf32>
    %48 = arith.mulf %43, %43 : vector<16x128xf32>
    %cst_22 = arith.constant dense<0.000000e+00> : vector<128xf32>
    %49 = vector.multi_reduction <add>, %48, %cst_22 [0] : vector<16x128xf32> to vector<128xf32>
    %50 = vector.shape_cast %49 : vector<128xf32> to vector<1x128xf32>
    %cst_23 = arith.constant 6.250000e-02 : f32
    %51 = vector.broadcast %cst_23 : f32 to vector<1x128xf32>
    %52 = arith.mulf %50, %51 : vector<1x128xf32>
    %53 = arith.mulf %47, %47 : vector<1x128xf32>
    %54 = arith.subf %52, %53 : vector<1x128xf32>
    %cst_24 = arith.constant 0.000000e+00 : f32
    %55 = vector.broadcast %cst_24 : f32 to vector<1x128xf32>
    %56 = arith.maximumf %54, %55 : vector<1x128xf32>
    %57 = vector.extract_strided_slice %40 {offsets = [1, 0], sizes = [1, 128], strides = [1, 1]} : vector<8x128xf32> to vector<1x128xf32>
    %cst_25 = arith.constant 9.99999974E-6 : f32
    %58 = vector.broadcast %cst_25 : f32 to vector<1x128xf32>
    %59 = arith.addf %56, %58 : vector<1x128xf32>
    %60 = math.rsqrt %59 : vector<1x128xf32>
    %61 = arith.mulf %57, %60 : vector<1x128xf32>
    %62 = vector.extract_strided_slice %40 {offsets = [2, 0], sizes = [1, 128], strides = [1, 1]} : vector<8x128xf32> to vector<1x128xf32>
    %63 = arith.mulf %47, %61 : vector<1x128xf32>
    %64 = arith.subf %62, %63 : vector<1x128xf32>
    %65 = vector.broadcast %61 : vector<1x128xf32> to vector<16x128xf32>
    %66 = arith.mulf %43, %65 : vector<16x128xf32>
    %67 = vector.broadcast %64 : vector<1x128xf32> to vector<16x128xf32>
    %68 = arith.addf %66, %67 : vector<16x128xf32>
    %cst_26 = arith.constant 0.000000e+00 : f32
    %69 = vector.broadcast %cst_26 : f32 to vector<16x128xf32>
    %70 = arith.maximumf %68, %69 : vector<16x128xf32>
    %c2 = arith.constant 2 : index
    %c0_27 = arith.constant 0 : index
    %c0_28 = arith.constant 0 : index
    %71 = vector.load %arg1[%c2, %c0_27, %c0_28] : memref<19x128x128xf32, #tpu.memory_space<vmem>>, vector<1x128x128xf32>
    %72 = vector.shape_cast %71 : vector<1x128x128xf32> to vector<128x128xf32>
    %cst_29 = arith.constant dense<0.000000e+00> : vector<16x128xf32>
    %73 = tpu.matmul %70, %72, %cst_29 {dimension_numbers = #tpu.dot_dimension_numbers<[1], [0], [0], [1], [0, 0, 1, 1], [], []>} : vector<16x128xf32>, vector<128x128xf32>, vector<16x128xf32> -> vector<16x128xf32>
    %c2_30 = arith.constant 2 : index
    %c0_31 = arith.constant 0 : index
    %c0_32 = arith.constant 0 : index
    %74 = vector.load %arg3[%c2_30, %c0_31, %c0_32] : memref<19x8x128xf32, #tpu.memory_space<vmem>>, vector<1x8x128xf32>
    %75 = vector.shape_cast %74 : vector<1x8x128xf32> to vector<8x128xf32>
    %76 = vector.extract_strided_slice %75 {offsets = [0, 0], sizes = [1, 128], strides = [1, 1]} : vector<8x128xf32> to vector<1x128xf32>
    %77 = vector.broadcast %76 : vector<1x128xf32> to vector<16x128xf32>
    %78 = arith.addf %73, %77 : vector<16x128xf32>
    %cst_33 = arith.constant dense<0.000000e+00> : vector<128xf32>
    %79 = vector.multi_reduction <add>, %78, %cst_33 [0] : vector<16x128xf32> to vector<128xf32>
    %80 = vector.shape_cast %79 : vector<128xf32> to vector<1x128xf32>
    %cst_34 = arith.constant 6.250000e-02 : f32
    %81 = vector.broadcast %cst_34 : f32 to vector<1x128xf32>
    %82 = arith.mulf %80, %81 : vector<1x128xf32>
    %83 = arith.mulf %78, %78 : vector<16x128xf32>
    %cst_35 = arith.constant dense<0.000000e+00> : vector<128xf32>
    %84 = vector.multi_reduction <add>, %83, %cst_35 [0] : vector<16x128xf32> to vector<128xf32>
    %85 = vector.shape_cast %84 : vector<128xf32> to vector<1x128xf32>
    %cst_36 = arith.constant 6.250000e-02 : f32
    %86 = vector.broadcast %cst_36 : f32 to vector<1x128xf32>
    %87 = arith.mulf %85, %86 : vector<1x128xf32>
    %88 = arith.mulf %82, %82 : vector<1x128xf32>
    %89 = arith.subf %87, %88 : vector<1x128xf32>
    %cst_37 = arith.constant 0.000000e+00 : f32
    %90 = vector.broadcast %cst_37 : f32 to vector<1x128xf32>
    %91 = arith.maximumf %89, %90 : vector<1x128xf32>
    %92 = vector.extract_strided_slice %75 {offsets = [1, 0], sizes = [1, 128], strides = [1, 1]} : vector<8x128xf32> to vector<1x128xf32>
    %cst_38 = arith.constant 9.99999974E-6 : f32
    %93 = vector.broadcast %cst_38 : f32 to vector<1x128xf32>
    %94 = arith.addf %91, %93 : vector<1x128xf32>
    %95 = math.rsqrt %94 : vector<1x128xf32>
    %96 = arith.mulf %92, %95 : vector<1x128xf32>
    %97 = vector.extract_strided_slice %75 {offsets = [2, 0], sizes = [1, 128], strides = [1, 1]} : vector<8x128xf32> to vector<1x128xf32>
    %98 = arith.mulf %82, %96 : vector<1x128xf32>
    %99 = arith.subf %97, %98 : vector<1x128xf32>
    %100 = vector.broadcast %96 : vector<1x128xf32> to vector<16x128xf32>
    %101 = arith.mulf %78, %100 : vector<16x128xf32>
    %102 = vector.broadcast %99 : vector<1x128xf32> to vector<16x128xf32>
    %103 = arith.addf %101, %102 : vector<16x128xf32>
    %cst_39 = arith.constant 0.000000e+00 : f32
    %104 = vector.broadcast %cst_39 : f32 to vector<16x128xf32>
    %105 = arith.maximumf %103, %104 : vector<16x128xf32>
    %c3 = arith.constant 3 : index
    %c0_40 = arith.constant 0 : index
    %c0_41 = arith.constant 0 : index
    %106 = vector.load %arg1[%c3, %c0_40, %c0_41] : memref<19x128x128xf32, #tpu.memory_space<vmem>>, vector<1x128x128xf32>
    %107 = vector.shape_cast %106 : vector<1x128x128xf32> to vector<128x128xf32>
    %cst_42 = arith.constant dense<0.000000e+00> : vector<16x128xf32>
    %108 = tpu.matmul %105, %107, %cst_42 {dimension_numbers = #tpu.dot_dimension_numbers<[1], [0], [0], [1], [0, 0, 1, 1], [], []>} : vector<16x128xf32>, vector<128x128xf32>, vector<16x128xf32> -> vector<16x128xf32>
    %c3_43 = arith.constant 3 : index
    %c0_44 = arith.constant 0 : index
    %c0_45 = arith.constant 0 : index
    %109 = vector.load %arg3[%c3_43, %c0_44, %c0_45] : memref<19x8x128xf32, #tpu.memory_space<vmem>>, vector<1x8x128xf32>
    %110 = vector.shape_cast %109 : vector<1x8x128xf32> to vector<8x128xf32>
    %111 = vector.extract_strided_slice %110 {offsets = [0, 0], sizes = [1, 128], strides = [1, 1]} : vector<8x128xf32> to vector<1x128xf32>
    %112 = vector.broadcast %111 : vector<1x128xf32> to vector<16x128xf32>
    %113 = arith.addf %108, %112 : vector<16x128xf32>
    %cst_46 = arith.constant dense<0.000000e+00> : vector<128xf32>
    %114 = vector.multi_reduction <add>, %113, %cst_46 [0] : vector<16x128xf32> to vector<128xf32>
    %115 = vector.shape_cast %114 : vector<128xf32> to vector<1x128xf32>
    %cst_47 = arith.constant 6.250000e-02 : f32
    %116 = vector.broadcast %cst_47 : f32 to vector<1x128xf32>
    %117 = arith.mulf %115, %116 : vector<1x128xf32>
    %118 = arith.mulf %113, %113 : vector<16x128xf32>
    %cst_48 = arith.constant dense<0.000000e+00> : vector<128xf32>
    %119 = vector.multi_reduction <add>, %118, %cst_48 [0] : vector<16x128xf32> to vector<128xf32>
    %120 = vector.shape_cast %119 : vector<128xf32> to vector<1x128xf32>
    %cst_49 = arith.constant 6.250000e-02 : f32
    %121 = vector.broadcast %cst_49 : f32 to vector<1x128xf32>
    %122 = arith.mulf %120, %121 : vector<1x128xf32>
    %123 = arith.mulf %117, %117 : vector<1x128xf32>
    %124 = arith.subf %122, %123 : vector<1x128xf32>
    %cst_50 = arith.constant 0.000000e+00 : f32
    %125 = vector.broadcast %cst_50 : f32 to vector<1x128xf32>
    %126 = arith.maximumf %124, %125 : vector<1x128xf32>
    %127 = vector.extract_strided_slice %110 {offsets = [1, 0], sizes = [1, 128], strides = [1, 1]} : vector<8x128xf32> to vector<1x128xf32>
    %cst_51 = arith.constant 9.99999974E-6 : f32
    %128 = vector.broadcast %cst_51 : f32 to vector<1x128xf32>
    %129 = arith.addf %126, %128 : vector<1x128xf32>
    %130 = math.rsqrt %129 : vector<1x128xf32>
    %131 = arith.mulf %127, %130 : vector<1x128xf32>
    %132 = vector.extract_strided_slice %110 {offsets = [2, 0], sizes = [1, 128], strides = [1, 1]} : vector<8x128xf32> to vector<1x128xf32>
    %133 = arith.mulf %117, %131 : vector<1x128xf32>
    %134 = arith.subf %132, %133 : vector<1x128xf32>
    %135 = vector.broadcast %131 : vector<1x128xf32> to vector<16x128xf32>
    %136 = arith.mulf %113, %135 : vector<16x128xf32>
    %137 = vector.broadcast %134 : vector<1x128xf32> to vector<16x128xf32>
    %138 = arith.addf %136, %137 : vector<16x128xf32>
    %cst_52 = arith.constant 0.000000e+00 : f32
    %139 = vector.broadcast %cst_52 : f32 to vector<16x128xf32>
    %140 = arith.maximumf %138, %139 : vector<16x128xf32>
    %c4 = arith.constant 4 : index
    %c0_53 = arith.constant 0 : index
    %c0_54 = arith.constant 0 : index
    %141 = vector.load %arg1[%c4, %c0_53, %c0_54] : memref<19x128x128xf32, #tpu.memory_space<vmem>>, vector<1x128x128xf32>
    %142 = vector.shape_cast %141 : vector<1x128x128xf32> to vector<128x128xf32>
    %cst_55 = arith.constant dense<0.000000e+00> : vector<16x128xf32>
    %143 = tpu.matmul %140, %142, %cst_55 {dimension_numbers = #tpu.dot_dimension_numbers<[1], [0], [0], [1], [0, 0, 1, 1], [], []>} : vector<16x128xf32>, vector<128x128xf32>, vector<16x128xf32> -> vector<16x128xf32>
    %c4_56 = arith.constant 4 : index
    %c0_57 = arith.constant 0 : index
    %c0_58 = arith.constant 0 : index
    %144 = vector.load %arg3[%c4_56, %c0_57, %c0_58] : memref<19x8x128xf32, #tpu.memory_space<vmem>>, vector<1x8x128xf32>
    %145 = vector.shape_cast %144 : vector<1x8x128xf32> to vector<8x128xf32>
    %146 = vector.extract_strided_slice %145 {offsets = [0, 0], sizes = [1, 128], strides = [1, 1]} : vector<8x128xf32> to vector<1x128xf32>
    %147 = vector.broadcast %146 : vector<1x128xf32> to vector<16x128xf32>
    %148 = arith.addf %143, %147 : vector<16x128xf32>
    %cst_59 = arith.constant dense<0.000000e+00> : vector<128xf32>
    %149 = vector.multi_reduction <add>, %148, %cst_59 [0] : vector<16x128xf32> to vector<128xf32>
    %150 = vector.shape_cast %149 : vector<128xf32> to vector<1x128xf32>
    %cst_60 = arith.constant 6.250000e-02 : f32
    %151 = vector.broadcast %cst_60 : f32 to vector<1x128xf32>
    %152 = arith.mulf %150, %151 : vector<1x128xf32>
    %153 = arith.mulf %148, %148 : vector<16x128xf32>
    %cst_61 = arith.constant dense<0.000000e+00> : vector<128xf32>
    %154 = vector.multi_reduction <add>, %153, %cst_61 [0] : vector<16x128xf32> to vector<128xf32>
    %155 = vector.shape_cast %154 : vector<128xf32> to vector<1x128xf32>
    %cst_62 = arith.constant 6.250000e-02 : f32
    %156 = vector.broadcast %cst_62 : f32 to vector<1x128xf32>
    %157 = arith.mulf %155, %156 : vector<1x128xf32>
    %158 = arith.mulf %152, %152 : vector<1x128xf32>
    %159 = arith.subf %157, %158 : vector<1x128xf32>
    %cst_63 = arith.constant 0.000000e+00 : f32
    %160 = vector.broadcast %cst_63 : f32 to vector<1x128xf32>
    %161 = arith.maximumf %159, %160 : vector<1x128xf32>
    %162 = vector.extract_strided_slice %145 {offsets = [1, 0], sizes = [1, 128], strides = [1, 1]} : vector<8x128xf32> to vector<1x128xf32>
    %cst_64 = arith.constant 9.99999974E-6 : f32
    %163 = vector.broadcast %cst_64 : f32 to vector<1x128xf32>
    %164 = arith.addf %161, %163 : vector<1x128xf32>
    %165 = math.rsqrt %164 : vector<1x128xf32>
    %166 = arith.mulf %162, %165 : vector<1x128xf32>
    %167 = vector.extract_strided_slice %145 {offsets = [2, 0], sizes = [1, 128], strides = [1, 1]} : vector<8x128xf32> to vector<1x128xf32>
    %168 = arith.mulf %152, %166 : vector<1x128xf32>
    %169 = arith.subf %167, %168 : vector<1x128xf32>
    %170 = vector.broadcast %166 : vector<1x128xf32> to vector<16x128xf32>
    %171 = arith.mulf %148, %170 : vector<16x128xf32>
    %172 = vector.broadcast %169 : vector<1x128xf32> to vector<16x128xf32>
    %173 = arith.addf %171, %172 : vector<16x128xf32>
    %cst_65 = arith.constant 0.000000e+00 : f32
    %174 = vector.broadcast %cst_65 : f32 to vector<16x128xf32>
    %175 = arith.maximumf %173, %174 : vector<16x128xf32>
    %c5 = arith.constant 5 : index
    %c0_66 = arith.constant 0 : index
    %c0_67 = arith.constant 0 : index
    %176 = vector.load %arg1[%c5, %c0_66, %c0_67] : memref<19x128x128xf32, #tpu.memory_space<vmem>>, vector<1x128x128xf32>
    %177 = vector.shape_cast %176 : vector<1x128x128xf32> to vector<128x128xf32>
    %cst_68 = arith.constant dense<0.000000e+00> : vector<16x128xf32>
    %178 = tpu.matmul %175, %177, %cst_68 {dimension_numbers = #tpu.dot_dimension_numbers<[1], [0], [0], [1], [0, 0, 1, 1], [], []>} : vector<16x128xf32>, vector<128x128xf32>, vector<16x128xf32> -> vector<16x128xf32>
    %c5_69 = arith.constant 5 : index
    %c0_70 = arith.constant 0 : index
    %c0_71 = arith.constant 0 : index
    %179 = vector.load %arg3[%c5_69, %c0_70, %c0_71] : memref<19x8x128xf32, #tpu.memory_space<vmem>>, vector<1x8x128xf32>
    %180 = vector.shape_cast %179 : vector<1x8x128xf32> to vector<8x128xf32>
    %181 = vector.extract_strided_slice %180 {offsets = [0, 0], sizes = [1, 128], strides = [1, 1]} : vector<8x128xf32> to vector<1x128xf32>
    %182 = vector.broadcast %181 : vector<1x128xf32> to vector<16x128xf32>
    %183 = arith.addf %178, %182 : vector<16x128xf32>
    %cst_72 = arith.constant dense<0.000000e+00> : vector<128xf32>
    %184 = vector.multi_reduction <add>, %183, %cst_72 [0] : vector<16x128xf32> to vector<128xf32>
    %185 = vector.shape_cast %184 : vector<128xf32> to vector<1x128xf32>
    %cst_73 = arith.constant 6.250000e-02 : f32
    %186 = vector.broadcast %cst_73 : f32 to vector<1x128xf32>
    %187 = arith.mulf %185, %186 : vector<1x128xf32>
    %188 = arith.mulf %183, %183 : vector<16x128xf32>
    %cst_74 = arith.constant dense<0.000000e+00> : vector<128xf32>
    %189 = vector.multi_reduction <add>, %188, %cst_74 [0] : vector<16x128xf32> to vector<128xf32>
    %190 = vector.shape_cast %189 : vector<128xf32> to vector<1x128xf32>
    %cst_75 = arith.constant 6.250000e-02 : f32
    %191 = vector.broadcast %cst_75 : f32 to vector<1x128xf32>
    %192 = arith.mulf %190, %191 : vector<1x128xf32>
    %193 = arith.mulf %187, %187 : vector<1x128xf32>
    %194 = arith.subf %192, %193 : vector<1x128xf32>
    %cst_76 = arith.constant 0.000000e+00 : f32
    %195 = vector.broadcast %cst_76 : f32 to vector<1x128xf32>
    %196 = arith.maximumf %194, %195 : vector<1x128xf32>
    %197 = vector.extract_strided_slice %180 {offsets = [1, 0], sizes = [1, 128], strides = [1, 1]} : vector<8x128xf32> to vector<1x128xf32>
    %cst_77 = arith.constant 9.99999974E-6 : f32
    %198 = vector.broadcast %cst_77 : f32 to vector<1x128xf32>
    %199 = arith.addf %196, %198 : vector<1x128xf32>
    %200 = math.rsqrt %199 : vector<1x128xf32>
    %201 = arith.mulf %197, %200 : vector<1x128xf32>
    %202 = vector.extract_strided_slice %180 {offsets = [2, 0], sizes = [1, 128], strides = [1, 1]} : vector<8x128xf32> to vector<1x128xf32>
    %203 = arith.mulf %187, %201 : vector<1x128xf32>
    %204 = arith.subf %202, %203 : vector<1x128xf32>
    %205 = vector.broadcast %201 : vector<1x128xf32> to vector<16x128xf32>
    %206 = arith.mulf %183, %205 : vector<16x128xf32>
    %207 = vector.broadcast %204 : vector<1x128xf32> to vector<16x128xf32>
    %208 = arith.addf %206, %207 : vector<16x128xf32>
    %cst_78 = arith.constant 0.000000e+00 : f32
    %209 = vector.broadcast %cst_78 : f32 to vector<16x128xf32>
    %210 = arith.maximumf %208, %209 : vector<16x128xf32>
    %c6 = arith.constant 6 : index
    %c0_79 = arith.constant 0 : index
    %c0_80 = arith.constant 0 : index
    %211 = vector.load %arg1[%c6, %c0_79, %c0_80] : memref<19x128x128xf32, #tpu.memory_space<vmem>>, vector<1x128x128xf32>
    %212 = vector.shape_cast %211 : vector<1x128x128xf32> to vector<128x128xf32>
    %cst_81 = arith.constant dense<0.000000e+00> : vector<16x128xf32>
    %213 = tpu.matmul %210, %212, %cst_81 {dimension_numbers = #tpu.dot_dimension_numbers<[1], [0], [0], [1], [0, 0, 1, 1], [], []>} : vector<16x128xf32>, vector<128x128xf32>, vector<16x128xf32> -> vector<16x128xf32>
    %c6_82 = arith.constant 6 : index
    %c0_83 = arith.constant 0 : index
    %c0_84 = arith.constant 0 : index
    %214 = vector.load %arg3[%c6_82, %c0_83, %c0_84] : memref<19x8x128xf32, #tpu.memory_space<vmem>>, vector<1x8x128xf32>
    %215 = vector.shape_cast %214 : vector<1x8x128xf32> to vector<8x128xf32>
    %216 = vector.extract_strided_slice %215 {offsets = [0, 0], sizes = [1, 128], strides = [1, 1]} : vector<8x128xf32> to vector<1x128xf32>
    %217 = vector.broadcast %216 : vector<1x128xf32> to vector<16x128xf32>
    %218 = arith.addf %213, %217 : vector<16x128xf32>
    %cst_85 = arith.constant dense<0.000000e+00> : vector<128xf32>
    %219 = vector.multi_reduction <add>, %218, %cst_85 [0] : vector<16x128xf32> to vector<128xf32>
    %220 = vector.shape_cast %219 : vector<128xf32> to vector<1x128xf32>
    %cst_86 = arith.constant 6.250000e-02 : f32
    %221 = vector.broadcast %cst_86 : f32 to vector<1x128xf32>
    %222 = arith.mulf %220, %221 : vector<1x128xf32>
    %223 = arith.mulf %218, %218 : vector<16x128xf32>
    %cst_87 = arith.constant dense<0.000000e+00> : vector<128xf32>
    %224 = vector.multi_reduction <add>, %223, %cst_87 [0] : vector<16x128xf32> to vector<128xf32>
    %225 = vector.shape_cast %224 : vector<128xf32> to vector<1x128xf32>
    %cst_88 = arith.constant 6.250000e-02 : f32
    %226 = vector.broadcast %cst_88 : f32 to vector<1x128xf32>
    %227 = arith.mulf %225, %226 : vector<1x128xf32>
    %228 = arith.mulf %222, %222 : vector<1x128xf32>
    %229 = arith.subf %227, %228 : vector<1x128xf32>
    %cst_89 = arith.constant 0.000000e+00 : f32
    %230 = vector.broadcast %cst_89 : f32 to vector<1x128xf32>
    %231 = arith.maximumf %229, %230 : vector<1x128xf32>
    %232 = vector.extract_strided_slice %215 {offsets = [1, 0], sizes = [1, 128], strides = [1, 1]} : vector<8x128xf32> to vector<1x128xf32>
    %cst_90 = arith.constant 9.99999974E-6 : f32
    %233 = vector.broadcast %cst_90 : f32 to vector<1x128xf32>
    %234 = arith.addf %231, %233 : vector<1x128xf32>
    %235 = math.rsqrt %234 : vector<1x128xf32>
    %236 = arith.mulf %232, %235 : vector<1x128xf32>
    %237 = vector.extract_strided_slice %215 {offsets = [2, 0], sizes = [1, 128], strides = [1, 1]} : vector<8x128xf32> to vector<1x128xf32>
    %238 = arith.mulf %222, %236 : vector<1x128xf32>
    %239 = arith.subf %237, %238 : vector<1x128xf32>
    %240 = vector.broadcast %236 : vector<1x128xf32> to vector<16x128xf32>
    %241 = arith.mulf %218, %240 : vector<16x128xf32>
    %242 = vector.broadcast %239 : vector<1x128xf32> to vector<16x128xf32>
    %243 = arith.addf %241, %242 : vector<16x128xf32>
    %cst_91 = arith.constant 0.000000e+00 : f32
    %244 = vector.broadcast %cst_91 : f32 to vector<16x128xf32>
    %245 = arith.maximumf %243, %244 : vector<16x128xf32>
    %c7 = arith.constant 7 : index
    %c0_92 = arith.constant 0 : index
    %c0_93 = arith.constant 0 : index
    %246 = vector.load %arg1[%c7, %c0_92, %c0_93] : memref<19x128x128xf32, #tpu.memory_space<vmem>>, vector<1x128x128xf32>
    %247 = vector.shape_cast %246 : vector<1x128x128xf32> to vector<128x128xf32>
    %cst_94 = arith.constant dense<0.000000e+00> : vector<16x128xf32>
    %248 = tpu.matmul %245, %247, %cst_94 {dimension_numbers = #tpu.dot_dimension_numbers<[1], [0], [0], [1], [0, 0, 1, 1], [], []>} : vector<16x128xf32>, vector<128x128xf32>, vector<16x128xf32> -> vector<16x128xf32>
    %c0_95 = arith.constant 0 : index
    %c0_96 = arith.constant 0 : index
    %c0_97 = arith.constant 0 : index
    %249 = vector.load %arg2[%c0_95, %c0_96, %c0_97] : memref<2x128x128xf32, #tpu.memory_space<vmem>>, vector<1x128x128xf32>
    %250 = vector.shape_cast %249 : vector<1x128x128xf32> to vector<128x128xf32>
    %cst_98 = arith.constant dense<0.000000e+00> : vector<16x128xf32>
    %251 = tpu.matmul %0, %250, %cst_98 {dimension_numbers = #tpu.dot_dimension_numbers<[1], [0], [0], [1], [0, 0, 1, 1], [], []>} : vector<16x128xf32>, vector<128x128xf32>, vector<16x128xf32> -> vector<16x128xf32>
    %252 = arith.addf %248, %251 : vector<16x128xf32>
    %c7_99 = arith.constant 7 : index
    %c0_100 = arith.constant 0 : index
    %c0_101 = arith.constant 0 : index
    %253 = vector.load %arg3[%c7_99, %c0_100, %c0_101] : memref<19x8x128xf32, #tpu.memory_space<vmem>>, vector<1x8x128xf32>
    %254 = vector.shape_cast %253 : vector<1x8x128xf32> to vector<8x128xf32>
    %255 = vector.extract_strided_slice %254 {offsets = [0, 0], sizes = [1, 128], strides = [1, 1]} : vector<8x128xf32> to vector<1x128xf32>
    %256 = vector.broadcast %255 : vector<1x128xf32> to vector<16x128xf32>
    %257 = arith.addf %252, %256 : vector<16x128xf32>
    %cst_102 = arith.constant dense<0.000000e+00> : vector<128xf32>
    %258 = vector.multi_reduction <add>, %257, %cst_102 [0] : vector<16x128xf32> to vector<128xf32>
    %259 = vector.shape_cast %258 : vector<128xf32> to vector<1x128xf32>
    %cst_103 = arith.constant 6.250000e-02 : f32
    %260 = vector.broadcast %cst_103 : f32 to vector<1x128xf32>
    %261 = arith.mulf %259, %260 : vector<1x128xf32>
    %262 = arith.mulf %257, %257 : vector<16x128xf32>
    %cst_104 = arith.constant dense<0.000000e+00> : vector<128xf32>
    %263 = vector.multi_reduction <add>, %262, %cst_104 [0] : vector<16x128xf32> to vector<128xf32>
    %264 = vector.shape_cast %263 : vector<128xf32> to vector<1x128xf32>
    %cst_105 = arith.constant 6.250000e-02 : f32
    %265 = vector.broadcast %cst_105 : f32 to vector<1x128xf32>
    %266 = arith.mulf %264, %265 : vector<1x128xf32>
    %267 = arith.mulf %261, %261 : vector<1x128xf32>
    %268 = arith.subf %266, %267 : vector<1x128xf32>
    %cst_106 = arith.constant 0.000000e+00 : f32
    %269 = vector.broadcast %cst_106 : f32 to vector<1x128xf32>
    %270 = arith.maximumf %268, %269 : vector<1x128xf32>
    %271 = vector.extract_strided_slice %254 {offsets = [1, 0], sizes = [1, 128], strides = [1, 1]} : vector<8x128xf32> to vector<1x128xf32>
    %cst_107 = arith.constant 9.99999974E-6 : f32
    %272 = vector.broadcast %cst_107 : f32 to vector<1x128xf32>
    %273 = arith.addf %270, %272 : vector<1x128xf32>
    %274 = math.rsqrt %273 : vector<1x128xf32>
    %275 = arith.mulf %271, %274 : vector<1x128xf32>
    %276 = vector.extract_strided_slice %254 {offsets = [2, 0], sizes = [1, 128], strides = [1, 1]} : vector<8x128xf32> to vector<1x128xf32>
    %277 = arith.mulf %261, %275 : vector<1x128xf32>
    %278 = arith.subf %276, %277 : vector<1x128xf32>
    %279 = vector.broadcast %275 : vector<1x128xf32> to vector<16x128xf32>
    %280 = arith.mulf %257, %279 : vector<16x128xf32>
    %281 = vector.broadcast %278 : vector<1x128xf32> to vector<16x128xf32>
    %282 = arith.addf %280, %281 : vector<16x128xf32>
    %cst_108 = arith.constant 0.000000e+00 : f32
    %283 = vector.broadcast %cst_108 : f32 to vector<16x128xf32>
    %284 = arith.maximumf %282, %283 : vector<16x128xf32>
    %c8 = arith.constant 8 : index
    %c0_109 = arith.constant 0 : index
    %c0_110 = arith.constant 0 : index
    %285 = vector.load %arg1[%c8, %c0_109, %c0_110] : memref<19x128x128xf32, #tpu.memory_space<vmem>>, vector<1x128x128xf32>
    %286 = vector.shape_cast %285 : vector<1x128x128xf32> to vector<128x128xf32>
    %cst_111 = arith.constant dense<0.000000e+00> : vector<16x128xf32>
    %287 = tpu.matmul %284, %286, %cst_111 {dimension_numbers = #tpu.dot_dimension_numbers<[1], [0], [0], [1], [0, 0, 1, 1], [], []>} : vector<16x128xf32>, vector<128x128xf32>, vector<16x128xf32> -> vector<16x128xf32>
    %c8_112 = arith.constant 8 : index
    %c0_113 = arith.constant 0 : index
    %c0_114 = arith.constant 0 : index
    %288 = vector.load %arg3[%c8_112, %c0_113, %c0_114] : memref<19x8x128xf32, #tpu.memory_space<vmem>>, vector<1x8x128xf32>
    %289 = vector.shape_cast %288 : vector<1x8x128xf32> to vector<8x128xf32>
    %290 = vector.extract_strided_slice %289 {offsets = [0, 0], sizes = [1, 128], strides = [1, 1]} : vector<8x128xf32> to vector<1x128xf32>
    %291 = vector.broadcast %290 : vector<1x128xf32> to vector<16x128xf32>
    %292 = arith.addf %287, %291 : vector<16x128xf32>
    %cst_115 = arith.constant dense<0.000000e+00> : vector<128xf32>
    %293 = vector.multi_reduction <add>, %292, %cst_115 [0] : vector<16x128xf32> to vector<128xf32>
    %294 = vector.shape_cast %293 : vector<128xf32> to vector<1x128xf32>
    %cst_116 = arith.constant 6.250000e-02 : f32
    %295 = vector.broadcast %cst_116 : f32 to vector<1x128xf32>
    %296 = arith.mulf %294, %295 : vector<1x128xf32>
    %297 = arith.mulf %292, %292 : vector<16x128xf32>
    %cst_117 = arith.constant dense<0.000000e+00> : vector<128xf32>
    %298 = vector.multi_reduction <add>, %297, %cst_117 [0] : vector<16x128xf32> to vector<128xf32>
    %299 = vector.shape_cast %298 : vector<128xf32> to vector<1x128xf32>
    %cst_118 = arith.constant 6.250000e-02 : f32
    %300 = vector.broadcast %cst_118 : f32 to vector<1x128xf32>
    %301 = arith.mulf %299, %300 : vector<1x128xf32>
    %302 = arith.mulf %296, %296 : vector<1x128xf32>
    %303 = arith.subf %301, %302 : vector<1x128xf32>
    %cst_119 = arith.constant 0.000000e+00 : f32
    %304 = vector.broadcast %cst_119 : f32 to vector<1x128xf32>
    %305 = arith.maximumf %303, %304 : vector<1x128xf32>
    %306 = vector.extract_strided_slice %289 {offsets = [1, 0], sizes = [1, 128], strides = [1, 1]} : vector<8x128xf32> to vector<1x128xf32>
    %cst_120 = arith.constant 9.99999974E-6 : f32
    %307 = vector.broadcast %cst_120 : f32 to vector<1x128xf32>
    %308 = arith.addf %305, %307 : vector<1x128xf32>
    %309 = math.rsqrt %308 : vector<1x128xf32>
    %310 = arith.mulf %306, %309 : vector<1x128xf32>
    %311 = vector.extract_strided_slice %289 {offsets = [2, 0], sizes = [1, 128], strides = [1, 1]} : vector<8x128xf32> to vector<1x128xf32>
    %312 = arith.mulf %296, %310 : vector<1x128xf32>
    %313 = arith.subf %311, %312 : vector<1x128xf32>
    %314 = vector.broadcast %310 : vector<1x128xf32> to vector<16x128xf32>
    %315 = arith.mulf %292, %314 : vector<16x128xf32>
    %316 = vector.broadcast %313 : vector<1x128xf32> to vector<16x128xf32>
    %317 = arith.addf %315, %316 : vector<16x128xf32>
    %cst_121 = arith.constant 0.000000e+00 : f32
    %318 = vector.broadcast %cst_121 : f32 to vector<16x128xf32>
    %319 = arith.maximumf %317, %318 : vector<16x128xf32>
    %c9 = arith.constant 9 : index
    %c0_122 = arith.constant 0 : index
    %c0_123 = arith.constant 0 : index
    %320 = vector.load %arg1[%c9, %c0_122, %c0_123] : memref<19x128x128xf32, #tpu.memory_space<vmem>>, vector<1x128x128xf32>
    %321 = vector.shape_cast %320 : vector<1x128x128xf32> to vector<128x128xf32>
    %cst_124 = arith.constant dense<0.000000e+00> : vector<16x128xf32>
    %322 = tpu.matmul %319, %321, %cst_124 {dimension_numbers = #tpu.dot_dimension_numbers<[1], [0], [0], [1], [0, 0, 1, 1], [], []>} : vector<16x128xf32>, vector<128x128xf32>, vector<16x128xf32> -> vector<16x128xf32>
    %c9_125 = arith.constant 9 : index
    %c0_126 = arith.constant 0 : index
    %c0_127 = arith.constant 0 : index
    %323 = vector.load %arg3[%c9_125, %c0_126, %c0_127] : memref<19x8x128xf32, #tpu.memory_space<vmem>>, vector<1x8x128xf32>
    %324 = vector.shape_cast %323 : vector<1x8x128xf32> to vector<8x128xf32>
    %325 = vector.extract_strided_slice %324 {offsets = [0, 0], sizes = [1, 128], strides = [1, 1]} : vector<8x128xf32> to vector<1x128xf32>
    %326 = vector.broadcast %325 : vector<1x128xf32> to vector<16x128xf32>
    %327 = arith.addf %322, %326 : vector<16x128xf32>
    %cst_128 = arith.constant dense<0.000000e+00> : vector<128xf32>
    %328 = vector.multi_reduction <add>, %327, %cst_128 [0] : vector<16x128xf32> to vector<128xf32>
    %329 = vector.shape_cast %328 : vector<128xf32> to vector<1x128xf32>
    %cst_129 = arith.constant 6.250000e-02 : f32
    %330 = vector.broadcast %cst_129 : f32 to vector<1x128xf32>
    %331 = arith.mulf %329, %330 : vector<1x128xf32>
    %332 = arith.mulf %327, %327 : vector<16x128xf32>
    %cst_130 = arith.constant dense<0.000000e+00> : vector<128xf32>
    %333 = vector.multi_reduction <add>, %332, %cst_130 [0] : vector<16x128xf32> to vector<128xf32>
    %334 = vector.shape_cast %333 : vector<128xf32> to vector<1x128xf32>
    %cst_131 = arith.constant 6.250000e-02 : f32
    %335 = vector.broadcast %cst_131 : f32 to vector<1x128xf32>
    %336 = arith.mulf %334, %335 : vector<1x128xf32>
    %337 = arith.mulf %331, %331 : vector<1x128xf32>
    %338 = arith.subf %336, %337 : vector<1x128xf32>
    %cst_132 = arith.constant 0.000000e+00 : f32
    %339 = vector.broadcast %cst_132 : f32 to vector<1x128xf32>
    %340 = arith.maximumf %338, %339 : vector<1x128xf32>
    %341 = vector.extract_strided_slice %324 {offsets = [1, 0], sizes = [1, 128], strides = [1, 1]} : vector<8x128xf32> to vector<1x128xf32>
    %cst_133 = arith.constant 9.99999974E-6 : f32
    %342 = vector.broadcast %cst_133 : f32 to vector<1x128xf32>
    %343 = arith.addf %340, %342 : vector<1x128xf32>
    %344 = math.rsqrt %343 : vector<1x128xf32>
    %345 = arith.mulf %341, %344 : vector<1x128xf32>
    %346 = vector.extract_strided_slice %324 {offsets = [2, 0], sizes = [1, 128], strides = [1, 1]} : vector<8x128xf32> to vector<1x128xf32>
    %347 = arith.mulf %331, %345 : vector<1x128xf32>
    %348 = arith.subf %346, %347 : vector<1x128xf32>
    %349 = vector.broadcast %345 : vector<1x128xf32> to vector<16x128xf32>
    %350 = arith.mulf %327, %349 : vector<16x128xf32>
    %351 = vector.broadcast %348 : vector<1x128xf32> to vector<16x128xf32>
    %352 = arith.addf %350, %351 : vector<16x128xf32>
    %cst_134 = arith.constant 0.000000e+00 : f32
    %353 = vector.broadcast %cst_134 : f32 to vector<16x128xf32>
    %354 = arith.maximumf %352, %353 : vector<16x128xf32>
    %c10 = arith.constant 10 : index
    %c0_135 = arith.constant 0 : index
    %c0_136 = arith.constant 0 : index
    %355 = vector.load %arg1[%c10, %c0_135, %c0_136] : memref<19x128x128xf32, #tpu.memory_space<vmem>>, vector<1x128x128xf32>
    %356 = vector.shape_cast %355 : vector<1x128x128xf32> to vector<128x128xf32>
    %cst_137 = arith.constant dense<0.000000e+00> : vector<16x128xf32>
    %357 = tpu.matmul %354, %356, %cst_137 {dimension_numbers = #tpu.dot_dimension_numbers<[1], [0], [0], [1], [0, 0, 1, 1], [], []>} : vector<16x128xf32>, vector<128x128xf32>, vector<16x128xf32> -> vector<16x128xf32>
    %c10_138 = arith.constant 10 : index
    %c0_139 = arith.constant 0 : index
    %c0_140 = arith.constant 0 : index
    %358 = vector.load %arg3[%c10_138, %c0_139, %c0_140] : memref<19x8x128xf32, #tpu.memory_space<vmem>>, vector<1x8x128xf32>
    %359 = vector.shape_cast %358 : vector<1x8x128xf32> to vector<8x128xf32>
    %360 = vector.extract_strided_slice %359 {offsets = [0, 0], sizes = [1, 128], strides = [1, 1]} : vector<8x128xf32> to vector<1x128xf32>
    %361 = vector.broadcast %360 : vector<1x128xf32> to vector<16x128xf32>
    %362 = arith.addf %357, %361 : vector<16x128xf32>
    %cst_141 = arith.constant dense<0.000000e+00> : vector<128xf32>
    %363 = vector.multi_reduction <add>, %362, %cst_141 [0] : vector<16x128xf32> to vector<128xf32>
    %364 = vector.shape_cast %363 : vector<128xf32> to vector<1x128xf32>
    %cst_142 = arith.constant 6.250000e-02 : f32
    %365 = vector.broadcast %cst_142 : f32 to vector<1x128xf32>
    %366 = arith.mulf %364, %365 : vector<1x128xf32>
    %367 = arith.mulf %362, %362 : vector<16x128xf32>
    %cst_143 = arith.constant dense<0.000000e+00> : vector<128xf32>
    %368 = vector.multi_reduction <add>, %367, %cst_143 [0] : vector<16x128xf32> to vector<128xf32>
    %369 = vector.shape_cast %368 : vector<128xf32> to vector<1x128xf32>
    %cst_144 = arith.constant 6.250000e-02 : f32
    %370 = vector.broadcast %cst_144 : f32 to vector<1x128xf32>
    %371 = arith.mulf %369, %370 : vector<1x128xf32>
    %372 = arith.mulf %366, %366 : vector<1x128xf32>
    %373 = arith.subf %371, %372 : vector<1x128xf32>
    %cst_145 = arith.constant 0.000000e+00 : f32
    %374 = vector.broadcast %cst_145 : f32 to vector<1x128xf32>
    %375 = arith.maximumf %373, %374 : vector<1x128xf32>
    %376 = vector.extract_strided_slice %359 {offsets = [1, 0], sizes = [1, 128], strides = [1, 1]} : vector<8x128xf32> to vector<1x128xf32>
    %cst_146 = arith.constant 9.99999974E-6 : f32
    %377 = vector.broadcast %cst_146 : f32 to vector<1x128xf32>
    %378 = arith.addf %375, %377 : vector<1x128xf32>
    %379 = math.rsqrt %378 : vector<1x128xf32>
    %380 = arith.mulf %376, %379 : vector<1x128xf32>
    %381 = vector.extract_strided_slice %359 {offsets = [2, 0], sizes = [1, 128], strides = [1, 1]} : vector<8x128xf32> to vector<1x128xf32>
    %382 = arith.mulf %366, %380 : vector<1x128xf32>
    %383 = arith.subf %381, %382 : vector<1x128xf32>
    %384 = vector.broadcast %380 : vector<1x128xf32> to vector<16x128xf32>
    %385 = arith.mulf %362, %384 : vector<16x128xf32>
    %386 = vector.broadcast %383 : vector<1x128xf32> to vector<16x128xf32>
    %387 = arith.addf %385, %386 : vector<16x128xf32>
    %cst_147 = arith.constant 0.000000e+00 : f32
    %388 = vector.broadcast %cst_147 : f32 to vector<16x128xf32>
    %389 = arith.maximumf %387, %388 : vector<16x128xf32>
    %c11 = arith.constant 11 : index
    %c0_148 = arith.constant 0 : index
    %c0_149 = arith.constant 0 : index
    %390 = vector.load %arg1[%c11, %c0_148, %c0_149] : memref<19x128x128xf32, #tpu.memory_space<vmem>>, vector<1x128x128xf32>
    %391 = vector.shape_cast %390 : vector<1x128x128xf32> to vector<128x128xf32>
    %cst_150 = arith.constant dense<0.000000e+00> : vector<16x128xf32>
    %392 = tpu.matmul %389, %391, %cst_150 {dimension_numbers = #tpu.dot_dimension_numbers<[1], [0], [0], [1], [0, 0, 1, 1], [], []>} : vector<16x128xf32>, vector<128x128xf32>, vector<16x128xf32> -> vector<16x128xf32>
    %c11_151 = arith.constant 11 : index
    %c0_152 = arith.constant 0 : index
    %c0_153 = arith.constant 0 : index
    %393 = vector.load %arg3[%c11_151, %c0_152, %c0_153] : memref<19x8x128xf32, #tpu.memory_space<vmem>>, vector<1x8x128xf32>
    %394 = vector.shape_cast %393 : vector<1x8x128xf32> to vector<8x128xf32>
    %395 = vector.extract_strided_slice %394 {offsets = [0, 0], sizes = [1, 128], strides = [1, 1]} : vector<8x128xf32> to vector<1x128xf32>
    %396 = vector.broadcast %395 : vector<1x128xf32> to vector<16x128xf32>
    %397 = arith.addf %392, %396 : vector<16x128xf32>
    %cst_154 = arith.constant dense<0.000000e+00> : vector<128xf32>
    %398 = vector.multi_reduction <add>, %397, %cst_154 [0] : vector<16x128xf32> to vector<128xf32>
    %399 = vector.shape_cast %398 : vector<128xf32> to vector<1x128xf32>
    %cst_155 = arith.constant 6.250000e-02 : f32
    %400 = vector.broadcast %cst_155 : f32 to vector<1x128xf32>
    %401 = arith.mulf %399, %400 : vector<1x128xf32>
    %402 = arith.mulf %397, %397 : vector<16x128xf32>
    %cst_156 = arith.constant dense<0.000000e+00> : vector<128xf32>
    %403 = vector.multi_reduction <add>, %402, %cst_156 [0] : vector<16x128xf32> to vector<128xf32>
    %404 = vector.shape_cast %403 : vector<128xf32> to vector<1x128xf32>
    %cst_157 = arith.constant 6.250000e-02 : f32
    %405 = vector.broadcast %cst_157 : f32 to vector<1x128xf32>
    %406 = arith.mulf %404, %405 : vector<1x128xf32>
    %407 = arith.mulf %401, %401 : vector<1x128xf32>
    %408 = arith.subf %406, %407 : vector<1x128xf32>
    %cst_158 = arith.constant 0.000000e+00 : f32
    %409 = vector.broadcast %cst_158 : f32 to vector<1x128xf32>
    %410 = arith.maximumf %408, %409 : vector<1x128xf32>
    %411 = vector.extract_strided_slice %394 {offsets = [1, 0], sizes = [1, 128], strides = [1, 1]} : vector<8x128xf32> to vector<1x128xf32>
    %cst_159 = arith.constant 9.99999974E-6 : f32
    %412 = vector.broadcast %cst_159 : f32 to vector<1x128xf32>
    %413 = arith.addf %410, %412 : vector<1x128xf32>
    %414 = math.rsqrt %413 : vector<1x128xf32>
    %415 = arith.mulf %411, %414 : vector<1x128xf32>
    %416 = vector.extract_strided_slice %394 {offsets = [2, 0], sizes = [1, 128], strides = [1, 1]} : vector<8x128xf32> to vector<1x128xf32>
    %417 = arith.mulf %401, %415 : vector<1x128xf32>
    %418 = arith.subf %416, %417 : vector<1x128xf32>
    %419 = vector.broadcast %415 : vector<1x128xf32> to vector<16x128xf32>
    %420 = arith.mulf %397, %419 : vector<16x128xf32>
    %421 = vector.broadcast %418 : vector<1x128xf32> to vector<16x128xf32>
    %422 = arith.addf %420, %421 : vector<16x128xf32>
    %cst_160 = arith.constant 0.000000e+00 : f32
    %423 = vector.broadcast %cst_160 : f32 to vector<16x128xf32>
    %424 = arith.maximumf %422, %423 : vector<16x128xf32>
    %c12 = arith.constant 12 : index
    %c0_161 = arith.constant 0 : index
    %c0_162 = arith.constant 0 : index
    %425 = vector.load %arg1[%c12, %c0_161, %c0_162] : memref<19x128x128xf32, #tpu.memory_space<vmem>>, vector<1x128x128xf32>
    %426 = vector.shape_cast %425 : vector<1x128x128xf32> to vector<128x128xf32>
    %cst_163 = arith.constant dense<0.000000e+00> : vector<16x128xf32>
    %427 = tpu.matmul %424, %426, %cst_163 {dimension_numbers = #tpu.dot_dimension_numbers<[1], [0], [0], [1], [0, 0, 1, 1], [], []>} : vector<16x128xf32>, vector<128x128xf32>, vector<16x128xf32> -> vector<16x128xf32>
    %c12_164 = arith.constant 12 : index
    %c0_165 = arith.constant 0 : index
    %c0_166 = arith.constant 0 : index
    %428 = vector.load %arg3[%c12_164, %c0_165, %c0_166] : memref<19x8x128xf32, #tpu.memory_space<vmem>>, vector<1x8x128xf32>
    %429 = vector.shape_cast %428 : vector<1x8x128xf32> to vector<8x128xf32>
    %430 = vector.extract_strided_slice %429 {offsets = [0, 0], sizes = [1, 128], strides = [1, 1]} : vector<8x128xf32> to vector<1x128xf32>
    %431 = vector.broadcast %430 : vector<1x128xf32> to vector<16x128xf32>
    %432 = arith.addf %427, %431 : vector<16x128xf32>
    %cst_167 = arith.constant dense<0.000000e+00> : vector<128xf32>
    %433 = vector.multi_reduction <add>, %432, %cst_167 [0] : vector<16x128xf32> to vector<128xf32>
    %434 = vector.shape_cast %433 : vector<128xf32> to vector<1x128xf32>
    %cst_168 = arith.constant 6.250000e-02 : f32
    %435 = vector.broadcast %cst_168 : f32 to vector<1x128xf32>
    %436 = arith.mulf %434, %435 : vector<1x128xf32>
    %437 = arith.mulf %432, %432 : vector<16x128xf32>
    %cst_169 = arith.constant dense<0.000000e+00> : vector<128xf32>
    %438 = vector.multi_reduction <add>, %437, %cst_169 [0] : vector<16x128xf32> to vector<128xf32>
    %439 = vector.shape_cast %438 : vector<128xf32> to vector<1x128xf32>
    %cst_170 = arith.constant 6.250000e-02 : f32
    %440 = vector.broadcast %cst_170 : f32 to vector<1x128xf32>
    %441 = arith.mulf %439, %440 : vector<1x128xf32>
    %442 = arith.mulf %436, %436 : vector<1x128xf32>
    %443 = arith.subf %441, %442 : vector<1x128xf32>
    %cst_171 = arith.constant 0.000000e+00 : f32
    %444 = vector.broadcast %cst_171 : f32 to vector<1x128xf32>
    %445 = arith.maximumf %443, %444 : vector<1x128xf32>
    %446 = vector.extract_strided_slice %429 {offsets = [1, 0], sizes = [1, 128], strides = [1, 1]} : vector<8x128xf32> to vector<1x128xf32>
    %cst_172 = arith.constant 9.99999974E-6 : f32
    %447 = vector.broadcast %cst_172 : f32 to vector<1x128xf32>
    %448 = arith.addf %445, %447 : vector<1x128xf32>
    %449 = math.rsqrt %448 : vector<1x128xf32>
    %450 = arith.mulf %446, %449 : vector<1x128xf32>
    %451 = vector.extract_strided_slice %429 {offsets = [2, 0], sizes = [1, 128], strides = [1, 1]} : vector<8x128xf32> to vector<1x128xf32>
    %452 = arith.mulf %436, %450 : vector<1x128xf32>
    %453 = arith.subf %451, %452 : vector<1x128xf32>
    %454 = vector.broadcast %450 : vector<1x128xf32> to vector<16x128xf32>
    %455 = arith.mulf %432, %454 : vector<16x128xf32>
    %456 = vector.broadcast %453 : vector<1x128xf32> to vector<16x128xf32>
    %457 = arith.addf %455, %456 : vector<16x128xf32>
    %cst_173 = arith.constant 0.000000e+00 : f32
    %458 = vector.broadcast %cst_173 : f32 to vector<16x128xf32>
    %459 = arith.maximumf %457, %458 : vector<16x128xf32>
    %c13 = arith.constant 13 : index
    %c0_174 = arith.constant 0 : index
    %c0_175 = arith.constant 0 : index
    %460 = vector.load %arg1[%c13, %c0_174, %c0_175] : memref<19x128x128xf32, #tpu.memory_space<vmem>>, vector<1x128x128xf32>
    %461 = vector.shape_cast %460 : vector<1x128x128xf32> to vector<128x128xf32>
    %cst_176 = arith.constant dense<0.000000e+00> : vector<16x128xf32>
    %462 = tpu.matmul %459, %461, %cst_176 {dimension_numbers = #tpu.dot_dimension_numbers<[1], [0], [0], [1], [0, 0, 1, 1], [], []>} : vector<16x128xf32>, vector<128x128xf32>, vector<16x128xf32> -> vector<16x128xf32>
    %c1_177 = arith.constant 1 : index
    %c0_178 = arith.constant 0 : index
    %c0_179 = arith.constant 0 : index
    %463 = vector.load %arg2[%c1_177, %c0_178, %c0_179] : memref<2x128x128xf32, #tpu.memory_space<vmem>>, vector<1x128x128xf32>
    %464 = vector.shape_cast %463 : vector<1x128x128xf32> to vector<128x128xf32>
    %cst_180 = arith.constant dense<0.000000e+00> : vector<16x128xf32>
    %465 = tpu.matmul %0, %464, %cst_180 {dimension_numbers = #tpu.dot_dimension_numbers<[1], [0], [0], [1], [0, 0, 1, 1], [], []>} : vector<16x128xf32>, vector<128x128xf32>, vector<16x128xf32> -> vector<16x128xf32>
    %466 = arith.addf %462, %465 : vector<16x128xf32>
    %c13_181 = arith.constant 13 : index
    %c0_182 = arith.constant 0 : index
    %c0_183 = arith.constant 0 : index
    %467 = vector.load %arg3[%c13_181, %c0_182, %c0_183] : memref<19x8x128xf32, #tpu.memory_space<vmem>>, vector<1x8x128xf32>
    %468 = vector.shape_cast %467 : vector<1x8x128xf32> to vector<8x128xf32>
    %469 = vector.extract_strided_slice %468 {offsets = [0, 0], sizes = [1, 128], strides = [1, 1]} : vector<8x128xf32> to vector<1x128xf32>
    %470 = vector.broadcast %469 : vector<1x128xf32> to vector<16x128xf32>
    %471 = arith.addf %466, %470 : vector<16x128xf32>
    %cst_184 = arith.constant dense<0.000000e+00> : vector<128xf32>
    %472 = vector.multi_reduction <add>, %471, %cst_184 [0] : vector<16x128xf32> to vector<128xf32>
    %473 = vector.shape_cast %472 : vector<128xf32> to vector<1x128xf32>
    %cst_185 = arith.constant 6.250000e-02 : f32
    %474 = vector.broadcast %cst_185 : f32 to vector<1x128xf32>
    %475 = arith.mulf %473, %474 : vector<1x128xf32>
    %476 = arith.mulf %471, %471 : vector<16x128xf32>
    %cst_186 = arith.constant dense<0.000000e+00> : vector<128xf32>
    %477 = vector.multi_reduction <add>, %476, %cst_186 [0] : vector<16x128xf32> to vector<128xf32>
    %478 = vector.shape_cast %477 : vector<128xf32> to vector<1x128xf32>
    %cst_187 = arith.constant 6.250000e-02 : f32
    %479 = vector.broadcast %cst_187 : f32 to vector<1x128xf32>
    %480 = arith.mulf %478, %479 : vector<1x128xf32>
    %481 = arith.mulf %475, %475 : vector<1x128xf32>
    %482 = arith.subf %480, %481 : vector<1x128xf32>
    %cst_188 = arith.constant 0.000000e+00 : f32
    %483 = vector.broadcast %cst_188 : f32 to vector<1x128xf32>
    %484 = arith.maximumf %482, %483 : vector<1x128xf32>
    %485 = vector.extract_strided_slice %468 {offsets = [1, 0], sizes = [1, 128], strides = [1, 1]} : vector<8x128xf32> to vector<1x128xf32>
    %cst_189 = arith.constant 9.99999974E-6 : f32
    %486 = vector.broadcast %cst_189 : f32 to vector<1x128xf32>
    %487 = arith.addf %484, %486 : vector<1x128xf32>
    %488 = math.rsqrt %487 : vector<1x128xf32>
    %489 = arith.mulf %485, %488 : vector<1x128xf32>
    %490 = vector.extract_strided_slice %468 {offsets = [2, 0], sizes = [1, 128], strides = [1, 1]} : vector<8x128xf32> to vector<1x128xf32>
    %491 = arith.mulf %475, %489 : vector<1x128xf32>
    %492 = arith.subf %490, %491 : vector<1x128xf32>
    %493 = vector.broadcast %489 : vector<1x128xf32> to vector<16x128xf32>
    %494 = arith.mulf %471, %493 : vector<16x128xf32>
    %495 = vector.broadcast %492 : vector<1x128xf32> to vector<16x128xf32>
    %496 = arith.addf %494, %495 : vector<16x128xf32>
    %cst_190 = arith.constant 0.000000e+00 : f32
    %497 = vector.broadcast %cst_190 : f32 to vector<16x128xf32>
    %498 = arith.maximumf %496, %497 : vector<16x128xf32>
    %c14 = arith.constant 14 : index
    %c0_191 = arith.constant 0 : index
    %c0_192 = arith.constant 0 : index
    %499 = vector.load %arg1[%c14, %c0_191, %c0_192] : memref<19x128x128xf32, #tpu.memory_space<vmem>>, vector<1x128x128xf32>
    %500 = vector.shape_cast %499 : vector<1x128x128xf32> to vector<128x128xf32>
    %cst_193 = arith.constant dense<0.000000e+00> : vector<16x128xf32>
    %501 = tpu.matmul %498, %500, %cst_193 {dimension_numbers = #tpu.dot_dimension_numbers<[1], [0], [0], [1], [0, 0, 1, 1], [], []>} : vector<16x128xf32>, vector<128x128xf32>, vector<16x128xf32> -> vector<16x128xf32>
    %c14_194 = arith.constant 14 : index
    %c0_195 = arith.constant 0 : index
    %c0_196 = arith.constant 0 : index
    %502 = vector.load %arg3[%c14_194, %c0_195, %c0_196] : memref<19x8x128xf32, #tpu.memory_space<vmem>>, vector<1x8x128xf32>
    %503 = vector.shape_cast %502 : vector<1x8x128xf32> to vector<8x128xf32>
    %504 = vector.extract_strided_slice %503 {offsets = [0, 0], sizes = [1, 128], strides = [1, 1]} : vector<8x128xf32> to vector<1x128xf32>
    %505 = vector.broadcast %504 : vector<1x128xf32> to vector<16x128xf32>
    %506 = arith.addf %501, %505 : vector<16x128xf32>
    %cst_197 = arith.constant dense<0.000000e+00> : vector<128xf32>
    %507 = vector.multi_reduction <add>, %506, %cst_197 [0] : vector<16x128xf32> to vector<128xf32>
    %508 = vector.shape_cast %507 : vector<128xf32> to vector<1x128xf32>
    %cst_198 = arith.constant 6.250000e-02 : f32
    %509 = vector.broadcast %cst_198 : f32 to vector<1x128xf32>
    %510 = arith.mulf %508, %509 : vector<1x128xf32>
    %511 = arith.mulf %506, %506 : vector<16x128xf32>
    %cst_199 = arith.constant dense<0.000000e+00> : vector<128xf32>
    %512 = vector.multi_reduction <add>, %511, %cst_199 [0] : vector<16x128xf32> to vector<128xf32>
    %513 = vector.shape_cast %512 : vector<128xf32> to vector<1x128xf32>
    %cst_200 = arith.constant 6.250000e-02 : f32
    %514 = vector.broadcast %cst_200 : f32 to vector<1x128xf32>
    %515 = arith.mulf %513, %514 : vector<1x128xf32>
    %516 = arith.mulf %510, %510 : vector<1x128xf32>
    %517 = arith.subf %515, %516 : vector<1x128xf32>
    %cst_201 = arith.constant 0.000000e+00 : f32
    %518 = vector.broadcast %cst_201 : f32 to vector<1x128xf32>
    %519 = arith.maximumf %517, %518 : vector<1x128xf32>
    %520 = vector.extract_strided_slice %503 {offsets = [1, 0], sizes = [1, 128], strides = [1, 1]} : vector<8x128xf32> to vector<1x128xf32>
    %cst_202 = arith.constant 9.99999974E-6 : f32
    %521 = vector.broadcast %cst_202 : f32 to vector<1x128xf32>
    %522 = arith.addf %519, %521 : vector<1x128xf32>
    %523 = math.rsqrt %522 : vector<1x128xf32>
    %524 = arith.mulf %520, %523 : vector<1x128xf32>
    %525 = vector.extract_strided_slice %503 {offsets = [2, 0], sizes = [1, 128], strides = [1, 1]} : vector<8x128xf32> to vector<1x128xf32>
    %526 = arith.mulf %510, %524 : vector<1x128xf32>
    %527 = arith.subf %525, %526 : vector<1x128xf32>
    %528 = vector.broadcast %524 : vector<1x128xf32> to vector<16x128xf32>
    %529 = arith.mulf %506, %528 : vector<16x128xf32>
    %530 = vector.broadcast %527 : vector<1x128xf32> to vector<16x128xf32>
    %531 = arith.addf %529, %530 : vector<16x128xf32>
    %cst_203 = arith.constant 0.000000e+00 : f32
    %532 = vector.broadcast %cst_203 : f32 to vector<16x128xf32>
    %533 = arith.maximumf %531, %532 : vector<16x128xf32>
    %c15 = arith.constant 15 : index
    %c0_204 = arith.constant 0 : index
    %c0_205 = arith.constant 0 : index
    %534 = vector.load %arg1[%c15, %c0_204, %c0_205] : memref<19x128x128xf32, #tpu.memory_space<vmem>>, vector<1x128x128xf32>
    %535 = vector.shape_cast %534 : vector<1x128x128xf32> to vector<128x128xf32>
    %cst_206 = arith.constant dense<0.000000e+00> : vector<16x128xf32>
    %536 = tpu.matmul %533, %535, %cst_206 {dimension_numbers = #tpu.dot_dimension_numbers<[1], [0], [0], [1], [0, 0, 1, 1], [], []>} : vector<16x128xf32>, vector<128x128xf32>, vector<16x128xf32> -> vector<16x128xf32>
    %c15_207 = arith.constant 15 : index
    %c0_208 = arith.constant 0 : index
    %c0_209 = arith.constant 0 : index
    %537 = vector.load %arg3[%c15_207, %c0_208, %c0_209] : memref<19x8x128xf32, #tpu.memory_space<vmem>>, vector<1x8x128xf32>
    %538 = vector.shape_cast %537 : vector<1x8x128xf32> to vector<8x128xf32>
    %539 = vector.extract_strided_slice %538 {offsets = [0, 0], sizes = [1, 128], strides = [1, 1]} : vector<8x128xf32> to vector<1x128xf32>
    %540 = vector.broadcast %539 : vector<1x128xf32> to vector<16x128xf32>
    %541 = arith.addf %536, %540 : vector<16x128xf32>
    %cst_210 = arith.constant dense<0.000000e+00> : vector<128xf32>
    %542 = vector.multi_reduction <add>, %541, %cst_210 [0] : vector<16x128xf32> to vector<128xf32>
    %543 = vector.shape_cast %542 : vector<128xf32> to vector<1x128xf32>
    %cst_211 = arith.constant 6.250000e-02 : f32
    %544 = vector.broadcast %cst_211 : f32 to vector<1x128xf32>
    %545 = arith.mulf %543, %544 : vector<1x128xf32>
    %546 = arith.mulf %541, %541 : vector<16x128xf32>
    %cst_212 = arith.constant dense<0.000000e+00> : vector<128xf32>
    %547 = vector.multi_reduction <add>, %546, %cst_212 [0] : vector<16x128xf32> to vector<128xf32>
    %548 = vector.shape_cast %547 : vector<128xf32> to vector<1x128xf32>
    %cst_213 = arith.constant 6.250000e-02 : f32
    %549 = vector.broadcast %cst_213 : f32 to vector<1x128xf32>
    %550 = arith.mulf %548, %549 : vector<1x128xf32>
    %551 = arith.mulf %545, %545 : vector<1x128xf32>
    %552 = arith.subf %550, %551 : vector<1x128xf32>
    %cst_214 = arith.constant 0.000000e+00 : f32
    %553 = vector.broadcast %cst_214 : f32 to vector<1x128xf32>
    %554 = arith.maximumf %552, %553 : vector<1x128xf32>
    %555 = vector.extract_strided_slice %538 {offsets = [1, 0], sizes = [1, 128], strides = [1, 1]} : vector<8x128xf32> to vector<1x128xf32>
    %cst_215 = arith.constant 9.99999974E-6 : f32
    %556 = vector.broadcast %cst_215 : f32 to vector<1x128xf32>
    %557 = arith.addf %554, %556 : vector<1x128xf32>
    %558 = math.rsqrt %557 : vector<1x128xf32>
    %559 = arith.mulf %555, %558 : vector<1x128xf32>
    %560 = vector.extract_strided_slice %538 {offsets = [2, 0], sizes = [1, 128], strides = [1, 1]} : vector<8x128xf32> to vector<1x128xf32>
    %561 = arith.mulf %545, %559 : vector<1x128xf32>
    %562 = arith.subf %560, %561 : vector<1x128xf32>
    %563 = vector.broadcast %559 : vector<1x128xf32> to vector<16x128xf32>
    %564 = arith.mulf %541, %563 : vector<16x128xf32>
    %565 = vector.broadcast %562 : vector<1x128xf32> to vector<16x128xf32>
    %566 = arith.addf %564, %565 : vector<16x128xf32>
    %cst_216 = arith.constant 0.000000e+00 : f32
    %567 = vector.broadcast %cst_216 : f32 to vector<16x128xf32>
    %568 = arith.maximumf %566, %567 : vector<16x128xf32>
    %c16 = arith.constant 16 : index
    %c0_217 = arith.constant 0 : index
    %c0_218 = arith.constant 0 : index
    %569 = vector.load %arg1[%c16, %c0_217, %c0_218] : memref<19x128x128xf32, #tpu.memory_space<vmem>>, vector<1x128x128xf32>
    %570 = vector.shape_cast %569 : vector<1x128x128xf32> to vector<128x128xf32>
    %cst_219 = arith.constant dense<0.000000e+00> : vector<16x128xf32>
    %571 = tpu.matmul %568, %570, %cst_219 {dimension_numbers = #tpu.dot_dimension_numbers<[1], [0], [0], [1], [0, 0, 1, 1], [], []>} : vector<16x128xf32>, vector<128x128xf32>, vector<16x128xf32> -> vector<16x128xf32>
    %c16_220 = arith.constant 16 : index
    %c0_221 = arith.constant 0 : index
    %c0_222 = arith.constant 0 : index
    %572 = vector.load %arg3[%c16_220, %c0_221, %c0_222] : memref<19x8x128xf32, #tpu.memory_space<vmem>>, vector<1x8x128xf32>
    %573 = vector.shape_cast %572 : vector<1x8x128xf32> to vector<8x128xf32>
    %574 = vector.extract_strided_slice %573 {offsets = [0, 0], sizes = [1, 128], strides = [1, 1]} : vector<8x128xf32> to vector<1x128xf32>
    %575 = vector.broadcast %574 : vector<1x128xf32> to vector<16x128xf32>
    %576 = arith.addf %571, %575 : vector<16x128xf32>
    %cst_223 = arith.constant dense<0.000000e+00> : vector<128xf32>
    %577 = vector.multi_reduction <add>, %576, %cst_223 [0] : vector<16x128xf32> to vector<128xf32>
    %578 = vector.shape_cast %577 : vector<128xf32> to vector<1x128xf32>
    %cst_224 = arith.constant 6.250000e-02 : f32
    %579 = vector.broadcast %cst_224 : f32 to vector<1x128xf32>
    %580 = arith.mulf %578, %579 : vector<1x128xf32>
    %581 = arith.mulf %576, %576 : vector<16x128xf32>
    %cst_225 = arith.constant dense<0.000000e+00> : vector<128xf32>
    %582 = vector.multi_reduction <add>, %581, %cst_225 [0] : vector<16x128xf32> to vector<128xf32>
    %583 = vector.shape_cast %582 : vector<128xf32> to vector<1x128xf32>
    %cst_226 = arith.constant 6.250000e-02 : f32
    %584 = vector.broadcast %cst_226 : f32 to vector<1x128xf32>
    %585 = arith.mulf %583, %584 : vector<1x128xf32>
    %586 = arith.mulf %580, %580 : vector<1x128xf32>
    %587 = arith.subf %585, %586 : vector<1x128xf32>
    %cst_227 = arith.constant 0.000000e+00 : f32
    %588 = vector.broadcast %cst_227 : f32 to vector<1x128xf32>
    %589 = arith.maximumf %587, %588 : vector<1x128xf32>
    %590 = vector.extract_strided_slice %573 {offsets = [1, 0], sizes = [1, 128], strides = [1, 1]} : vector<8x128xf32> to vector<1x128xf32>
    %cst_228 = arith.constant 9.99999974E-6 : f32
    %591 = vector.broadcast %cst_228 : f32 to vector<1x128xf32>
    %592 = arith.addf %589, %591 : vector<1x128xf32>
    %593 = math.rsqrt %592 : vector<1x128xf32>
    %594 = arith.mulf %590, %593 : vector<1x128xf32>
    %595 = vector.extract_strided_slice %573 {offsets = [2, 0], sizes = [1, 128], strides = [1, 1]} : vector<8x128xf32> to vector<1x128xf32>
    %596 = arith.mulf %580, %594 : vector<1x128xf32>
    %597 = arith.subf %595, %596 : vector<1x128xf32>
    %598 = vector.broadcast %594 : vector<1x128xf32> to vector<16x128xf32>
    %599 = arith.mulf %576, %598 : vector<16x128xf32>
    %600 = vector.broadcast %597 : vector<1x128xf32> to vector<16x128xf32>
    %601 = arith.addf %599, %600 : vector<16x128xf32>
    %cst_229 = arith.constant 0.000000e+00 : f32
    %602 = vector.broadcast %cst_229 : f32 to vector<16x128xf32>
    %603 = arith.maximumf %601, %602 : vector<16x128xf32>
    %c17 = arith.constant 17 : index
    %c0_230 = arith.constant 0 : index
    %c0_231 = arith.constant 0 : index
    %604 = vector.load %arg1[%c17, %c0_230, %c0_231] : memref<19x128x128xf32, #tpu.memory_space<vmem>>, vector<1x128x128xf32>
    %605 = vector.shape_cast %604 : vector<1x128x128xf32> to vector<128x128xf32>
    %cst_232 = arith.constant dense<0.000000e+00> : vector<16x128xf32>
    %606 = tpu.matmul %603, %605, %cst_232 {dimension_numbers = #tpu.dot_dimension_numbers<[1], [0], [0], [1], [0, 0, 1, 1], [], []>} : vector<16x128xf32>, vector<128x128xf32>, vector<16x128xf32> -> vector<16x128xf32>
    %c17_233 = arith.constant 17 : index
    %c0_234 = arith.constant 0 : index
    %c0_235 = arith.constant 0 : index
    %607 = vector.load %arg3[%c17_233, %c0_234, %c0_235] : memref<19x8x128xf32, #tpu.memory_space<vmem>>, vector<1x8x128xf32>
    %608 = vector.shape_cast %607 : vector<1x8x128xf32> to vector<8x128xf32>
    %609 = vector.extract_strided_slice %608 {offsets = [0, 0], sizes = [1, 128], strides = [1, 1]} : vector<8x128xf32> to vector<1x128xf32>
    %610 = vector.broadcast %609 : vector<1x128xf32> to vector<16x128xf32>
    %611 = arith.addf %606, %610 : vector<16x128xf32>
    %cst_236 = arith.constant dense<0.000000e+00> : vector<128xf32>
    %612 = vector.multi_reduction <add>, %611, %cst_236 [0] : vector<16x128xf32> to vector<128xf32>
    %613 = vector.shape_cast %612 : vector<128xf32> to vector<1x128xf32>
    %cst_237 = arith.constant 6.250000e-02 : f32
    %614 = vector.broadcast %cst_237 : f32 to vector<1x128xf32>
    %615 = arith.mulf %613, %614 : vector<1x128xf32>
    %616 = arith.mulf %611, %611 : vector<16x128xf32>
    %cst_238 = arith.constant dense<0.000000e+00> : vector<128xf32>
    %617 = vector.multi_reduction <add>, %616, %cst_238 [0] : vector<16x128xf32> to vector<128xf32>
    %618 = vector.shape_cast %617 : vector<128xf32> to vector<1x128xf32>
    %cst_239 = arith.constant 6.250000e-02 : f32
    %619 = vector.broadcast %cst_239 : f32 to vector<1x128xf32>
    %620 = arith.mulf %618, %619 : vector<1x128xf32>
    %621 = arith.mulf %615, %615 : vector<1x128xf32>
    %622 = arith.subf %620, %621 : vector<1x128xf32>
    %cst_240 = arith.constant 0.000000e+00 : f32
    %623 = vector.broadcast %cst_240 : f32 to vector<1x128xf32>
    %624 = arith.maximumf %622, %623 : vector<1x128xf32>
    %625 = vector.extract_strided_slice %608 {offsets = [1, 0], sizes = [1, 128], strides = [1, 1]} : vector<8x128xf32> to vector<1x128xf32>
    %cst_241 = arith.constant 9.99999974E-6 : f32
    %626 = vector.broadcast %cst_241 : f32 to vector<1x128xf32>
    %627 = arith.addf %624, %626 : vector<1x128xf32>
    %628 = math.rsqrt %627 : vector<1x128xf32>
    %629 = arith.mulf %625, %628 : vector<1x128xf32>
    %630 = vector.extract_strided_slice %608 {offsets = [2, 0], sizes = [1, 128], strides = [1, 1]} : vector<8x128xf32> to vector<1x128xf32>
    %631 = arith.mulf %615, %629 : vector<1x128xf32>
    %632 = arith.subf %630, %631 : vector<1x128xf32>
    %633 = vector.broadcast %629 : vector<1x128xf32> to vector<16x128xf32>
    %634 = arith.mulf %611, %633 : vector<16x128xf32>
    %635 = vector.broadcast %632 : vector<1x128xf32> to vector<16x128xf32>
    %636 = arith.addf %634, %635 : vector<16x128xf32>
    %cst_242 = arith.constant 0.000000e+00 : f32
    %637 = vector.broadcast %cst_242 : f32 to vector<16x128xf32>
    %638 = arith.maximumf %636, %637 : vector<16x128xf32>
    %c18 = arith.constant 18 : index
    %c0_243 = arith.constant 0 : index
    %c0_244 = arith.constant 0 : index
    %639 = vector.load %arg1[%c18, %c0_243, %c0_244] : memref<19x128x128xf32, #tpu.memory_space<vmem>>, vector<1x128x128xf32>
    %640 = vector.shape_cast %639 : vector<1x128x128xf32> to vector<128x128xf32>
    %cst_245 = arith.constant dense<0.000000e+00> : vector<16x128xf32>
    %641 = tpu.matmul %638, %640, %cst_245 {dimension_numbers = #tpu.dot_dimension_numbers<[1], [0], [0], [1], [0, 0, 1, 1], [], []>} : vector<16x128xf32>, vector<128x128xf32>, vector<16x128xf32> -> vector<16x128xf32>
    %c18_246 = arith.constant 18 : index
    %c0_247 = arith.constant 0 : index
    %c0_248 = arith.constant 0 : index
    %642 = vector.load %arg3[%c18_246, %c0_247, %c0_248] : memref<19x8x128xf32, #tpu.memory_space<vmem>>, vector<1x8x128xf32>
    %643 = vector.shape_cast %642 : vector<1x8x128xf32> to vector<8x128xf32>
    %644 = vector.extract_strided_slice %643 {offsets = [0, 0], sizes = [1, 128], strides = [1, 1]} : vector<8x128xf32> to vector<1x128xf32>
    %645 = vector.broadcast %644 : vector<1x128xf32> to vector<16x128xf32>
    %646 = arith.addf %641, %645 : vector<16x128xf32>
    %cst_249 = arith.constant dense<0.000000e+00> : vector<128xf32>
    %647 = vector.multi_reduction <add>, %646, %cst_249 [0] : vector<16x128xf32> to vector<128xf32>
    %648 = vector.shape_cast %647 : vector<128xf32> to vector<1x128xf32>
    %cst_250 = arith.constant 6.250000e-02 : f32
    %649 = vector.broadcast %cst_250 : f32 to vector<1x128xf32>
    %650 = arith.mulf %648, %649 : vector<1x128xf32>
    %651 = arith.mulf %646, %646 : vector<16x128xf32>
    %cst_251 = arith.constant dense<0.000000e+00> : vector<128xf32>
    %652 = vector.multi_reduction <add>, %651, %cst_251 [0] : vector<16x128xf32> to vector<128xf32>
    %653 = vector.shape_cast %652 : vector<128xf32> to vector<1x128xf32>
    %cst_252 = arith.constant 6.250000e-02 : f32
    %654 = vector.broadcast %cst_252 : f32 to vector<1x128xf32>
    %655 = arith.mulf %653, %654 : vector<1x128xf32>
    %656 = arith.mulf %650, %650 : vector<1x128xf32>
    %657 = arith.subf %655, %656 : vector<1x128xf32>
    %cst_253 = arith.constant 0.000000e+00 : f32
    %658 = vector.broadcast %cst_253 : f32 to vector<1x128xf32>
    %659 = arith.maximumf %657, %658 : vector<1x128xf32>
    %660 = vector.extract_strided_slice %643 {offsets = [1, 0], sizes = [1, 128], strides = [1, 1]} : vector<8x128xf32> to vector<1x128xf32>
    %cst_254 = arith.constant 9.99999974E-6 : f32
    %661 = vector.broadcast %cst_254 : f32 to vector<1x128xf32>
    %662 = arith.addf %659, %661 : vector<1x128xf32>
    %663 = math.rsqrt %662 : vector<1x128xf32>
    %664 = arith.mulf %660, %663 : vector<1x128xf32>
    %665 = vector.extract_strided_slice %643 {offsets = [2, 0], sizes = [1, 128], strides = [1, 1]} : vector<8x128xf32> to vector<1x128xf32>
    %666 = arith.mulf %650, %664 : vector<1x128xf32>
    %667 = arith.subf %665, %666 : vector<1x128xf32>
    %668 = vector.broadcast %664 : vector<1x128xf32> to vector<16x128xf32>
    %669 = arith.mulf %646, %668 : vector<16x128xf32>
    %670 = vector.broadcast %667 : vector<1x128xf32> to vector<16x128xf32>
    %671 = arith.addf %669, %670 : vector<16x128xf32>
    %cst_255 = arith.constant 0.000000e+00 : f32
    %672 = vector.broadcast %cst_255 : f32 to vector<16x128xf32>
    %673 = arith.maximumf %671, %672 : vector<16x128xf32>
    %c0_256 = arith.constant 0 : index
    %c0_257 = arith.constant 0 : index
    %674 = vector.load %arg4[%c0_256, %c0_257] : memref<128x128xf32, #tpu.memory_space<vmem>>, vector<128x128xf32>
    %cst_258 = arith.constant dense<0.000000e+00> : vector<16x128xf32>
    %675 = tpu.matmul %673, %674, %cst_258 {dimension_numbers = #tpu.dot_dimension_numbers<[1], [0], [0], [1], [0, 0, 1, 1], [], []>} : vector<16x128xf32>, vector<128x128xf32>, vector<16x128xf32> -> vector<16x128xf32>
    %c0_259 = arith.constant 0 : index
    %c0_260 = arith.constant 0 : index
    %676 = vector.load %arg5[%c0_259, %c0_260] : memref<1x128xf32, #tpu.memory_space<vmem>>, vector<1x128xf32>
    %677 = vector.broadcast %676 : vector<1x128xf32> to vector<16x128xf32>
    %678 = arith.addf %675, %677 : vector<16x128xf32>
    %c0_261 = arith.constant 0 : index
    %c0_262 = arith.constant 0 : index
    %679 = vector.load %arg6[%c0_261, %c0_262] : memref<16x128xf32, #tpu.memory_space<vmem>>, vector<16x128xf32>
    tpu.vector_store %arg6[%c0_261, %c0_262], %678 {strides = array<i32>} : memref<16x128xf32, #tpu.memory_space<vmem>>, vector<16x128xf32>,
    return
  }
}

</mosaic_0001>

<llo_original>
// kernel: neural_net_forward.1
$region0: #{neural_net_forward.1}
  #allocation0 [shape = 'u32[]', space=smem, size = 0x4, offset = 0x4, fixed_abs, tag = 'smem constant byte address 0x4 - core index']
  #allocation1 [shape = 'u32[144,128]{1,0:T(1,128)}', space=vmem, size = 0x12000, scoped, tag = 'internal scratch']
  %s0 = inlined_call_operand.vmem [shape: f32[16,128], index: 0, kind: input, shape index: {}]
  %s1 = inlined_call_operand.hbm [shape: f32[19,128,128], index: 1, kind: input, shape index: {}]
  %s2 = inlined_call_operand.hbm [shape: f32[2,128,128], index: 2, kind: input, shape index: {}]
  %s3 = inlined_call_operand.hbm [shape: f32[19,8,128], index: 3, kind: input, shape index: {}]
  %s4 = inlined_call_operand.hbm [shape: f32[128,128], index: 4, kind: input, shape index: {}]
  %s5 = inlined_call_operand.hbm [shape: f32[1,128], index: 5, kind: input, shape index: {}]
  %s6 = inlined_call_operand.vmem [shape: f32[16,128], index: 6, kind: output, shape index: {}]
  %s7 = sld [smem:[#allocation0]]
  $region54: #{neural_net_forward.1} parent=0
    _
  %s9 = ssub.s32 1, %s7
  %s10 = scalar_select 0, %s9, %s7
  $region1: #{neural_net_forward.1} parent=0
    #allocation2 [shape = 'u8[1245184]{0}', space=vmem, size = 0x130000, scoped, tag = 'input window, operand 1, single buffered']
    #allocation3 [shape = 's32[1]{0}', space=sflag, size = 0x4, scoped, tag = 'scoped memory for neural_net_forward.1']
    #allocation4 [shape = 'u8[131072]{0}', space=vmem, size = 0x20000, scoped, tag = 'input window, operand 2, single buffered']
    #allocation5 [shape = 's32[1]{0}', space=sflag, size = 0x4, scoped, tag = 'scoped memory for neural_net_forward.1']
    #allocation6 [shape = 'u8[77824]{0}', space=vmem, size = 0x13000, scoped, tag = 'input window, operand 3, single buffered']
    #allocation7 [shape = 'u8[65536]{0}', space=vmem, size = 0x10000, scoped, tag = 'input window, operand 4, single buffered']
    #allocation8 [shape = 's32[1]{0}', space=sflag, size = 0x4, scoped, tag = 'scoped memory for neural_net_forward.1']
    #allocation9 [shape = 'u8[512]{0}', space=vmem, size = 0x400, scoped, tag = 'input window, operand 5, single buffered']
    %11 = vsyncpa [#allocation3], 0
    %12 = vsyncpa [#allocation5], 0
    %13 = vsyncpa [#allocation8], 0
    // Predicated region
    $region2: #{neural_net_forward.1} parent=1 // pred_check
      _
    $region3: #{neural_net_forward.1} parent=1 // pred_check_branch
      %15 = sbr.rel (0) target = $region5
    $region4: #{neural_net_forward.1} parent=1 // pred_region
      _
    $region5: #{neural_net_forward.1} parent=1 // pred_fallthru
      _
    // Predicated region
    $region6: #{neural_net_forward.1} parent=1 // pred_check
      _
    $region7: #{neural_net_forward.1} parent=1 // pred_check_branch
      %17 = sbr.rel (0) target = $region9
    $region8: #{neural_net_forward.1} parent=1 // pred_region
      %s19 = ssub.s32 38912, 38912
      %20 = vsyncadd [#allocation3], %s19
      %s21 = sshll.u32 [#allocation2], 4
      %s22 = int_to_ptr.vmem [resolvable:$true] %s21
      %27 = dma.hbm_to_vmem [thread:$0]  %s1, 38912, %s22, [#allocation3], 128, 128, 8
    $region9: #{neural_net_forward.1} parent=1 // pred_fallthru
      _
    // Predicated region
    $region10: #{neural_net_forward.1} parent=1 // pred_check
      _
    $region11: #{neural_net_forward.1} parent=1 // pred_check_branch
      %29 = sbr.rel (0) target = $region13
    $region12: #{neural_net_forward.1} parent=1 // pred_region
      %s31 = ssub.s32 4096, 4096
      %32 = vsyncadd [#allocation5], %s31
      %s33 = sshll.u32 [#allocation4], 4
      %s34 = int_to_ptr.vmem [resolvable:$true] %s33
      %39 = dma.hbm_to_vmem [thread:$0]  %s2, 4096, %s34, [#allocation5], 128, 128, 8
    $region13: #{neural_net_forward.1} parent=1 // pred_fallthru
      _
    // Predicated region
    $region14: #{neural_net_forward.1} parent=1 // pred_check
      _
    $region15: #{neural_net_forward.1} parent=1 // pred_check_branch
      %41 = sbr.rel (0) target = $region17
    $region16: #{neural_net_forward.1} parent=1 // pred_region
      %s43 = ssub.s32 2432, 2432
      %44 = vsyncadd [#allocation5], %s43
      %s45 = sshll.u32 [#allocation6], 4
      %s46 = int_to_ptr.vmem [resolvable:$true] %s45
      %51 = dma.hbm_to_vmem [thread:$0]  %s3, 2432, %s46, [#allocation5], 128, 128, 8
    $region17: #{neural_net_forward.1} parent=1 // pred_fallthru
      _
    // Predicated region
    $region18: #{neural_net_forward.1} parent=1 // pred_check
      _
    $region19: #{neural_net_forward.1} parent=1 // pred_check_branch
      %53 = sbr.rel (0) target = $region21
    $region20: #{neural_net_forward.1} parent=1 // pred_region
      %s55 = ssub.s32 2048, 2048
      %56 = vsyncadd [#allocation8], %s55
      %s57 = sshll.u32 [#allocation7], 4
      %s58 = int_to_ptr.vmem [resolvable:$true] %s57
      %63 = dma.hbm_to_vmem [thread:$0]  %s4, 2048, %s58, [#allocation8], 128, 128, 8
    $region21: #{neural_net_forward.1} parent=1 // pred_fallthru
      _
    // Predicated region
    $region22: #{neural_net_forward.1} parent=1 // pred_check
      _
    $region23: #{neural_net_forward.1} parent=1 // pred_check_branch
      %65 = sbr.rel (0) target = $region25
    $region24: #{neural_net_forward.1} parent=1 // pred_region
      %s67 = ssub.s32 16, 16
      %68 = vsyncadd [#allocation8], %s67
      %s70 = sshll.u32 [#allocation9], 4
      %s71 = int_to_ptr.vmem [resolvable:$true] %s70
      %73 = dma.hbm_to_vmem [thread:$0]  %s5, 16, %s71, [#allocation8]
    $region25: #{neural_net_forward.1} parent=1 // pred_fallthru
      _
    // Predicated region
    $region26: #{neural_net_forward.1} parent=1 // pred_check
      _
    $region27: #{neural_net_forward.1} parent=1 // pred_check_branch
      %75 = sbr.rel (0) target = $region29
    $region28: #{neural_net_forward.1} parent=1 // pred_region
      %76 = dma.done [#allocation3], 38912
    $region29: #{neural_net_forward.1} parent=1 // pred_fallthru
      _
    // Predicated region
    $region30: #{neural_net_forward.1} parent=1 // pred_check
      _
    $region31: #{neural_net_forward.1} parent=1 // pred_check_branch
      %78 = sbr.rel (0) target = $region33
    $region32: #{neural_net_forward.1} parent=1 // pred_region
      %79 = dma.done [#allocation5], 4096
    $region33: #{neural_net_forward.1} parent=1 // pred_fallthru
      _
    // Predicated region
    $region34: #{neural_net_forward.1} parent=1 // pred_check
      _
    $region35: #{neural_net_forward.1} parent=1 // pred_check_branch
      %81 = sbr.rel (0) target = $region37
    $region36: #{neural_net_forward.1} parent=1 // pred_region
      %82 = dma.done [#allocation5], 2432
    $region37: #{neural_net_forward.1} parent=1 // pred_fallthru
      _
    // Predicated region
    $region38: #{neural_net_forward.1} parent=1 // pred_check
      _
    $region39: #{neural_net_forward.1} parent=1 // pred_check_branch
      %84 = sbr.rel (0) target = $region41
    $region40: #{neural_net_forward.1} parent=1 // pred_region
      %85 = dma.done [#allocation8], 2048
    $region41: #{neural_net_forward.1} parent=1 // pred_fallthru
      _
    // Predicated region
    $region42: #{neural_net_forward.1} parent=1 // pred_check
      _
    $region43: #{neural_net_forward.1} parent=1 // pred_check_branch
      %87 = sbr.rel (0) target = $region45
    $region44: #{neural_net_forward.1} parent=1 // pred_region
      %88 = dma.done [#allocation8], 16
    $region45: #{neural_net_forward.1} parent=1 // pred_fallthru
      _
    %v89 = vld [vmem:[%s0] sm:$0xff]
    %v90 = vld [vmem:[%s0 + $0x8] sm:$0xff]
    %v91 = vld [vmem:[#allocation2] sm:$0xff]
    %v92 = vld [vmem:[#allocation2 + $0x8] sm:$0xff]
    %v93 = vld [vmem:[#allocation2 + $0x10] sm:$0xff]
    %v94 = vld [vmem:[#allocation2 + $0x18] sm:$0xff]
    %v95 = vld [vmem:[#allocation2 + $0x20] sm:$0xff]
    %v96 = vld [vmem:[#allocation2 + $0x28] sm:$0xff]
    %v97 = vld [vmem:[#allocation2 + $0x30] sm:$0xff]
    %v98 = vld [vmem:[#allocation2 + $0x38] sm:$0xff]
    %v99 = vld [vmem:[#allocation2 + $0x40] sm:$0xff]
    %v100 = vld [vmem:[#allocation2 + $0x48] sm:$0xff]
    %v101 = vld [vmem:[#allocation2 + $0x50] sm:$0xff]
    %v102 = vld [vmem:[#allocation2 + $0x58] sm:$0xff]
    %v103 = vld [vmem:[#allocation2 + $0x60] sm:$0xff]
    %v104 = vld [vmem:[#allocation2 + $0x68] sm:$0xff]
    %v105 = vld [vmem:[#allocation2 + $0x70] sm:$0xff]
    %v106 = vld [vmem:[#allocation2 + $0x78] sm:$0xff]
    %v107 = vld [vmem:[#allocation6] sm:$0xff]
    %v108 = vlaneseq
    %v109 = vshrl.u32 %v108, 7
    %v110 = vsub.s32 0, %v109
    %v111 = vrot.slane %v107, %v110
    %112 = vmatprep.subr.mxu0 0.0
    %113 = vmatpush1.msra.mxu0 %v91
    %114 = vmatprep.subr.mxu0 0.0
    %115 = vmatpush1.msra.mxu0 %v92
    %116 = vmatprep.subr.mxu0 0.0
    %117 = vmatpush1.msra.mxu0 %v93
    %118 = vmatprep.subr.mxu0 0.0
    %119 = vmatpush1.msra.mxu0 %v94
    %120 = vmatprep.subr.mxu0 0.0
    %121 = vmatpush1.msra.mxu0 %v95
    %122 = vmatprep.subr.mxu0 0.0
    %123 = vmatpush1.msra.mxu0 %v96
    %124 = vmatprep.subr.mxu0 0.0
    %125 = vmatpush1.msra.mxu0 %v97
    %126 = vmatprep.subr.mxu0 0.0
    %127 = vmatpush1.msra.mxu0 %v98
    %128 = vmatprep.subr.mxu0 0.0
    %129 = vmatpush1.msra.mxu0 %v99
    %130 = vmatprep.subr.mxu0 0.0
    %131 = vmatpush1.msra.mxu0 %v100
    %132 = vmatprep.subr.mxu0 0.0
    %133 = vmatpush1.msra.mxu0 %v101
    %134 = vmatprep.subr.mxu0 0.0
    %135 = vmatpush1.msra.mxu0 %v102
    %136 = vmatprep.subr.mxu0 0.0
    %137 = vmatpush1.msra.mxu0 %v103
    %138 = vmatprep.subr.mxu0 0.0
    %139 = vmatpush1.msra.mxu0 %v104
    %140 = vmatprep.subr.mxu0 0.0
    %141 = vmatpush1.msra.mxu0 %v105
    %142 = vmatprep.subr.mxu0 0.0
    %143 = vmatpush1.msra.mxu0 %v106
    %144 = vmatprep.subr.mxu0 0.0
    %145 = vmatpush1.msra.mxu0 0.0
    %146 = vmatprep.subr.mxu0 0.0
    %147 = vmatpush1.msra.mxu0 0.0
    %148 = vmatprep.subr.mxu0 0.0
    %149 = vmatpush1.msra.mxu0 0.0
    %150 = vmatprep.subr.mxu0 0.0
    %151 = vmatpush1.msra.mxu0 0.0
    %152 = vmatprep.subr.mxu0 0.0
    %153 = vmatpush1.msra.mxu0 0.0
    %154 = vmatprep.subr.mxu0 0.0
    %155 = vmatpush1.msra.mxu0 0.0
    %156 = vmatprep.subr.mxu0 0.0
    %157 = vmatpush1.msra.mxu0 0.0
    %158 = vmatprep.subr.mxu0 0.0
    %159 = vmatpush1.msra.mxu0 0.0
    %160 = vmatprep.subr.mxu0 0.0
    %161 = vmatpush1.msra.mxu0 0.0
    %162 = vmatprep.subr.mxu0 0.0
    %163 = vmatpush1.msra.mxu0 0.0
    %164 = vmatprep.subr.mxu0 0.0
    %165 = vmatpush1.msra.mxu0 0.0
    %166 = vmatprep.subr.mxu0 0.0
    %167 = vmatpush1.msra.mxu0 0.0
    %168 = vmatprep.subr.mxu0 0.0
    %169 = vmatpush1.msra.mxu0 0.0
    %170 = vmatprep.subr.mxu0 0.0
    %171 = vmatpush1.msra.mxu0 0.0
    %172 = vmatprep.subr.mxu0 0.0
    %173 = vmatpush1.msra.mxu0 0.0
    %174 = vmatprep.subr.mxu0 0.0
    %175 = vmatpush1.msra.mxu0 0.0
    %176 = vmatprep.mubr.f32.mxu0 0.0
    %177 = vmatmul.mubr.f32.gmra.mrb[0].mxu0 %v89
    %v178 = vpop.f32.mrb[0].mxu0
    %v179 = vadd.f32 %v111, %v178
    %v180 = vpop.f32.mrb[0].mxu0
    %181 = vmatprep.mubr.f32.mxu0 0.0
    %182 = vmatmul.mubr.f32.gmra.mrb[0].mxu0 %v90
    %v183 = vpop.f32.mrb[0].mxu0
    %v184 = vadd.f32 %v111, %v183
    %v185 = vpop.f32.mrb[0].mxu0
    %186 = vdwg.mxu0
    %v187 = vadd.f32 %v179, %v184
    %v188 = vrot.slane %v187, 4
    %v189 = vadd.f32 %v187, %v188
    %v190 = vrot.slane %v189, 2
    %v191 = vadd.f32 %v189, %v190
    %v192 = vrot.slane %v191, 1
    %v193 = vadd.f32 %v191, %v192
    %v194 = vmul.f32 %v193, 0.0625
    %v195 = vmul.f32 %v179, %v179
    %v196 = vmul.f32 %v184, %v184
    %v197 = vadd.f32 %v195, %v196
    %v198 = vrot.slane %v197, 4
    %v199 = vadd.f32 %v197, %v198
    %v200 = vrot.slane %v199, 2
    %v201 = vadd.f32 %v199, %v200
    %v202 = vrot.slane %v201, 1
    %v203 = vadd.f32 %v201, %v202
    %v204 = vmul.f32 %v203, 0.0625
    %v205 = vmul.f32 %v194, %v194
    %v206 = vsub.f32 %v204, %v205
    %v207 = vmax.f32 %v206, 0.0
    %v208 = vadd.f32 %v207, 1e-05
    %v209 = vrsqrt.pop %v208
    %v210 = vmul.f32 %v107, %v209
    %v211 = vmul.f32 %v194, %v210
    %v213 = vrot.slane %v211, 7
    %v215 = vsub.f32 %v107, %v213
    %v216 = vlaneseq
    %v217 = vshrl.u32 %v216, 7
    %v218 = vsub.s32 1, %v217
    %v219 = vrot.slane %v210, %v218
    %v220 = vmul.f32 %v179, %v219
    %v221 = vmul.f32 %v184, %v219
    %v222 = vlaneseq
    %v223 = vshrl.u32 %v222, 7
    %v224 = vsub.s32 2, %v223
    %v225 = vrot.slane %v215, %v224
    %v226 = vadd.f32 %v220, %v225
    %v227 = vadd.f32 %v221, %v225
    %v228 = vmax.f32 %v226, 0.0
    %v229 = vmax.f32 %v227, 0.0
    %s230 = scalar_lea.vmem [#allocation2], 128
    %v231 = vld [vmem:[%s230] sm:$0xff]
    %v232 = vld [vmem:[%s230 + $0x8] sm:$0xff]
    %v233 = vld [vmem:[%s230 + $0x10] sm:$0xff]
    %v234 = vld [vmem:[%s230 + $0x18] sm:$0xff]
    %v235 = vld [vmem:[%s230 + $0x20] sm:$0xff]
    %v236 = vld [vmem:[%s230 + $0x28] sm:$0xff]
    %v237 = vld [vmem:[%s230 + $0x30] sm:$0xff]
    %v238 = vld [vmem:[%s230 + $0x38] sm:$0xff]
    %v239 = vld [vmem:[%s230 + $0x40] sm:$0xff]
    %v240 = vld [vmem:[%s230 + $0x48] sm:$0xff]
    %v241 = vld [vmem:[%s230 + $0x50] sm:$0xff]
    %v242 = vld [vmem:[%s230 + $0x58] sm:$0xff]
    %v243 = vld [vmem:[%s230 + $0x60] sm:$0xff]
    %v244 = vld [vmem:[%s230 + $0x68] sm:$0xff]
    %v245 = vld [vmem:[%s230 + $0x70] sm:$0xff]
    %v246 = vld [vmem:[%s230 + $0x78] sm:$0xff]
    %s247 = scalar_lea.vmem [#allocation6], 8
    %v248 = vld [vmem:[%s247] sm:$0xff]
    %v249 = vlaneseq
    %v250 = vshrl.u32 %v249, 7
    %v251 = vsub.s32 0, %v250
    %v252 = vrot.slane %v248, %v251
    %253 = vmatprep.subr.mxu0 0.0
    %254 = vmatpush1.msra.mxu0 %v231
    %255 = vmatprep.subr.mxu0 0.0
    %256 = vmatpush1.msra.mxu0 %v232
    %257 = vmatprep.subr.mxu0 0.0
    %258 = vmatpush1.msra.mxu0 %v233
    %259 = vmatprep.subr.mxu0 0.0
    %260 = vmatpush1.msra.mxu0 %v234
    %261 = vmatprep.subr.mxu0 0.0
    %262 = vmatpush1.msra.mxu0 %v235
    %263 = vmatprep.subr.mxu0 0.0
    %264 = vmatpush1.msra.mxu0 %v236
    %265 = vmatprep.subr.mxu0 0.0
    %266 = vmatpush1.msra.mxu0 %v237
    %267 = vmatprep.subr.mxu0 0.0
    %268 = vmatpush1.msra.mxu0 %v238
    %269 = vmatprep.subr.mxu0 0.0
    %270 = vmatpush1.msra.mxu0 %v239
    %271 = vmatprep.subr.mxu0 0.0
    %272 = vmatpush1.msra.mxu0 %v240
    %273 = vmatprep.subr.mxu0 0.0
    %274 = vmatpush1.msra.mxu0 %v241
    %275 = vmatprep.subr.mxu0 0.0
    %276 = vmatpush1.msra.mxu0 %v242
    %277 = vmatprep.subr.mxu0 0.0
    %278 = vmatpush1.msra.mxu0 %v243
    %279 = vmatprep.subr.mxu0 0.0
    %280 = vmatpush1.msra.mxu0 %v244
    %281 = vmatprep.subr.mxu0 0.0
    %282 = vmatpush1.msra.mxu0 %v245
    %283 = vmatprep.subr.mxu0 0.0
    %284 = vmatpush1.msra.mxu0 %v246
    %285 = vmatprep.subr.mxu0 0.0
    %286 = vmatpush1.msra.mxu0 0.0
    %287 = vmatprep.subr.mxu0 0.0
    %288 = vmatpush1.msra.mxu0 0.0
    %289 = vmatprep.subr.mxu0 0.0
    %290 = vmatpush1.msra.mxu0 0.0
    %291 = vmatprep.subr.mxu0 0.0
    %292 = vmatpush1.msra.mxu0 0.0
    %293 = vmatprep.subr.mxu0 0.0
    %294 = vmatpush1.msra.mxu0 0.0
    %295 = vmatprep.subr.mxu0 0.0
    %296 = vmatpush1.msra.mxu0 0.0
    %297 = vmatprep.subr.mxu0 0.0
    %298 = vmatpush1.msra.mxu0 0.0
    %299 = vmatprep.subr.mxu0 0.0
    %300 = vmatpush1.msra.mxu0 0.0
    %301 = vmatprep.subr.mxu0 0.0
    %302 = vmatpush1.msra.mxu0 0.0
    %303 = vmatprep.subr.mxu0 0.0
    %304 = vmatpush1.msra.mxu0 0.0
    %305 = vmatprep.subr.mxu0 0.0
    %306 = vmatpush1.msra.mxu0 0.0
    %307 = vmatprep.subr.mxu0 0.0
    %308 = vmatpush1.msra.mxu0 0.0
    %309 = vmatprep.subr.mxu0 0.0
    %310 = vmatpush1.msra.mxu0 0.0
    %311 = vmatprep.subr.mxu0 0.0
    %312 = vmatpush1.msra.mxu0 0.0
    %313 = vmatprep.subr.mxu0 0.0
    %314 = vmatpush1.msra.mxu0 0.0
    %315 = vmatprep.subr.mxu0 0.0
    %316 = vmatpush1.msra.mxu0 0.0
    %317 = vmatprep.mubr.f32.mxu0 0.0
    %318 = vmatmul.mubr.f32.gmra.mrb[0].mxu0 %v228
    %v319 = vpop.f32.mrb[0].mxu0
    %v320 = vadd.f32 %v252, %v319
    %v321 = vpop.f32.mrb[0].mxu0
    %322 = vmatprep.mubr.f32.mxu0 0.0
    %323 = vmatmul.mubr.f32.gmra.mrb[0].mxu0 %v229
    %v324 = vpop.f32.mrb[0].mxu0
    %v325 = vadd.f32 %v252, %v324
    %v326 = vpop.f32.mrb[0].mxu0
    %327 = vdwg.mxu0
    %v328 = vadd.f32 %v320, %v325
    %v329 = vrot.slane %v328, 4
    %v330 = vadd.f32 %v328, %v329
    %v331 = vrot.slane %v330, 2
    %v332 = vadd.f32 %v330, %v331
    %v333 = vrot.slane %v332, 1
    %v334 = vadd.f32 %v332, %v333
    %v335 = vmul.f32 %v334, 0.0625
    %v336 = vmul.f32 %v320, %v320
    %v337 = vmul.f32 %v325, %v325
    %v338 = vadd.f32 %v336, %v337
    %v339 = vrot.slane %v338, 4
    %v340 = vadd.f32 %v338, %v339
    %v341 = vrot.slane %v340, 2
    %v342 = vadd.f32 %v340, %v341
    %v343 = vrot.slane %v342, 1
    %v344 = vadd.f32 %v342, %v343
    %v345 = vmul.f32 %v344, 0.0625
    %v346 = vmul.f32 %v335, %v335
    %v347 = vsub.f32 %v345, %v346
    %v348 = vmax.f32 %v347, 0.0
    %v349 = vadd.f32 %v348, 1e-05
    %v350 = vrsqrt.pop %v349
    %v351 = vmul.f32 %v248, %v350
    %v352 = vmul.f32 %v335, %v351
    %v354 = vrot.slane %v352, 7
    %v356 = vsub.f32 %v248, %v354
    %v357 = vlaneseq
    %v358 = vshrl.u32 %v357, 7
    %v359 = vsub.s32 1, %v358
    %v360 = vrot.slane %v351, %v359
    %v361 = vmul.f32 %v320, %v360
    %v362 = vmul.f32 %v325, %v360
    %v363 = vlaneseq
    %v364 = vshrl.u32 %v363, 7
    %v365 = vsub.s32 2, %v364
    %v366 = vrot.slane %v356, %v365
    %v367 = vadd.f32 %v361, %v366
    %v368 = vadd.f32 %v362, %v366
    %v369 = vmax.f32 %v367, 0.0
    %v370 = vmax.f32 %v368, 0.0
    %s371 = scalar_lea.vmem [#allocation2], 256
    %v372 = vld [vmem:[%s371] sm:$0xff]
    %v373 = vld [vmem:[%s371 + $0x8] sm:$0xff]
    %v374 = vld [vmem:[%s371 + $0x10] sm:$0xff]
    %v375 = vld [vmem:[%s371 + $0x18] sm:$0xff]
    %v376 = vld [vmem:[%s371 + $0x20] sm:$0xff]
    %v377 = vld [vmem:[%s371 + $0x28] sm:$0xff]
    %v378 = vld [vmem:[%s371 + $0x30] sm:$0xff]
    %v379 = vld [vmem:[%s371 + $0x38] sm:$0xff]
    %v380 = vld [vmem:[%s371 + $0x40] sm:$0xff]
    %v381 = vld [vmem:[%s371 + $0x48] sm:$0xff]
    %v382 = vld [vmem:[%s371 + $0x50] sm:$0xff]
    %v383 = vld [vmem:[%s371 + $0x58] sm:$0xff]
    %v384 = vld [vmem:[%s371 + $0x60] sm:$0xff]
    %v385 = vld [vmem:[%s371 + $0x68] sm:$0xff]
    %v386 = vld [vmem:[%s371 + $0x70] sm:$0xff]
    %v387 = vld [vmem:[%s371 + $0x78] sm:$0xff]
    %s388 = scalar_lea.vmem [#allocation6], 16
    %v389 = vld [vmem:[%s388] sm:$0xff]
    %v390 = vlaneseq
    %v391 = vshrl.u32 %v390, 7
    %v392 = vsub.s32 0, %v391
    %v393 = vrot.slane %v389, %v392
    %394 = vmatprep.subr.mxu0 0.0
    %395 = vmatpush1.msra.mxu0 %v372
    %396 = vmatprep.subr.mxu0 0.0
    %397 = vmatpush1.msra.mxu0 %v373
    %398 = vmatprep.subr.mxu0 0.0
    %399 = vmatpush1.msra.mxu0 %v374
    %400 = vmatprep.subr.mxu0 0.0
    %401 = vmatpush1.msra.mxu0 %v375
    %402 = vmatprep.subr.mxu0 0.0
    %403 = vmatpush1.msra.mxu0 %v376
    %404 = vmatprep.subr.mxu0 0.0
    %405 = vmatpush1.msra.mxu0 %v377
    %406 = vmatprep.subr.mxu0 0.0
    %407 = vmatpush1.msra.mxu0 %v378
    %408 = vmatprep.subr.mxu0 0.0
    %409 = vmatpush1.msra.mxu0 %v379
    %410 = vmatprep.subr.mxu0 0.0
    %411 = vmatpush1.msra.mxu0 %v380
    %412 = vmatprep.subr.mxu0 0.0
    %413 = vmatpush1.msra.mxu0 %v381
    %414 = vmatprep.subr.mxu0 0.0
    %415 = vmatpush1.msra.mxu0 %v382
    %416 = vmatprep.subr.mxu0 0.0
    %417 = vmatpush1.msra.mxu0 %v383
    %418 = vmatprep.subr.mxu0 0.0
    %419 = vmatpush1.msra.mxu0 %v384
    %420 = vmatprep.subr.mxu0 0.0
    %421 = vmatpush1.msra.mxu0 %v385
    %422 = vmatprep.subr.mxu0 0.0
    %423 = vmatpush1.msra.mxu0 %v386
    %424 = vmatprep.subr.mxu0 0.0
    %425 = vmatpush1.msra.mxu0 %v387
    %426 = vmatprep.subr.mxu0 0.0
    %427 = vmatpush1.msra.mxu0 0.0
    %428 = vmatprep.subr.mxu0 0.0
    %429 = vmatpush1.msra.mxu0 0.0
    %430 = vmatprep.subr.mxu0 0.0
    %431 = vmatpush1.msra.mxu0 0.0
    %432 = vmatprep.subr.mxu0 0.0
    %433 = vmatpush1.msra.mxu0 0.0
    %434 = vmatprep.subr.mxu0 0.0
    %435 = vmatpush1.msra.mxu0 0.0
    %436 = vmatprep.subr.mxu0 0.0
    %437 = vmatpush1.msra.mxu0 0.0
    %438 = vmatprep.subr.mxu0 0.0
    %439 = vmatpush1.msra.mxu0 0.0
    %440 = vmatprep.subr.mxu0 0.0
    %441 = vmatpush1.msra.mxu0 0.0
    %442 = vmatprep.subr.mxu0 0.0
    %443 = vmatpush1.msra.mxu0 0.0
    %444 = vmatprep.subr.mxu0 0.0
    %445 = vmatpush1.msra.mxu0 0.0
    %446 = vmatprep.subr.mxu0 0.0
    %447 = vmatpush1.msra.mxu0 0.0
    %448 = vmatprep.subr.mxu0 0.0
    %449 = vmatpush1.msra.mxu0 0.0
    %450 = vmatprep.subr.mxu0 0.0
    %451 = vmatpush1.msra.mxu0 0.0
    %452 = vmatprep.subr.mxu0 0.0
    %453 = vmatpush1.msra.mxu0 0.0
    %454 = vmatprep.subr.mxu0 0.0
    %455 = vmatpush1.msra.mxu0 0.0
    %456 = vmatprep.subr.mxu0 0.0
    %457 = vmatpush1.msra.mxu0 0.0
    %458 = vmatprep.mubr.f32.mxu0 0.0
    %459 = vmatmul.mubr.f32.gmra.mrb[0].mxu0 %v369
    %v460 = vpop.f32.mrb[0].mxu0
    %v461 = vadd.f32 %v393, %v460
    %v462 = vpop.f32.mrb[0].mxu0
    %463 = vmatprep.mubr.f32.mxu0 0.0
    %464 = vmatmul.mubr.f32.gmra.mrb[0].mxu0 %v370
    %v465 = vpop.f32.mrb[0].mxu0
    %v466 = vadd.f32 %v393, %v465
    %v467 = vpop.f32.mrb[0].mxu0
    %468 = vdwg.mxu0
    %v469 = vadd.f32 %v461, %v466
    %v470 = vrot.slane %v469, 4
    %v471 = vadd.f32 %v469, %v470
    %v472 = vrot.slane %v471, 2
    %v473 = vadd.f32 %v471, %v472
    %v474 = vrot.slane %v473, 1
    %v475 = vadd.f32 %v473, %v474
    %v476 = vmul.f32 %v475, 0.0625
    %v477 = vmul.f32 %v461, %v461
    %v478 = vmul.f32 %v466, %v466
    %v479 = vadd.f32 %v477, %v478
    %v480 = vrot.slane %v479, 4
    %v481 = vadd.f32 %v479, %v480
    %v482 = vrot.slane %v481, 2
    %v483 = vadd.f32 %v481, %v482
    %v484 = vrot.slane %v483, 1
    %v485 = vadd.f32 %v483, %v484
    %v486 = vmul.f32 %v485, 0.0625
    %v487 = vmul.f32 %v476, %v476
    %v488 = vsub.f32 %v486, %v487
    %v489 = vmax.f32 %v488, 0.0
    %v490 = vadd.f32 %v489, 1e-05
    %v491 = vrsqrt.pop %v490
    %v492 = vmul.f32 %v389, %v491
    %v493 = vmul.f32 %v476, %v492
    %v495 = vrot.slane %v493, 7
    %v497 = vsub.f32 %v389, %v495
    %v498 = vlaneseq
    %v499 = vshrl.u32 %v498, 7
    %v500 = vsub.s32 1, %v499
    %v501 = vrot.slane %v492, %v500
    %v502 = vmul.f32 %v461, %v501
    %v503 = vmul.f32 %v466, %v501
    %v504 = vlaneseq
    %v505 = vshrl.u32 %v504, 7
    %v506 = vsub.s32 2, %v505
    %v507 = vrot.slane %v497, %v506
    %v508 = vadd.f32 %v502, %v507
    %v509 = vadd.f32 %v503, %v507
    %v510 = vmax.f32 %v508, 0.0
    %v511 = vmax.f32 %v509, 0.0
    %s512 = scalar_lea.vmem [#allocation2], 384
    %v513 = vld [vmem:[%s512] sm:$0xff]
    %v514 = vld [vmem:[%s512 + $0x8] sm:$0xff]
    %v515 = vld [vmem:[%s512 + $0x10] sm:$0xff]
    %v516 = vld [vmem:[%s512 + $0x18] sm:$0xff]
    %v517 = vld [vmem:[%s512 + $0x20] sm:$0xff]
    %v518 = vld [vmem:[%s512 + $0x28] sm:$0xff]
    %v519 = vld [vmem:[%s512 + $0x30] sm:$0xff]
    %v520 = vld [vmem:[%s512 + $0x38] sm:$0xff]
    %v521 = vld [vmem:[%s512 + $0x40] sm:$0xff]
    %v522 = vld [vmem:[%s512 + $0x48] sm:$0xff]
    %v523 = vld [vmem:[%s512 + $0x50] sm:$0xff]
    %v524 = vld [vmem:[%s512 + $0x58] sm:$0xff]
    %v525 = vld [vmem:[%s512 + $0x60] sm:$0xff]
    %v526 = vld [vmem:[%s512 + $0x68] sm:$0xff]
    %v527 = vld [vmem:[%s512 + $0x70] sm:$0xff]
    %v528 = vld [vmem:[%s512 + $0x78] sm:$0xff]
    %s529 = scalar_lea.vmem [#allocation6], 24
    %v530 = vld [vmem:[%s529] sm:$0xff]
    %v531 = vlaneseq
    %v532 = vshrl.u32 %v531, 7
    %v533 = vsub.s32 0, %v532
    %v534 = vrot.slane %v530, %v533
    %535 = vmatprep.subr.mxu0 0.0
    %536 = vmatpush1.msra.mxu0 %v513
    %537 = vmatprep.subr.mxu0 0.0
    %538 = vmatpush1.msra.mxu0 %v514
    %539 = vmatprep.subr.mxu0 0.0
    %540 = vmatpush1.msra.mxu0 %v515
    %541 = vmatprep.subr.mxu0 0.0
    %542 = vmatpush1.msra.mxu0 %v516
    %543 = vmatprep.subr.mxu0 0.0
    %544 = vmatpush1.msra.mxu0 %v517
    %545 = vmatprep.subr.mxu0 0.0
    %546 = vmatpush1.msra.mxu0 %v518
    %547 = vmatprep.subr.mxu0 0.0
    %548 = vmatpush1.msra.mxu0 %v519
    %549 = vmatprep.subr.mxu0 0.0
    %550 = vmatpush1.msra.mxu0 %v520
    %551 = vmatprep.subr.mxu0 0.0
    %552 = vmatpush1.msra.mxu0 %v521
    %553 = vmatprep.subr.mxu0 0.0
    %554 = vmatpush1.msra.mxu0 %v522
    %555 = vmatprep.subr.mxu0 0.0
    %556 = vmatpush1.msra.mxu0 %v523
    %557 = vmatprep.subr.mxu0 0.0
    %558 = vmatpush1.msra.mxu0 %v524
    %559 = vmatprep.subr.mxu0 0.0
    %560 = vmatpush1.msra.mxu0 %v525
    %561 = vmatprep.subr.mxu0 0.0
    %562 = vmatpush1.msra.mxu0 %v526
    %563 = vmatprep.subr.mxu0 0.0
    %564 = vmatpush1.msra.mxu0 %v527
    %565 = vmatprep.subr.mxu0 0.0
    %566 = vmatpush1.msra.mxu0 %v528
    %567 = vmatprep.subr.mxu0 0.0
    %568 = vmatpush1.msra.mxu0 0.0
    %569 = vmatprep.subr.mxu0 0.0
    %570 = vmatpush1.msra.mxu0 0.0
    %571 = vmatprep.subr.mxu0 0.0
    %572 = vmatpush1.msra.mxu0 0.0
    %573 = vmatprep.subr.mxu0 0.0
    %574 = vmatpush1.msra.mxu0 0.0
    %575 = vmatprep.subr.mxu0 0.0
    %576 = vmatpush1.msra.mxu0 0.0
    %577 = vmatprep.subr.mxu0 0.0
    %578 = vmatpush1.msra.mxu0 0.0
    %579 = vmatprep.subr.mxu0 0.0
    %580 = vmatpush1.msra.mxu0 0.0
    %581 = vmatprep.subr.mxu0 0.0
    %582 = vmatpush1.msra.mxu0 0.0
    %583 = vmatprep.subr.mxu0 0.0
    %584 = vmatpush1.msra.mxu0 0.0
    %585 = vmatprep.subr.mxu0 0.0
    %586 = vmatpush1.msra.mxu0 0.0
    %587 = vmatprep.subr.mxu0 0.0
    %588 = vmatpush1.msra.mxu0 0.0
    %589 = vmatprep.subr.mxu0 0.0
    %590 = vmatpush1.msra.mxu0 0.0
    %591 = vmatprep.subr.mxu0 0.0
    %592 = vmatpush1.msra.mxu0 0.0
    %593 = vmatprep.subr.mxu0 0.0
    %594 = vmatpush1.msra.mxu0 0.0
    %595 = vmatprep.subr.mxu0 0.0
    %596 = vmatpush1.msra.mxu0 0.0
    %597 = vmatprep.subr.mxu0 0.0
    %598 = vmatpush1.msra.mxu0 0.0
    %599 = vmatprep.mubr.f32.mxu0 0.0
    %600 = vmatmul.mubr.f32.gmra.mrb[0].mxu0 %v510
    %v601 = vpop.f32.mrb[0].mxu0
    %v602 = vadd.f32 %v534, %v601
    %v603 = vpop.f32.mrb[0].mxu0
    %604 = vmatprep.mubr.f32.mxu0 0.0
    %605 = vmatmul.mubr.f32.gmra.mrb[0].mxu0 %v511
    %v606 = vpop.f32.mrb[0].mxu0
    %v607 = vadd.f32 %v534, %v606
    %v608 = vpop.f32.mrb[0].mxu0
    %609 = vdwg.mxu0
    %v610 = vadd.f32 %v602, %v607
    %v611 = vrot.slane %v610, 4
    %v612 = vadd.f32 %v610, %v611
    %v613 = vrot.slane %v612, 2
    %v614 = vadd.f32 %v612, %v613
    %v615 = vrot.slane %v614, 1
    %v616 = vadd.f32 %v614, %v615
    %v617 = vmul.f32 %v616, 0.0625
    %v618 = vmul.f32 %v602, %v602
    %v619 = vmul.f32 %v607, %v607
    %v620 = vadd.f32 %v618, %v619
    %v621 = vrot.slane %v620, 4
    %v622 = vadd.f32 %v620, %v621
    %v623 = vrot.slane %v622, 2
    %v624 = vadd.f32 %v622, %v623
    %v625 = vrot.slane %v624, 1
    %v626 = vadd.f32 %v624, %v625
    %v627 = vmul.f32 %v626, 0.0625
    %v628 = vmul.f32 %v617, %v617
    %v629 = vsub.f32 %v627, %v628
    %v630 = vmax.f32 %v629, 0.0
    %v631 = vadd.f32 %v630, 1e-05
    %v632 = vrsqrt.pop %v631
    %v633 = vmul.f32 %v530, %v632
    %v634 = vmul.f32 %v617, %v633
    %v636 = vrot.slane %v634, 7
    %v638 = vsub.f32 %v530, %v636
    %v639 = vlaneseq
    %v640 = vshrl.u32 %v639, 7
    %v641 = vsub.s32 1, %v640
    %v642 = vrot.slane %v633, %v641
    %v643 = vmul.f32 %v602, %v642
    %v644 = vmul.f32 %v607, %v642
    %v645 = vlaneseq
    %v646 = vshrl.u32 %v645, 7
    %v647 = vsub.s32 2, %v646
    %v648 = vrot.slane %v638, %v647
    %v649 = vadd.f32 %v643, %v648
    %v650 = vadd.f32 %v644, %v648
    %v651 = vmax.f32 %v649, 0.0
    %v652 = vmax.f32 %v650, 0.0
    %s653 = scalar_lea.vmem [#allocation2], 512
    %v654 = vld [vmem:[%s653] sm:$0xff]
    %v655 = vld [vmem:[%s653 + $0x8] sm:$0xff]
    %v656 = vld [vmem:[%s653 + $0x10] sm:$0xff]
    %v657 = vld [vmem:[%s653 + $0x18] sm:$0xff]
    %v658 = vld [vmem:[%s653 + $0x20] sm:$0xff]
    %v659 = vld [vmem:[%s653 + $0x28] sm:$0xff]
    %v660 = vld [vmem:[%s653 + $0x30] sm:$0xff]
    %v661 = vld [vmem:[%s653 + $0x38] sm:$0xff]
    %v662 = vld [vmem:[%s653 + $0x40] sm:$0xff]
    %v663 = vld [vmem:[%s653 + $0x48] sm:$0xff]
    %v664 = vld [vmem:[%s653 + $0x50] sm:$0xff]
    %v665 = vld [vmem:[%s653 + $0x58] sm:$0xff]
    %v666 = vld [vmem:[%s653 + $0x60] sm:$0xff]
    %v667 = vld [vmem:[%s653 + $0x68] sm:$0xff]
    %v668 = vld [vmem:[%s653 + $0x70] sm:$0xff]
    %v669 = vld [vmem:[%s653 + $0x78] sm:$0xff]
    %s670 = scalar_lea.vmem [#allocation6], 32
    %v671 = vld [vmem:[%s670] sm:$0xff]
    %v672 = vlaneseq
    %v673 = vshrl.u32 %v672, 7
    %v674 = vsub.s32 0, %v673
    %v675 = vrot.slane %v671, %v674
    %676 = vmatprep.subr.mxu0 0.0
    %677 = vmatpush1.msra.mxu0 %v654
    %678 = vmatprep.subr.mxu0 0.0
    %679 = vmatpush1.msra.mxu0 %v655
    %680 = vmatprep.subr.mxu0 0.0
    %681 = vmatpush1.msra.mxu0 %v656
    %682 = vmatprep.subr.mxu0 0.0
    %683 = vmatpush1.msra.mxu0 %v657
    %684 = vmatprep.subr.mxu0 0.0
    %685 = vmatpush1.msra.mxu0 %v658
    %686 = vmatprep.subr.mxu0 0.0
    %687 = vmatpush1.msra.mxu0 %v659
    %688 = vmatprep.subr.mxu0 0.0
    %689 = vmatpush1.msra.mxu0 %v660
    %690 = vmatprep.subr.mxu0 0.0
    %691 = vmatpush1.msra.mxu0 %v661
    %692 = vmatprep.subr.mxu0 0.0
    %693 = vmatpush1.msra.mxu0 %v662
    %694 = vmatprep.subr.mxu0 0.0
    %695 = vmatpush1.msra.mxu0 %v663
    %696 = vmatprep.subr.mxu0 0.0
    %697 = vmatpush1.msra.mxu0 %v664
    %698 = vmatprep.subr.mxu0 0.0
    %699 = vmatpush1.msra.mxu0 %v665
    %700 = vmatprep.subr.mxu0 0.0
    %701 = vmatpush1.msra.mxu0 %v666
    %702 = vmatprep.subr.mxu0 0.0
    %703 = vmatpush1.msra.mxu0 %v667
    %704 = vmatprep.subr.mxu0 0.0
    %705 = vmatpush1.msra.mxu0 %v668
    %706 = vmatprep.subr.mxu0 0.0
    %707 = vmatpush1.msra.mxu0 %v669
    %708 = vmatprep.subr.mxu0 0.0
    %709 = vmatpush1.msra.mxu0 0.0
    %710 = vmatprep.subr.mxu0 0.0
    %711 = vmatpush1.msra.mxu0 0.0
    %712 = vmatprep.subr.mxu0 0.0
    %713 = vmatpush1.msra.mxu0 0.0
    %714 = vmatprep.subr.mxu0 0.0
    %715 = vmatpush1.msra.mxu0 0.0
    %716 = vmatprep.subr.mxu0 0.0
    %717 = vmatpush1.msra.mxu0 0.0
    %718 = vmatprep.subr.mxu0 0.0
    %719 = vmatpush1.msra.mxu0 0.0
    %720 = vmatprep.subr.mxu0 0.0
    %721 = vmatpush1.msra.mxu0 0.0
    %722 = vmatprep.subr.mxu0 0.0
    %723 = vmatpush1.msra.mxu0 0.0
    %724 = vmatprep.subr.mxu0 0.0
    %725 = vmatpush1.msra.mxu0 0.0
    %726 = vmatprep.subr.mxu0 0.0
    %727 = vmatpush1.msra.mxu0 0.0
    %728 = vmatprep.subr.mxu0 0.0
    %729 = vmatpush1.msra.mxu0 0.0
    %730 = vmatprep.subr.mxu0 0.0
    %731 = vmatpush1.msra.mxu0 0.0
    %732 = vmatprep.subr.mxu0 0.0
    %733 = vmatpush1.msra.mxu0 0.0
    %734 = vmatprep.subr.mxu0 0.0
    %735 = vmatpush1.msra.mxu0 0.0
    %736 = vmatprep.subr.mxu0 0.0
    %737 = vmatpush1.msra.mxu0 0.0
    %738 = vmatprep.subr.mxu0 0.0
    %739 = vmatpush1.msra.mxu0 0.0
    %740 = vmatprep.mubr.f32.mxu0 0.0
    %741 = vmatmul.mubr.f32.gmra.mrb[0].mxu0 %v651
    %v742 = vpop.f32.mrb[0].mxu0
    %v743 = vadd.f32 %v675, %v742
    %v744 = vpop.f32.mrb[0].mxu0
    %745 = vmatprep.mubr.f32.mxu0 0.0
    %746 = vmatmul.mubr.f32.gmra.mrb[0].mxu0 %v652
    %v747 = vpop.f32.mrb[0].mxu0
    %v748 = vadd.f32 %v675, %v747
    %v749 = vpop.f32.mrb[0].mxu0
    %750 = vdwg.mxu0
    %v751 = vadd.f32 %v743, %v748
    %v752 = vrot.slane %v751, 4
    %v753 = vadd.f32 %v751, %v752
    %v754 = vrot.slane %v753, 2
    %v755 = vadd.f32 %v753, %v754
    %v756 = vrot.slane %v755, 1
    %v757 = vadd.f32 %v755, %v756
    %v758 = vmul.f32 %v757, 0.0625
    %v759 = vmul.f32 %v743, %v743
    %v760 = vmul.f32 %v748, %v748
    %v761 = vadd.f32 %v759, %v760
    %v762 = vrot.slane %v761, 4
    %v763 = vadd.f32 %v761, %v762
    %v764 = vrot.slane %v763, 2
    %v765 = vadd.f32 %v763, %v764
    %v766 = vrot.slane %v765, 1
    %v767 = vadd.f32 %v765, %v766
    %v768 = vmul.f32 %v767, 0.0625
    %v769 = vmul.f32 %v758, %v758
    %v770 = vsub.f32 %v768, %v769
    %v771 = vmax.f32 %v770, 0.0
    %v772 = vadd.f32 %v771, 1e-05
    %v773 = vrsqrt.pop %v772
    %v774 = vmul.f32 %v671, %v773
    %v775 = vmul.f32 %v758, %v774
    %v777 = vrot.slane %v775, 7
    %v779 = vsub.f32 %v671, %v777
    %v780 = vlaneseq
    %v781 = vshrl.u32 %v780, 7
    %v782 = vsub.s32 1, %v781
    %v783 = vrot.slane %v774, %v782
    %v784 = vmul.f32 %v743, %v783
    %v785 = vmul.f32 %v748, %v783
    %v786 = vlaneseq
    %v787 = vshrl.u32 %v786, 7
    %v788 = vsub.s32 2, %v787
    %v789 = vrot.slane %v779, %v788
    %v790 = vadd.f32 %v784, %v789
    %v791 = vadd.f32 %v785, %v789
    %v792 = vmax.f32 %v790, 0.0
    %v793 = vmax.f32 %v791, 0.0
    %s794 = scalar_lea.vmem [#allocation2], 640
    %v795 = vld [vmem:[%s794] sm:$0xff]
    %v796 = vld [vmem:[%s794 + $0x8] sm:$0xff]
    %v797 = vld [vmem:[%s794 + $0x10] sm:$0xff]
    %v798 = vld [vmem:[%s794 + $0x18] sm:$0xff]
    %v799 = vld [vmem:[%s794 + $0x20] sm:$0xff]
    %v800 = vld [vmem:[%s794 + $0x28] sm:$0xff]
    %v801 = vld [vmem:[%s794 + $0x30] sm:$0xff]
    %v802 = vld [vmem:[%s794 + $0x38] sm:$0xff]
    %v803 = vld [vmem:[%s794 + $0x40] sm:$0xff]
    %v804 = vld [vmem:[%s794 + $0x48] sm:$0xff]
    %v805 = vld [vmem:[%s794 + $0x50] sm:$0xff]
    %v806 = vld [vmem:[%s794 + $0x58] sm:$0xff]
    %v807 = vld [vmem:[%s794 + $0x60] sm:$0xff]
    %v808 = vld [vmem:[%s794 + $0x68] sm:$0xff]
    %v809 = vld [vmem:[%s794 + $0x70] sm:$0xff]
    %v810 = vld [vmem:[%s794 + $0x78] sm:$0xff]
    %s811 = scalar_lea.vmem [#allocation6], 40
    %v812 = vld [vmem:[%s811] sm:$0xff]
    %v813 = vlaneseq
    %v814 = vshrl.u32 %v813, 7
    %v815 = vsub.s32 0, %v814
    %v816 = vrot.slane %v812, %v815
    %817 = vmatprep.subr.mxu0 0.0
    %818 = vmatpush1.msra.mxu0 %v795
    %819 = vmatprep.subr.mxu0 0.0
    %820 = vmatpush1.msra.mxu0 %v796
    %821 = vmatprep.subr.mxu0 0.0
    %822 = vmatpush1.msra.mxu0 %v797
    %823 = vmatprep.subr.mxu0 0.0
    %824 = vmatpush1.msra.mxu0 %v798
    %825 = vmatprep.subr.mxu0 0.0
    %826 = vmatpush1.msra.mxu0 %v799
    %827 = vmatprep.subr.mxu0 0.0
    %828 = vmatpush1.msra.mxu0 %v800
    %829 = vmatprep.subr.mxu0 0.0
    %830 = vmatpush1.msra.mxu0 %v801
    %831 = vmatprep.subr.mxu0 0.0
    %832 = vmatpush1.msra.mxu0 %v802
    %833 = vmatprep.subr.mxu0 0.0
    %834 = vmatpush1.msra.mxu0 %v803
    %835 = vmatprep.subr.mxu0 0.0
    %836 = vmatpush1.msra.mxu0 %v804
    %837 = vmatprep.subr.mxu0 0.0
    %838 = vmatpush1.msra.mxu0 %v805
    %839 = vmatprep.subr.mxu0 0.0
    %840 = vmatpush1.msra.mxu0 %v806
    %841 = vmatprep.subr.mxu0 0.0
    %842 = vmatpush1.msra.mxu0 %v807
    %843 = vmatprep.subr.mxu0 0.0
    %844 = vmatpush1.msra.mxu0 %v808
    %845 = vmatprep.subr.mxu0 0.0
    %846 = vmatpush1.msra.mxu0 %v809
    %847 = vmatprep.subr.mxu0 0.0
    %848 = vmatpush1.msra.mxu0 %v810
    %849 = vmatprep.subr.mxu0 0.0
    %850 = vmatpush1.msra.mxu0 0.0
    %851 = vmatprep.subr.mxu0 0.0
    %852 = vmatpush1.msra.mxu0 0.0
    %853 = vmatprep.subr.mxu0 0.0
    %854 = vmatpush1.msra.mxu0 0.0
    %855 = vmatprep.subr.mxu0 0.0
    %856 = vmatpush1.msra.mxu0 0.0
    %857 = vmatprep.subr.mxu0 0.0
    %858 = vmatpush1.msra.mxu0 0.0
    %859 = vmatprep.subr.mxu0 0.0
    %860 = vmatpush1.msra.mxu0 0.0
    %861 = vmatprep.subr.mxu0 0.0
    %862 = vmatpush1.msra.mxu0 0.0
    %863 = vmatprep.subr.mxu0 0.0
    %864 = vmatpush1.msra.mxu0 0.0
    %865 = vmatprep.subr.mxu0 0.0
    %866 = vmatpush1.msra.mxu0 0.0
    %867 = vmatprep.subr.mxu0 0.0
    %868 = vmatpush1.msra.mxu0 0.0
    %869 = vmatprep.subr.mxu0 0.0
    %870 = vmatpush1.msra.mxu0 0.0
    %871 = vmatprep.subr.mxu0 0.0
    %872 = vmatpush1.msra.mxu0 0.0
    %873 = vmatprep.subr.mxu0 0.0
    %874 = vmatpush1.msra.mxu0 0.0
    %875 = vmatprep.subr.mxu0 0.0
    %876 = vmatpush1.msra.mxu0 0.0
    %877 = vmatprep.subr.mxu0 0.0
    %878 = vmatpush1.msra.mxu0 0.0
    %879 = vmatprep.subr.mxu0 0.0
    %880 = vmatpush1.msra.mxu0 0.0
    %881 = vmatprep.mubr.f32.mxu0 0.0
    %882 = vmatmul.mubr.f32.gmra.mrb[0].mxu0 %v792
    %v883 = vpop.f32.mrb[0].mxu0
    %v884 = vadd.f32 %v816, %v883
    %v885 = vpop.f32.mrb[0].mxu0
    %886 = vmatprep.mubr.f32.mxu0 0.0
    %887 = vmatmul.mubr.f32.gmra.mrb[0].mxu0 %v793
    %v888 = vpop.f32.mrb[0].mxu0
    %v889 = vadd.f32 %v816, %v888
    %v890 = vpop.f32.mrb[0].mxu0
    %891 = vdwg.mxu0
    %v892 = vadd.f32 %v884, %v889
    %v893 = vrot.slane %v892, 4
    %v894 = vadd.f32 %v892, %v893
    %v895 = vrot.slane %v894, 2
    %v896 = vadd.f32 %v894, %v895
    %v897 = vrot.slane %v896, 1
    %v898 = vadd.f32 %v896, %v897
    %v899 = vmul.f32 %v898, 0.0625
    %v900 = vmul.f32 %v884, %v884
    %v901 = vmul.f32 %v889, %v889
    %v902 = vadd.f32 %v900, %v901
    %v903 = vrot.slane %v902, 4
    %v904 = vadd.f32 %v902, %v903
    %v905 = vrot.slane %v904, 2
    %v906 = vadd.f32 %v904, %v905
    %v907 = vrot.slane %v906, 1
    %v908 = vadd.f32 %v906, %v907
    %v909 = vmul.f32 %v908, 0.0625
    %v910 = vmul.f32 %v899, %v899
    %v911 = vsub.f32 %v909, %v910
    %v912 = vmax.f32 %v911, 0.0
    %v913 = vadd.f32 %v912, 1e-05
    %v914 = vrsqrt.pop %v913
    %v915 = vmul.f32 %v812, %v914
    %v916 = vmul.f32 %v899, %v915
    %v918 = vrot.slane %v916, 7
    %v920 = vsub.f32 %v812, %v918
    %v921 = vlaneseq
    %v922 = vshrl.u32 %v921, 7
    %v923 = vsub.s32 1, %v922
    %v924 = vrot.slane %v915, %v923
    %v925 = vmul.f32 %v884, %v924
    %v926 = vmul.f32 %v889, %v924
    %v927 = vlaneseq
    %v928 = vshrl.u32 %v927, 7
    %v929 = vsub.s32 2, %v928
    %v930 = vrot.slane %v920, %v929
    %v931 = vadd.f32 %v925, %v930
    %v932 = vadd.f32 %v926, %v930
    %v933 = vmax.f32 %v931, 0.0
    %v934 = vmax.f32 %v932, 0.0
    %s935 = scalar_lea.vmem [#allocation2], 768
    %v936 = vld [vmem:[%s935] sm:$0xff]
    %v937 = vld [vmem:[%s935 + $0x8] sm:$0xff]
    %v938 = vld [vmem:[%s935 + $0x10] sm:$0xff]
    %v939 = vld [vmem:[%s935 + $0x18] sm:$0xff]
    %v940 = vld [vmem:[%s935 + $0x20] sm:$0xff]
    %v941 = vld [vmem:[%s935 + $0x28] sm:$0xff]
    %v942 = vld [vmem:[%s935 + $0x30] sm:$0xff]
    %v943 = vld [vmem:[%s935 + $0x38] sm:$0xff]
    %v944 = vld [vmem:[%s935 + $0x40] sm:$0xff]
    %v945 = vld [vmem:[%s935 + $0x48] sm:$0xff]
    %v946 = vld [vmem:[%s935 + $0x50] sm:$0xff]
    %v947 = vld [vmem:[%s935 + $0x58] sm:$0xff]
    %v948 = vld [vmem:[%s935 + $0x60] sm:$0xff]
    %v949 = vld [vmem:[%s935 + $0x68] sm:$0xff]
    %v950 = vld [vmem:[%s935 + $0x70] sm:$0xff]
    %v951 = vld [vmem:[%s935 + $0x78] sm:$0xff]
    %s952 = scalar_lea.vmem [#allocation6], 48
    %v953 = vld [vmem:[%s952] sm:$0xff]
    %v954 = vlaneseq
    %v955 = vshrl.u32 %v954, 7
    %v956 = vsub.s32 0, %v955
    %v957 = vrot.slane %v953, %v956
    %958 = vmatprep.subr.mxu0 0.0
    %959 = vmatpush1.msra.mxu0 %v936
    %960 = vmatprep.subr.mxu0 0.0
    %961 = vmatpush1.msra.mxu0 %v937
    %962 = vmatprep.subr.mxu0 0.0
    %963 = vmatpush1.msra.mxu0 %v938
    %964 = vmatprep.subr.mxu0 0.0
    %965 = vmatpush1.msra.mxu0 %v939
    %966 = vmatprep.subr.mxu0 0.0
    %967 = vmatpush1.msra.mxu0 %v940
    %968 = vmatprep.subr.mxu0 0.0
    %969 = vmatpush1.msra.mxu0 %v941
    %970 = vmatprep.subr.mxu0 0.0
    %971 = vmatpush1.msra.mxu0 %v942
    %972 = vmatprep.subr.mxu0 0.0
    %973 = vmatpush1.msra.mxu0 %v943
    %974 = vmatprep.subr.mxu0 0.0
    %975 = vmatpush1.msra.mxu0 %v944
    %976 = vmatprep.subr.mxu0 0.0
    %977 = vmatpush1.msra.mxu0 %v945
    %978 = vmatprep.subr.mxu0 0.0
    %979 = vmatpush1.msra.mxu0 %v946
    %980 = vmatprep.subr.mxu0 0.0
    %981 = vmatpush1.msra.mxu0 %v947
    %982 = vmatprep.subr.mxu0 0.0
    %983 = vmatpush1.msra.mxu0 %v948
    %984 = vmatprep.subr.mxu0 0.0
    %985 = vmatpush1.msra.mxu0 %v949
    %986 = vmatprep.subr.mxu0 0.0
    %987 = vmatpush1.msra.mxu0 %v950
    %988 = vmatprep.subr.mxu0 0.0
    %989 = vmatpush1.msra.mxu0 %v951
    %990 = vmatprep.subr.mxu0 0.0
    %991 = vmatpush1.msra.mxu0 0.0
    %992 = vmatprep.subr.mxu0 0.0
    %993 = vmatpush1.msra.mxu0 0.0
    %994 = vmatprep.subr.mxu0 0.0
    %995 = vmatpush1.msra.mxu0 0.0
    %996 = vmatprep.subr.mxu0 0.0
    %997 = vmatpush1.msra.mxu0 0.0
    %998 = vmatprep.subr.mxu0 0.0
    %999 = vmatpush1.msra.mxu0 0.0
    %1000 = vmatprep.subr.mxu0 0.0
    %1001 = vmatpush1.msra.mxu0 0.0
    %1002 = vmatprep.subr.mxu0 0.0
    %1003 = vmatpush1.msra.mxu0 0.0
    %1004 = vmatprep.subr.mxu0 0.0
    %1005 = vmatpush1.msra.mxu0 0.0
    %1006 = vmatprep.subr.mxu0 0.0
    %1007 = vmatpush1.msra.mxu0 0.0
    %1008 = vmatprep.subr.mxu0 0.0
    %1009 = vmatpush1.msra.mxu0 0.0
    %1010 = vmatprep.subr.mxu0 0.0
    %1011 = vmatpush1.msra.mxu0 0.0
    %1012 = vmatprep.subr.mxu0 0.0
    %1013 = vmatpush1.msra.mxu0 0.0
    %1014 = vmatprep.subr.mxu0 0.0
    %1015 = vmatpush1.msra.mxu0 0.0
    %1016 = vmatprep.subr.mxu0 0.0
    %1017 = vmatpush1.msra.mxu0 0.0
    %1018 = vmatprep.subr.mxu0 0.0
    %1019 = vmatpush1.msra.mxu0 0.0
    %1020 = vmatprep.subr.mxu0 0.0
    %1021 = vmatpush1.msra.mxu0 0.0
    %1022 = vmatprep.mubr.f32.mxu0 0.0
    %1023 = vmatmul.mubr.f32.gmra.mrb[0].mxu0 %v933
    %v1024 = vpop.f32.mrb[0].mxu0
    %v1025 = vadd.f32 %v957, %v1024
    %v1026 = vpop.f32.mrb[0].mxu0
    %1027 = vmatprep.mubr.f32.mxu0 0.0
    %1028 = vmatmul.mubr.f32.gmra.mrb[0].mxu0 %v934
    %v1029 = vpop.f32.mrb[0].mxu0
    %v1030 = vadd.f32 %v957, %v1029
    %v1031 = vpop.f32.mrb[0].mxu0
    %1032 = vdwg.mxu0
    %v1033 = vadd.f32 %v1025, %v1030
    %v1034 = vrot.slane %v1033, 4
    %v1035 = vadd.f32 %v1033, %v1034
    %v1036 = vrot.slane %v1035, 2
    %v1037 = vadd.f32 %v1035, %v1036
    %v1038 = vrot.slane %v1037, 1
    %v1039 = vadd.f32 %v1037, %v1038
    %v1040 = vmul.f32 %v1039, 0.0625
    %v1041 = vmul.f32 %v1025, %v1025
    %v1042 = vmul.f32 %v1030, %v1030
    %v1043 = vadd.f32 %v1041, %v1042
    %v1044 = vrot.slane %v1043, 4
    %v1045 = vadd.f32 %v1043, %v1044
    %v1046 = vrot.slane %v1045, 2
    %v1047 = vadd.f32 %v1045, %v1046
    %v1048 = vrot.slane %v1047, 1
    %v1049 = vadd.f32 %v1047, %v1048
    %v1050 = vmul.f32 %v1049, 0.0625
    %v1051 = vmul.f32 %v1040, %v1040
    %v1052 = vsub.f32 %v1050, %v1051
    %v1053 = vmax.f32 %v1052, 0.0
    %v1054 = vadd.f32 %v1053, 1e-05
    %v1055 = vrsqrt.pop %v1054
    %v1056 = vmul.f32 %v953, %v1055
    %v1057 = vmul.f32 %v1040, %v1056
    %v1059 = vrot.slane %v1057, 7
    %v1061 = vsub.f32 %v953, %v1059
    %v1062 = vlaneseq
    %v1063 = vshrl.u32 %v1062, 7
    %v1064 = vsub.s32 1, %v1063
    %v1065 = vrot.slane %v1056, %v1064
    %v1066 = vmul.f32 %v1025, %v1065
    %v1067 = vmul.f32 %v1030, %v1065
    %v1068 = vlaneseq
    %v1069 = vshrl.u32 %v1068, 7
    %v1070 = vsub.s32 2, %v1069
    %v1071 = vrot.slane %v1061, %v1070
    %v1072 = vadd.f32 %v1066, %v1071
    %v1073 = vadd.f32 %v1067, %v1071
    %v1074 = vmax.f32 %v1072, 0.0
    %v1075 = vmax.f32 %v1073, 0.0
    %s1076 = scalar_lea.vmem [#allocation2], 896
    %v1077 = vld [vmem:[%s1076] sm:$0xff]
    %v1078 = vld [vmem:[%s1076 + $0x8] sm:$0xff]
    %v1079 = vld [vmem:[%s1076 + $0x10] sm:$0xff]
    %v1080 = vld [vmem:[%s1076 + $0x18] sm:$0xff]
    %v1081 = vld [vmem:[%s1076 + $0x20] sm:$0xff]
    %v1082 = vld [vmem:[%s1076 + $0x28] sm:$0xff]
    %v1083 = vld [vmem:[%s1076 + $0x30] sm:$0xff]
    %v1084 = vld [vmem:[%s1076 + $0x38] sm:$0xff]
    %v1085 = vld [vmem:[%s1076 + $0x40] sm:$0xff]
    %v1086 = vld [vmem:[%s1076 + $0x48] sm:$0xff]
    %v1087 = vld [vmem:[%s1076 + $0x50] sm:$0xff]
    %v1088 = vld [vmem:[%s1076 + $0x58] sm:$0xff]
    %v1089 = vld [vmem:[%s1076 + $0x60] sm:$0xff]
    %v1090 = vld [vmem:[%s1076 + $0x68] sm:$0xff]
    %v1091 = vld [vmem:[%s1076 + $0x70] sm:$0xff]
    %v1092 = vld [vmem:[%s1076 + $0x78] sm:$0xff]
    %v1093 = vld [vmem:[#allocation4] sm:$0xff]
    %v1094 = vld [vmem:[#allocation4 + $0x8] sm:$0xff]
    %v1095 = vld [vmem:[#allocation4 + $0x10] sm:$0xff]
    %v1096 = vld [vmem:[#allocation4 + $0x18] sm:$0xff]
    %v1097 = vld [vmem:[#allocation4 + $0x20] sm:$0xff]
    %v1098 = vld [vmem:[#allocation4 + $0x28] sm:$0xff]
    %v1099 = vld [vmem:[#allocation4 + $0x30] sm:$0xff]
    %v1100 = vld [vmem:[#allocation4 + $0x38] sm:$0xff]
    %v1101 = vld [vmem:[#allocation4 + $0x40] sm:$0xff]
    %v1102 = vld [vmem:[#allocation4 + $0x48] sm:$0xff]
    %v1103 = vld [vmem:[#allocation4 + $0x50] sm:$0xff]
    %v1104 = vld [vmem:[#allocation4 + $0x58] sm:$0xff]
    %v1105 = vld [vmem:[#allocation4 + $0x60] sm:$0xff]
    %v1106 = vld [vmem:[#allocation4 + $0x68] sm:$0xff]
    %v1107 = vld [vmem:[#allocation4 + $0x70] sm:$0xff]
    %v1108 = vld [vmem:[#allocation4 + $0x78] sm:$0xff]
    %1109 = vmatprep.subr.mxu0 0.0
    %1110 = vmatpush1.msra.mxu0 %v1093
    %1111 = vmatprep.subr.mxu0 0.0
    %1112 = vmatpush1.msra.mxu0 %v1094
    %1113 = vmatprep.subr.mxu0 0.0
    %1114 = vmatpush1.msra.mxu0 %v1095
    %1115 = vmatprep.subr.mxu0 0.0
    %1116 = vmatpush1.msra.mxu0 %v1096
    %1117 = vmatprep.subr.mxu0 0.0
    %1118 = vmatpush1.msra.mxu0 %v1097
    %1119 = vmatprep.subr.mxu0 0.0
    %1120 = vmatpush1.msra.mxu0 %v1098
    %1121 = vmatprep.subr.mxu0 0.0
    %1122 = vmatpush1.msra.mxu0 %v1099
    %1123 = vmatprep.subr.mxu0 0.0
    %1124 = vmatpush1.msra.mxu0 %v1100
    %1125 = vmatprep.subr.mxu0 0.0
    %1126 = vmatpush1.msra.mxu0 %v1101
    %1127 = vmatprep.subr.mxu0 0.0
    %1128 = vmatpush1.msra.mxu0 %v1102
    %1129 = vmatprep.subr.mxu0 0.0
    %1130 = vmatpush1.msra.mxu0 %v1103
    %1131 = vmatprep.subr.mxu0 0.0
    %1132 = vmatpush1.msra.mxu0 %v1104
    %1133 = vmatprep.subr.mxu0 0.0
    %1134 = vmatpush1.msra.mxu0 %v1105
    %1135 = vmatprep.subr.mxu0 0.0
    %1136 = vmatpush1.msra.mxu0 %v1106
    %1137 = vmatprep.subr.mxu0 0.0
    %1138 = vmatpush1.msra.mxu0 %v1107
    %1139 = vmatprep.subr.mxu0 0.0
    %1140 = vmatpush1.msra.mxu0 %v1108
    %1141 = vmatprep.subr.mxu0 0.0
    %1142 = vmatpush1.msra.mxu0 0.0
    %1143 = vmatprep.subr.mxu0 0.0
    %1144 = vmatpush1.msra.mxu0 0.0
    %1145 = vmatprep.subr.mxu0 0.0
    %1146 = vmatpush1.msra.mxu0 0.0
    %1147 = vmatprep.subr.mxu0 0.0
    %1148 = vmatpush1.msra.mxu0 0.0
    %1149 = vmatprep.subr.mxu0 0.0
    %1150 = vmatpush1.msra.mxu0 0.0
    %1151 = vmatprep.subr.mxu0 0.0
    %1152 = vmatpush1.msra.mxu0 0.0
    %1153 = vmatprep.subr.mxu0 0.0
    %1154 = vmatpush1.msra.mxu0 0.0
    %1155 = vmatprep.subr.mxu0 0.0
    %1156 = vmatpush1.msra.mxu0 0.0
    %1157 = vmatprep.subr.mxu0 0.0
    %1158 = vmatpush1.msra.mxu0 0.0
    %1159 = vmatprep.subr.mxu0 0.0
    %1160 = vmatpush1.msra.mxu0 0.0
    %1161 = vmatprep.subr.mxu0 0.0
    %1162 = vmatpush1.msra.mxu0 0.0
    %1163 = vmatprep.subr.mxu0 0.0
    %1164 = vmatpush1.msra.mxu0 0.0
    %1165 = vmatprep.subr.mxu0 0.0
    %1166 = vmatpush1.msra.mxu0 0.0
    %1167 = vmatprep.subr.mxu0 0.0
    %1168 = vmatpush1.msra.mxu0 0.0
    %1169 = vmatprep.subr.mxu0 0.0
    %1170 = vmatpush1.msra.mxu0 0.0
    %1171 = vmatprep.subr.mxu0 0.0
    %1172 = vmatpush1.msra.mxu0 0.0
    %1173 = vmatprep.mubr.f32.mxu0 0.0
    %1174 = vmatmul.mubr.f32.gmra.mrb[0].mxu0 %v89
    %v1175 = vpop.f32.mrb[0].mxu0
    %v1176 = vadd.f32 0.0, %v1175
    %v1177 = vpop.f32.mrb[0].mxu0
    %1178 = vmatprep.mubr.f32.mxu0 0.0
    %1179 = vmatmul.mubr.f32.gmra.mrb[0].mxu0 %v90
    %v1180 = vpop.f32.mrb[0].mxu0
    %v1181 = vadd.f32 0.0, %v1180
    %v1182 = vpop.f32.mrb[0].mxu0
    %1183 = vdwg.mxu0
    %1184 = vmatprep.subr.mxu0 0.0
    %1185 = vmatpush1.msra.mxu0 %v1077
    %1186 = vmatprep.subr.mxu0 0.0
    %1187 = vmatpush1.msra.mxu0 %v1078
    %1188 = vmatprep.subr.mxu0 0.0
    %1189 = vmatpush1.msra.mxu0 %v1079
    %1190 = vmatprep.subr.mxu0 0.0
    %1191 = vmatpush1.msra.mxu0 %v1080
    %1192 = vmatprep.subr.mxu0 0.0
    %1193 = vmatpush1.msra.mxu0 %v1081
    %1194 = vmatprep.subr.mxu0 0.0
    %1195 = vmatpush1.msra.mxu0 %v1082
    %1196 = vmatprep.subr.mxu0 0.0
    %1197 = vmatpush1.msra.mxu0 %v1083
    %1198 = vmatprep.subr.mxu0 0.0
    %1199 = vmatpush1.msra.mxu0 %v1084
    %1200 = vmatprep.subr.mxu0 0.0
    %1201 = vmatpush1.msra.mxu0 %v1085
    %1202 = vmatprep.subr.mxu0 0.0
    %1203 = vmatpush1.msra.mxu0 %v1086
    %1204 = vmatprep.subr.mxu0 0.0
    %1205 = vmatpush1.msra.mxu0 %v1087
    %1206 = vmatprep.subr.mxu0 0.0
    %1207 = vmatpush1.msra.mxu0 %v1088
    %1208 = vmatprep.subr.mxu0 0.0
    %1209 = vmatpush1.msra.mxu0 %v1089
    %1210 = vmatprep.subr.mxu0 0.0
    %1211 = vmatpush1.msra.mxu0 %v1090
    %1212 = vmatprep.subr.mxu0 0.0
    %1213 = vmatpush1.msra.mxu0 %v1091
    %1214 = vmatprep.subr.mxu0 0.0
    %1215 = vmatpush1.msra.mxu0 %v1092
    %1216 = vmatprep.subr.mxu0 0.0
    %1217 = vmatpush1.msra.mxu0 0.0
    %1218 = vmatprep.subr.mxu0 0.0
    %1219 = vmatpush1.msra.mxu0 0.0
    %1220 = vmatprep.subr.mxu0 0.0
    %1221 = vmatpush1.msra.mxu0 0.0
    %1222 = vmatprep.subr.mxu0 0.0
    %1223 = vmatpush1.msra.mxu0 0.0
    %1224 = vmatprep.subr.mxu0 0.0
    %1225 = vmatpush1.msra.mxu0 0.0
    %1226 = vmatprep.subr.mxu0 0.0
    %1227 = vmatpush1.msra.mxu0 0.0
    %1228 = vmatprep.subr.mxu0 0.0
    %1229 = vmatpush1.msra.mxu0 0.0
    %1230 = vmatprep.subr.mxu0 0.0
    %1231 = vmatpush1.msra.mxu0 0.0
    %1232 = vmatprep.subr.mxu0 0.0
    %1233 = vmatpush1.msra.mxu0 0.0
    %1234 = vmatprep.subr.mxu0 0.0
    %1235 = vmatpush1.msra.mxu0 0.0
    %1236 = vmatprep.subr.mxu0 0.0
    %1237 = vmatpush1.msra.mxu0 0.0
    %1238 = vmatprep.subr.mxu0 0.0
    %1239 = vmatpush1.msra.mxu0 0.0
    %1240 = vmatprep.subr.mxu0 0.0
    %1241 = vmatpush1.msra.mxu0 0.0
    %1242 = vmatprep.subr.mxu0 0.0
    %1243 = vmatpush1.msra.mxu0 0.0
    %1244 = vmatprep.subr.mxu0 0.0
    %1245 = vmatpush1.msra.mxu0 0.0
    %1246 = vmatprep.subr.mxu0 0.0
    %1247 = vmatpush1.msra.mxu0 0.0
    %1248 = vmatprep.mubr.f32.mxu0 0.0
    %1249 = vmatmul.mubr.f32.gmra.mrb[0].mxu0 %v1074
    %v1250 = vpop.f32.mrb[0].mxu0
    %v1251 = vadd.f32 %v1176, %v1250
    %v1252 = vpop.f32.mrb[0].mxu0
    %1253 = vmatprep.mubr.f32.mxu0 0.0
    %1254 = vmatmul.mubr.f32.gmra.mrb[0].mxu0 %v1075
    %v1255 = vpop.f32.mrb[0].mxu0
    %v1256 = vadd.f32 %v1181, %v1255
    %v1257 = vpop.f32.mrb[0].mxu0
    %1258 = vdwg.mxu0
    %s1259 = scalar_lea.vmem [#allocation6], 56
    %v1260 = vld [vmem:[%s1259] sm:$0xff]
    %v1261 = vlaneseq
    %v1262 = vshrl.u32 %v1261, 7
    %v1263 = vsub.s32 0, %v1262
    %v1264 = vrot.slane %v1260, %v1263
    %v1265 = vadd.f32 %v1251, %v1264
    %v1266 = vadd.f32 %v1256, %v1264
    %v1267 = vadd.f32 %v1265, %v1266
    %v1268 = vrot.slane %v1267, 4
    %v1269 = vadd.f32 %v1267, %v1268
    %v1270 = vrot.slane %v1269, 2
    %v1271 = vadd.f32 %v1269, %v1270
    %v1272 = vrot.slane %v1271, 1
    %v1273 = vadd.f32 %v1271, %v1272
    %v1274 = vmul.f32 %v1273, 0.0625
    %v1275 = vmul.f32 %v1265, %v1265
    %v1276 = vmul.f32 %v1266, %v1266
    %v1277 = vadd.f32 %v1275, %v1276
    %v1278 = vrot.slane %v1277, 4
    %v1279 = vadd.f32 %v1277, %v1278
    %v1280 = vrot.slane %v1279, 2
    %v1281 = vadd.f32 %v1279, %v1280
    %v1282 = vrot.slane %v1281, 1
    %v1283 = vadd.f32 %v1281, %v1282
    %v1284 = vmul.f32 %v1283, 0.0625
    %v1285 = vmul.f32 %v1274, %v1274
    %v1286 = vsub.f32 %v1284, %v1285
    %v1287 = vmax.f32 %v1286, 0.0
    %v1288 = vadd.f32 %v1287, 1e-05
    %v1289 = vrsqrt.pop %v1288
    %v1290 = vmul.f32 %v1260, %v1289
    %v1291 = vmul.f32 %v1274, %v1290
    %v1293 = vrot.slane %v1291, 7
    %v1295 = vsub.f32 %v1260, %v1293
    %v1296 = vlaneseq
    %v1297 = vshrl.u32 %v1296, 7
    %v1298 = vsub.s32 1, %v1297
    %v1299 = vrot.slane %v1290, %v1298
    %v1300 = vmul.f32 %v1265, %v1299
    %v1301 = vmul.f32 %v1266, %v1299
    %v1302 = vlaneseq
    %v1303 = vshrl.u32 %v1302, 7
    %v1304 = vsub.s32 2, %v1303
    %v1305 = vrot.slane %v1295, %v1304
    %v1306 = vadd.f32 %v1300, %v1305
    %v1307 = vadd.f32 %v1301, %v1305
    %v1308 = vmax.f32 %v1306, 0.0
    %v1309 = vmax.f32 %v1307, 0.0
    %s1310 = scalar_lea.vmem [#allocation2], 1024
    %v1311 = vld [vmem:[%s1310] sm:$0xff]
    %v1312 = vld [vmem:[%s1310 + $0x8] sm:$0xff]
    %v1313 = vld [vmem:[%s1310 + $0x10] sm:$0xff]
    %v1314 = vld [vmem:[%s1310 + $0x18] sm:$0xff]
    %v1315 = vld [vmem:[%s1310 + $0x20] sm:$0xff]
    %v1316 = vld [vmem:[%s1310 + $0x28] sm:$0xff]
    %v1317 = vld [vmem:[%s1310 + $0x30] sm:$0xff]
    %v1318 = vld [vmem:[%s1310 + $0x38] sm:$0xff]
    %v1319 = vld [vmem:[%s1310 + $0x40] sm:$0xff]
    %v1320 = vld [vmem:[%s1310 + $0x48] sm:$0xff]
    %v1321 = vld [vmem:[%s1310 + $0x50] sm:$0xff]
    %v1322 = vld [vmem:[%s1310 + $0x58] sm:$0xff]
    %v1323 = vld [vmem:[%s1310 + $0x60] sm:$0xff]
    %v1324 = vld [vmem:[%s1310 + $0x68] sm:$0xff]
    %v1325 = vld [vmem:[%s1310 + $0x70] sm:$0xff]
    %v1326 = vld [vmem:[%s1310 + $0x78] sm:$0xff]
    %s1327 = scalar_lea.vmem [#allocation6], 64
    %v1328 = vld [vmem:[%s1327] sm:$0xff]
    %v1329 = vlaneseq
    %v1330 = vshrl.u32 %v1329, 7
    %v1331 = vsub.s32 0, %v1330
    %v1332 = vrot.slane %v1328, %v1331
    %1333 = vmatprep.subr.mxu0 0.0
    %1334 = vmatpush1.msra.mxu0 %v1311
    %1335 = vmatprep.subr.mxu0 0.0
    %1336 = vmatpush1.msra.mxu0 %v1312
    %1337 = vmatprep.subr.mxu0 0.0
    %1338 = vmatpush1.msra.mxu0 %v1313
    %1339 = vmatprep.subr.mxu0 0.0
    %1340 = vmatpush1.msra.mxu0 %v1314
    %1341 = vmatprep.subr.mxu0 0.0
    %1342 = vmatpush1.msra.mxu0 %v1315
    %1343 = vmatprep.subr.mxu0 0.0
    %1344 = vmatpush1.msra.mxu0 %v1316
    %1345 = vmatprep.subr.mxu0 0.0
    %1346 = vmatpush1.msra.mxu0 %v1317
    %1347 = vmatprep.subr.mxu0 0.0
    %1348 = vmatpush1.msra.mxu0 %v1318
    %1349 = vmatprep.subr.mxu0 0.0
    %1350 = vmatpush1.msra.mxu0 %v1319
    %1351 = vmatprep.subr.mxu0 0.0
    %1352 = vmatpush1.msra.mxu0 %v1320
    %1353 = vmatprep.subr.mxu0 0.0
    %1354 = vmatpush1.msra.mxu0 %v1321
    %1355 = vmatprep.subr.mxu0 0.0
    %1356 = vmatpush1.msra.mxu0 %v1322
    %1357 = vmatprep.subr.mxu0 0.0
    %1358 = vmatpush1.msra.mxu0 %v1323
    %1359 = vmatprep.subr.mxu0 0.0
    %1360 = vmatpush1.msra.mxu0 %v1324
    %1361 = vmatprep.subr.mxu0 0.0
    %1362 = vmatpush1.msra.mxu0 %v1325
    %1363 = vmatprep.subr.mxu0 0.0
    %1364 = vmatpush1.msra.mxu0 %v1326
    %1365 = vmatprep.subr.mxu0 0.0
    %1366 = vmatpush1.msra.mxu0 0.0
    %1367 = vmatprep.subr.mxu0 0.0
    %1368 = vmatpush1.msra.mxu0 0.0
    %1369 = vmatprep.subr.mxu0 0.0
    %1370 = vmatpush1.msra.mxu0 0.0
    %1371 = vmatprep.subr.mxu0 0.0
    %1372 = vmatpush1.msra.mxu0 0.0
    %1373 = vmatprep.subr.mxu0 0.0
    %1374 = vmatpush1.msra.mxu0 0.0
    %1375 = vmatprep.subr.mxu0 0.0
    %1376 = vmatpush1.msra.mxu0 0.0
    %1377 = vmatprep.subr.mxu0 0.0
    %1378 = vmatpush1.msra.mxu0 0.0
    %1379 = vmatprep.subr.mxu0 0.0
    %1380 = vmatpush1.msra.mxu0 0.0
    %1381 = vmatprep.subr.mxu0 0.0
    %1382 = vmatpush1.msra.mxu0 0.0
    %1383 = vmatprep.subr.mxu0 0.0
    %1384 = vmatpush1.msra.mxu0 0.0
    %1385 = vmatprep.subr.mxu0 0.0
    %1386 = vmatpush1.msra.mxu0 0.0
    %1387 = vmatprep.subr.mxu0 0.0
    %1388 = vmatpush1.msra.mxu0 0.0
    %1389 = vmatprep.subr.mxu0 0.0
    %1390 = vmatpush1.msra.mxu0 0.0
    %1391 = vmatprep.subr.mxu0 0.0
    %1392 = vmatpush1.msra.mxu0 0.0
    %1393 = vmatprep.subr.mxu0 0.0
    %1394 = vmatpush1.msra.mxu0 0.0
    %1395 = vmatprep.subr.mxu0 0.0
    %1396 = vmatpush1.msra.mxu0 0.0
    %1397 = vmatprep.mubr.f32.mxu0 0.0
    %1398 = vmatmul.mubr.f32.gmra.mrb[0].mxu0 %v1308
    %v1399 = vpop.f32.mrb[0].mxu0
    %v1400 = vadd.f32 %v1332, %v1399
    %v1401 = vpop.f32.mrb[0].mxu0
    %1402 = vmatprep.mubr.f32.mxu0 0.0
    %1403 = vmatmul.mubr.f32.gmra.mrb[0].mxu0 %v1309
    %v1404 = vpop.f32.mrb[0].mxu0
    %v1405 = vadd.f32 %v1332, %v1404
    %v1406 = vpop.f32.mrb[0].mxu0
    %1407 = vdwg.mxu0
    %v1408 = vadd.f32 %v1400, %v1405
    %v1409 = vrot.slane %v1408, 4
    %v1410 = vadd.f32 %v1408, %v1409
    %v1411 = vrot.slane %v1410, 2
    %v1412 = vadd.f32 %v1410, %v1411
    %v1413 = vrot.slane %v1412, 1
    %v1414 = vadd.f32 %v1412, %v1413
    %v1415 = vmul.f32 %v1414, 0.0625
    %v1416 = vmul.f32 %v1400, %v1400
    %v1417 = vmul.f32 %v1405, %v1405
    %v1418 = vadd.f32 %v1416, %v1417
    %v1419 = vrot.slane %v1418, 4
    %v1420 = vadd.f32 %v1418, %v1419
    %v1421 = vrot.slane %v1420, 2
    %v1422 = vadd.f32 %v1420, %v1421
    %v1423 = vrot.slane %v1422, 1
    %v1424 = vadd.f32 %v1422, %v1423
    %v1425 = vmul.f32 %v1424, 0.0625
    %v1426 = vmul.f32 %v1415, %v1415
    %v1427 = vsub.f32 %v1425, %v1426
    %v1428 = vmax.f32 %v1427, 0.0
    %v1429 = vadd.f32 %v1428, 1e-05
    %v1430 = vrsqrt.pop %v1429
    %v1431 = vmul.f32 %v1328, %v1430
    %v1432 = vmul.f32 %v1415, %v1431
    %v1434 = vrot.slane %v1432, 7
    %v1436 = vsub.f32 %v1328, %v1434
    %v1437 = vlaneseq
    %v1438 = vshrl.u32 %v1437, 7
    %v1439 = vsub.s32 1, %v1438
    %v1440 = vrot.slane %v1431, %v1439
    %v1441 = vmul.f32 %v1400, %v1440
    %v1442 = vmul.f32 %v1405, %v1440
    %v1443 = vlaneseq
    %v1444 = vshrl.u32 %v1443, 7
    %v1445 = vsub.s32 2, %v1444
    %v1446 = vrot.slane %v1436, %v1445
    %v1447 = vadd.f32 %v1441, %v1446
    %v1448 = vadd.f32 %v1442, %v1446
    %v1449 = vmax.f32 %v1447, 0.0
    %v1450 = vmax.f32 %v1448, 0.0
    %s1451 = scalar_lea.vmem [#allocation2], 1152
    %v1452 = vld [vmem:[%s1451] sm:$0xff]
    %v1453 = vld [vmem:[%s1451 + $0x8] sm:$0xff]
    %v1454 = vld [vmem:[%s1451 + $0x10] sm:$0xff]
    %v1455 = vld [vmem:[%s1451 + $0x18] sm:$0xff]
    %v1456 = vld [vmem:[%s1451 + $0x20] sm:$0xff]
    %v1457 = vld [vmem:[%s1451 + $0x28] sm:$0xff]
    %v1458 = vld [vmem:[%s1451 + $0x30] sm:$0xff]
    %v1459 = vld [vmem:[%s1451 + $0x38] sm:$0xff]
    %v1460 = vld [vmem:[%s1451 + $0x40] sm:$0xff]
    %v1461 = vld [vmem:[%s1451 + $0x48] sm:$0xff]
    %v1462 = vld [vmem:[%s1451 + $0x50] sm:$0xff]
    %v1463 = vld [vmem:[%s1451 + $0x58] sm:$0xff]
    %v1464 = vld [vmem:[%s1451 + $0x60] sm:$0xff]
    %v1465 = vld [vmem:[%s1451 + $0x68] sm:$0xff]
    %v1466 = vld [vmem:[%s1451 + $0x70] sm:$0xff]
    %v1467 = vld [vmem:[%s1451 + $0x78] sm:$0xff]
    %s1468 = scalar_lea.vmem [#allocation6], 72
    %v1469 = vld [vmem:[%s1468] sm:$0xff]
    %v1470 = vlaneseq
    %v1471 = vshrl.u32 %v1470, 7
    %v1472 = vsub.s32 0, %v1471
    %v1473 = vrot.slane %v1469, %v1472
    %1474 = vmatprep.subr.mxu0 0.0
    %1475 = vmatpush1.msra.mxu0 %v1452
    %1476 = vmatprep.subr.mxu0 0.0
    %1477 = vmatpush1.msra.mxu0 %v1453
    %1478 = vmatprep.subr.mxu0 0.0
    %1479 = vmatpush1.msra.mxu0 %v1454
    %1480 = vmatprep.subr.mxu0 0.0
    %1481 = vmatpush1.msra.mxu0 %v1455
    %1482 = vmatprep.subr.mxu0 0.0
    %1483 = vmatpush1.msra.mxu0 %v1456
    %1484 = vmatprep.subr.mxu0 0.0
    %1485 = vmatpush1.msra.mxu0 %v1457
    %1486 = vmatprep.subr.mxu0 0.0
    %1487 = vmatpush1.msra.mxu0 %v1458
    %1488 = vmatprep.subr.mxu0 0.0
    %1489 = vmatpush1.msra.mxu0 %v1459
    %1490 = vmatprep.subr.mxu0 0.0
    %1491 = vmatpush1.msra.mxu0 %v1460
    %1492 = vmatprep.subr.mxu0 0.0
    %1493 = vmatpush1.msra.mxu0 %v1461
    %1494 = vmatprep.subr.mxu0 0.0
    %1495 = vmatpush1.msra.mxu0 %v1462
    %1496 = vmatprep.subr.mxu0 0.0
    %1497 = vmatpush1.msra.mxu0 %v1463
    %1498 = vmatprep.subr.mxu0 0.0
    %1499 = vmatpush1.msra.mxu0 %v1464
    %1500 = vmatprep.subr.mxu0 0.0
    %1501 = vmatpush1.msra.mxu0 %v1465
    %1502 = vmatprep.subr.mxu0 0.0
    %1503 = vmatpush1.msra.mxu0 %v1466
    %1504 = vmatprep.subr.mxu0 0.0
    %1505 = vmatpush1.msra.mxu0 %v1467
    %1506 = vmatprep.subr.mxu0 0.0
    %1507 = vmatpush1.msra.mxu0 0.0
    %1508 = vmatprep.subr.mxu0 0.0
    %1509 = vmatpush1.msra.mxu0 0.0
    %1510 = vmatprep.subr.mxu0 0.0
    %1511 = vmatpush1.msra.mxu0 0.0
    %1512 = vmatprep.subr.mxu0 0.0
    %1513 = vmatpush1.msra.mxu0 0.0
    %1514 = vmatprep.subr.mxu0 0.0
    %1515 = vmatpush1.msra.mxu0 0.0
    %1516 = vmatprep.subr.mxu0 0.0
    %1517 = vmatpush1.msra.mxu0 0.0
    %1518 = vmatprep.subr.mxu0 0.0
    %1519 = vmatpush1.msra.mxu0 0.0
    %1520 = vmatprep.subr.mxu0 0.0
    %1521 = vmatpush1.msra.mxu0 0.0
    %1522 = vmatprep.subr.mxu0 0.0
    %1523 = vmatpush1.msra.mxu0 0.0
    %1524 = vmatprep.subr.mxu0 0.0
    %1525 = vmatpush1.msra.mxu0 0.0
    %1526 = vmatprep.subr.mxu0 0.0
    %1527 = vmatpush1.msra.mxu0 0.0
    %1528 = vmatprep.subr.mxu0 0.0
    %1529 = vmatpush1.msra.mxu0 0.0
    %1530 = vmatprep.subr.mxu0 0.0
    %1531 = vmatpush1.msra.mxu0 0.0
    %1532 = vmatprep.subr.mxu0 0.0
    %1533 = vmatpush1.msra.mxu0 0.0
    %1534 = vmatprep.subr.mxu0 0.0
    %1535 = vmatpush1.msra.mxu0 0.0
    %1536 = vmatprep.subr.mxu0 0.0
    %1537 = vmatpush1.msra.mxu0 0.0
    %1538 = vmatprep.mubr.f32.mxu0 0.0
    %1539 = vmatmul.mubr.f32.gmra.mrb[0].mxu0 %v1449
    %v1540 = vpop.f32.mrb[0].mxu0
    %v1541 = vadd.f32 %v1473, %v1540
    %v1542 = vpop.f32.mrb[0].mxu0
    %1543 = vmatprep.mubr.f32.mxu0 0.0
    %1544 = vmatmul.mubr.f32.gmra.mrb[0].mxu0 %v1450
    %v1545 = vpop.f32.mrb[0].mxu0
    %v1546 = vadd.f32 %v1473, %v1545
    %v1547 = vpop.f32.mrb[0].mxu0
    %1548 = vdwg.mxu0
    %v1549 = vadd.f32 %v1541, %v1546
    %v1550 = vrot.slane %v1549, 4
    %v1551 = vadd.f32 %v1549, %v1550
    %v1552 = vrot.slane %v1551, 2
    %v1553 = vadd.f32 %v1551, %v1552
    %v1554 = vrot.slane %v1553, 1
    %v1555 = vadd.f32 %v1553, %v1554
    %v1556 = vmul.f32 %v1555, 0.0625
    %v1557 = vmul.f32 %v1541, %v1541
    %v1558 = vmul.f32 %v1546, %v1546
    %v1559 = vadd.f32 %v1557, %v1558
    %v1560 = vrot.slane %v1559, 4
    %v1561 = vadd.f32 %v1559, %v1560
    %v1562 = vrot.slane %v1561, 2
    %v1563 = vadd.f32 %v1561, %v1562
    %v1564 = vrot.slane %v1563, 1
    %v1565 = vadd.f32 %v1563, %v1564
    %v1566 = vmul.f32 %v1565, 0.0625
    %v1567 = vmul.f32 %v1556, %v1556
    %v1568 = vsub.f32 %v1566, %v1567
    %v1569 = vmax.f32 %v1568, 0.0
    %v1570 = vadd.f32 %v1569, 1e-05
    %v1571 = vrsqrt.pop %v1570
    %v1572 = vmul.f32 %v1469, %v1571
    %v1573 = vmul.f32 %v1556, %v1572
    %v1575 = vrot.slane %v1573, 7
    %v1577 = vsub.f32 %v1469, %v1575
    %v1578 = vlaneseq
    %v1579 = vshrl.u32 %v1578, 7
    %v1580 = vsub.s32 1, %v1579
    %v1581 = vrot.slane %v1572, %v1580
    %v1582 = vmul.f32 %v1541, %v1581
    %v1583 = vmul.f32 %v1546, %v1581
    %v1584 = vlaneseq
    %v1585 = vshrl.u32 %v1584, 7
    %v1586 = vsub.s32 2, %v1585
    %v1587 = vrot.slane %v1577, %v1586
    %v1588 = vadd.f32 %v1582, %v1587
    %v1589 = vadd.f32 %v1583, %v1587
    %v1590 = vmax.f32 %v1588, 0.0
    %v1591 = vmax.f32 %v1589, 0.0
    %s1592 = scalar_lea.vmem [#allocation2], 1280
    %v1593 = vld [vmem:[%s1592] sm:$0xff]
    %v1594 = vld [vmem:[%s1592 + $0x8] sm:$0xff]
    %v1595 = vld [vmem:[%s1592 + $0x10] sm:$0xff]
    %v1596 = vld [vmem:[%s1592 + $0x18] sm:$0xff]
    %v1597 = vld [vmem:[%s1592 + $0x20] sm:$0xff]
    %v1598 = vld [vmem:[%s1592 + $0x28] sm:$0xff]
    %v1599 = vld [vmem:[%s1592 + $0x30] sm:$0xff]
    %v1600 = vld [vmem:[%s1592 + $0x38] sm:$0xff]
    %v1601 = vld [vmem:[%s1592 + $0x40] sm:$0xff]
    %v1602 = vld [vmem:[%s1592 + $0x48] sm:$0xff]
    %v1603 = vld [vmem:[%s1592 + $0x50] sm:$0xff]
    %v1604 = vld [vmem:[%s1592 + $0x58] sm:$0xff]
    %v1605 = vld [vmem:[%s1592 + $0x60] sm:$0xff]
    %v1606 = vld [vmem:[%s1592 + $0x68] sm:$0xff]
    %v1607 = vld [vmem:[%s1592 + $0x70] sm:$0xff]
    %v1608 = vld [vmem:[%s1592 + $0x78] sm:$0xff]
    %s1609 = scalar_lea.vmem [#allocation6], 80
    %v1610 = vld [vmem:[%s1609] sm:$0xff]
    %v1611 = vlaneseq
    %v1612 = vshrl.u32 %v1611, 7
    %v1613 = vsub.s32 0, %v1612
    %v1614 = vrot.slane %v1610, %v1613
    %1615 = vmatprep.subr.mxu0 0.0
    %1616 = vmatpush1.msra.mxu0 %v1593
    %1617 = vmatprep.subr.mxu0 0.0
    %1618 = vmatpush1.msra.mxu0 %v1594
    %1619 = vmatprep.subr.mxu0 0.0
    %1620 = vmatpush1.msra.mxu0 %v1595
    %1621 = vmatprep.subr.mxu0 0.0
    %1622 = vmatpush1.msra.mxu0 %v1596
    %1623 = vmatprep.subr.mxu0 0.0
    %1624 = vmatpush1.msra.mxu0 %v1597
    %1625 = vmatprep.subr.mxu0 0.0
    %1626 = vmatpush1.msra.mxu0 %v1598
    %1627 = vmatprep.subr.mxu0 0.0
    %1628 = vmatpush1.msra.mxu0 %v1599
    %1629 = vmatprep.subr.mxu0 0.0
    %1630 = vmatpush1.msra.mxu0 %v1600
    %1631 = vmatprep.subr.mxu0 0.0
    %1632 = vmatpush1.msra.mxu0 %v1601
    %1633 = vmatprep.subr.mxu0 0.0
    %1634 = vmatpush1.msra.mxu0 %v1602
    %1635 = vmatprep.subr.mxu0 0.0
    %1636 = vmatpush1.msra.mxu0 %v1603
    %1637 = vmatprep.subr.mxu0 0.0
    %1638 = vmatpush1.msra.mxu0 %v1604
    %1639 = vmatprep.subr.mxu0 0.0
    %1640 = vmatpush1.msra.mxu0 %v1605
    %1641 = vmatprep.subr.mxu0 0.0
    %1642 = vmatpush1.msra.mxu0 %v1606
    %1643 = vmatprep.subr.mxu0 0.0
    %1644 = vmatpush1.msra.mxu0 %v1607
    %1645 = vmatprep.subr.mxu0 0.0
    %1646 = vmatpush1.msra.mxu0 %v1608
    %1647 = vmatprep.subr.mxu0 0.0
    %1648 = vmatpush1.msra.mxu0 0.0
    %1649 = vmatprep.subr.mxu0 0.0
    %1650 = vmatpush1.msra.mxu0 0.0
    %1651 = vmatprep.subr.mxu0 0.0
    %1652 = vmatpush1.msra.mxu0 0.0
    %1653 = vmatprep.subr.mxu0 0.0
    %1654 = vmatpush1.msra.mxu0 0.0
    %1655 = vmatprep.subr.mxu0 0.0
    %1656 = vmatpush1.msra.mxu0 0.0
    %1657 = vmatprep.subr.mxu0 0.0
    %1658 = vmatpush1.msra.mxu0 0.0
    %1659 = vmatprep.subr.mxu0 0.0
    %1660 = vmatpush1.msra.mxu0 0.0
    %1661 = vmatprep.subr.mxu0 0.0
    %1662 = vmatpush1.msra.mxu0 0.0
    %1663 = vmatprep.subr.mxu0 0.0
    %1664 = vmatpush1.msra.mxu0 0.0
    %1665 = vmatprep.subr.mxu0 0.0
    %1666 = vmatpush1.msra.mxu0 0.0
    %1667 = vmatprep.subr.mxu0 0.0
    %1668 = vmatpush1.msra.mxu0 0.0
    %1669 = vmatprep.subr.mxu0 0.0
    %1670 = vmatpush1.msra.mxu0 0.0
    %1671 = vmatprep.subr.mxu0 0.0
    %1672 = vmatpush1.msra.mxu0 0.0
    %1673 = vmatprep.subr.mxu0 0.0
    %1674 = vmatpush1.msra.mxu0 0.0
    %1675 = vmatprep.subr.mxu0 0.0
    %1676 = vmatpush1.msra.mxu0 0.0
    %1677 = vmatprep.subr.mxu0 0.0
    %1678 = vmatpush1.msra.mxu0 0.0
    %1679 = vmatprep.mubr.f32.mxu0 0.0
    %1680 = vmatmul.mubr.f32.gmra.mrb[0].mxu0 %v1590
    %v1681 = vpop.f32.mrb[0].mxu0
    %v1682 = vadd.f32 %v1614, %v1681
    %v1683 = vpop.f32.mrb[0].mxu0
    %1684 = vmatprep.mubr.f32.mxu0 0.0
    %1685 = vmatmul.mubr.f32.gmra.mrb[0].mxu0 %v1591
    %v1686 = vpop.f32.mrb[0].mxu0
    %v1687 = vadd.f32 %v1614, %v1686
    %v1688 = vpop.f32.mrb[0].mxu0
    %1689 = vdwg.mxu0
    %v1690 = vadd.f32 %v1682, %v1687
    %v1691 = vrot.slane %v1690, 4
    %v1692 = vadd.f32 %v1690, %v1691
    %v1693 = vrot.slane %v1692, 2
    %v1694 = vadd.f32 %v1692, %v1693
    %v1695 = vrot.slane %v1694, 1
    %v1696 = vadd.f32 %v1694, %v1695
    %v1697 = vmul.f32 %v1696, 0.0625
    %v1698 = vmul.f32 %v1682, %v1682
    %v1699 = vmul.f32 %v1687, %v1687
    %v1700 = vadd.f32 %v1698, %v1699
    %v1701 = vrot.slane %v1700, 4
    %v1702 = vadd.f32 %v1700, %v1701
    %v1703 = vrot.slane %v1702, 2
    %v1704 = vadd.f32 %v1702, %v1703
    %v1705 = vrot.slane %v1704, 1
    %v1706 = vadd.f32 %v1704, %v1705
    %v1707 = vmul.f32 %v1706, 0.0625
    %v1708 = vmul.f32 %v1697, %v1697
    %v1709 = vsub.f32 %v1707, %v1708
    %v1710 = vmax.f32 %v1709, 0.0
    %v1711 = vadd.f32 %v1710, 1e-05
    %v1712 = vrsqrt.pop %v1711
    %v1713 = vmul.f32 %v1610, %v1712
    %v1714 = vmul.f32 %v1697, %v1713
    %v1716 = vrot.slane %v1714, 7
    %v1718 = vsub.f32 %v1610, %v1716
    %v1719 = vlaneseq
    %v1720 = vshrl.u32 %v1719, 7
    %v1721 = vsub.s32 1, %v1720
    %v1722 = vrot.slane %v1713, %v1721
    %v1723 = vmul.f32 %v1682, %v1722
    %v1724 = vmul.f32 %v1687, %v1722
    %v1725 = vlaneseq
    %v1726 = vshrl.u32 %v1725, 7
    %v1727 = vsub.s32 2, %v1726
    %v1728 = vrot.slane %v1718, %v1727
    %v1729 = vadd.f32 %v1723, %v1728
    %v1730 = vadd.f32 %v1724, %v1728
    %v1731 = vmax.f32 %v1729, 0.0
    %v1732 = vmax.f32 %v1730, 0.0
    %s1733 = scalar_lea.vmem [#allocation2], 1408
    %v1734 = vld [vmem:[%s1733] sm:$0xff]
    %v1735 = vld [vmem:[%s1733 + $0x8] sm:$0xff]
    %v1736 = vld [vmem:[%s1733 + $0x10] sm:$0xff]
    %v1737 = vld [vmem:[%s1733 + $0x18] sm:$0xff]
    %v1738 = vld [vmem:[%s1733 + $0x20] sm:$0xff]
    %v1739 = vld [vmem:[%s1733 + $0x28] sm:$0xff]
    %v1740 = vld [vmem:[%s1733 + $0x30] sm:$0xff]
    %v1741 = vld [vmem:[%s1733 + $0x38] sm:$0xff]
    %v1742 = vld [vmem:[%s1733 + $0x40] sm:$0xff]
    %v1743 = vld [vmem:[%s1733 + $0x48] sm:$0xff]
    %v1744 = vld [vmem:[%s1733 + $0x50] sm:$0xff]
    %v1745 = vld [vmem:[%s1733 + $0x58] sm:$0xff]
    %v1746 = vld [vmem:[%s1733 + $0x60] sm:$0xff]
    %v1747 = vld [vmem:[%s1733 + $0x68] sm:$0xff]
    %v1748 = vld [vmem:[%s1733 + $0x70] sm:$0xff]
    %v1749 = vld [vmem:[%s1733 + $0x78] sm:$0xff]
    %s1750 = scalar_lea.vmem [#allocation6], 88
    %v1751 = vld [vmem:[%s1750] sm:$0xff]
    %v1752 = vlaneseq
    %v1753 = vshrl.u32 %v1752, 7
    %v1754 = vsub.s32 0, %v1753
    %v1755 = vrot.slane %v1751, %v1754
    %1756 = vmatprep.subr.mxu0 0.0
    %1757 = vmatpush1.msra.mxu0 %v1734
    %1758 = vmatprep.subr.mxu0 0.0
    %1759 = vmatpush1.msra.mxu0 %v1735
    %1760 = vmatprep.subr.mxu0 0.0
    %1761 = vmatpush1.msra.mxu0 %v1736
    %1762 = vmatprep.subr.mxu0 0.0
    %1763 = vmatpush1.msra.mxu0 %v1737
    %1764 = vmatprep.subr.mxu0 0.0
    %1765 = vmatpush1.msra.mxu0 %v1738
    %1766 = vmatprep.subr.mxu0 0.0
    %1767 = vmatpush1.msra.mxu0 %v1739
    %1768 = vmatprep.subr.mxu0 0.0
    %1769 = vmatpush1.msra.mxu0 %v1740
    %1770 = vmatprep.subr.mxu0 0.0
    %1771 = vmatpush1.msra.mxu0 %v1741
    %1772 = vmatprep.subr.mxu0 0.0
    %1773 = vmatpush1.msra.mxu0 %v1742
    %1774 = vmatprep.subr.mxu0 0.0
    %1775 = vmatpush1.msra.mxu0 %v1743
    %1776 = vmatprep.subr.mxu0 0.0
    %1777 = vmatpush1.msra.mxu0 %v1744
    %1778 = vmatprep.subr.mxu0 0.0
    %1779 = vmatpush1.msra.mxu0 %v1745
    %1780 = vmatprep.subr.mxu0 0.0
    %1781 = vmatpush1.msra.mxu0 %v1746
    %1782 = vmatprep.subr.mxu0 0.0
    %1783 = vmatpush1.msra.mxu0 %v1747
    %1784 = vmatprep.subr.mxu0 0.0
    %1785 = vmatpush1.msra.mxu0 %v1748
    %1786 = vmatprep.subr.mxu0 0.0
    %1787 = vmatpush1.msra.mxu0 %v1749
    %1788 = vmatprep.subr.mxu0 0.0
    %1789 = vmatpush1.msra.mxu0 0.0
    %1790 = vmatprep.subr.mxu0 0.0
    %1791 = vmatpush1.msra.mxu0 0.0
    %1792 = vmatprep.subr.mxu0 0.0
    %1793 = vmatpush1.msra.mxu0 0.0
    %1794 = vmatprep.subr.mxu0 0.0
    %1795 = vmatpush1.msra.mxu0 0.0
    %1796 = vmatprep.subr.mxu0 0.0
    %1797 = vmatpush1.msra.mxu0 0.0
    %1798 = vmatprep.subr.mxu0 0.0
    %1799 = vmatpush1.msra.mxu0 0.0
    %1800 = vmatprep.subr.mxu0 0.0
    %1801 = vmatpush1.msra.mxu0 0.0
    %1802 = vmatprep.subr.mxu0 0.0
    %1803 = vmatpush1.msra.mxu0 0.0
    %1804 = vmatprep.subr.mxu0 0.0
    %1805 = vmatpush1.msra.mxu0 0.0
    %1806 = vmatprep.subr.mxu0 0.0
    %1807 = vmatpush1.msra.mxu0 0.0
    %1808 = vmatprep.subr.mxu0 0.0
    %1809 = vmatpush1.msra.mxu0 0.0
    %1810 = vmatprep.subr.mxu0 0.0
    %1811 = vmatpush1.msra.mxu0 0.0
    %1812 = vmatprep.subr.mxu0 0.0
    %1813 = vmatpush1.msra.mxu0 0.0
    %1814 = vmatprep.subr.mxu0 0.0
    %1815 = vmatpush1.msra.mxu0 0.0
    %1816 = vmatprep.subr.mxu0 0.0
    %1817 = vmatpush1.msra.mxu0 0.0
    %1818 = vmatprep.subr.mxu0 0.0
    %1819 = vmatpush1.msra.mxu0 0.0
    %1820 = vmatprep.mubr.f32.mxu0 0.0
    %1821 = vmatmul.mubr.f32.gmra.mrb[0].mxu0 %v1731
    %v1822 = vpop.f32.mrb[0].mxu0
    %v1823 = vadd.f32 %v1755, %v1822
    %v1824 = vpop.f32.mrb[0].mxu0
    %1825 = vmatprep.mubr.f32.mxu0 0.0
    %1826 = vmatmul.mubr.f32.gmra.mrb[0].mxu0 %v1732
    %v1827 = vpop.f32.mrb[0].mxu0
    %v1828 = vadd.f32 %v1755, %v1827
    %v1829 = vpop.f32.mrb[0].mxu0
    %1830 = vdwg.mxu0
    %v1831 = vadd.f32 %v1823, %v1828
    %v1832 = vrot.slane %v1831, 4
    %v1833 = vadd.f32 %v1831, %v1832
    %v1834 = vrot.slane %v1833, 2
    %v1835 = vadd.f32 %v1833, %v1834
    %v1836 = vrot.slane %v1835, 1
    %v1837 = vadd.f32 %v1835, %v1836
    %v1838 = vmul.f32 %v1837, 0.0625
    %v1839 = vmul.f32 %v1823, %v1823
    %v1840 = vmul.f32 %v1828, %v1828
    %v1841 = vadd.f32 %v1839, %v1840
    %v1842 = vrot.slane %v1841, 4
    %v1843 = vadd.f32 %v1841, %v1842
    %v1844 = vrot.slane %v1843, 2
    %v1845 = vadd.f32 %v1843, %v1844
    %v1846 = vrot.slane %v1845, 1
    %v1847 = vadd.f32 %v1845, %v1846
    %v1848 = vmul.f32 %v1847, 0.0625
    %v1849 = vmul.f32 %v1838, %v1838
    %v1850 = vsub.f32 %v1848, %v1849
    %v1851 = vmax.f32 %v1850, 0.0
    %v1852 = vadd.f32 %v1851, 1e-05
    %v1853 = vrsqrt.pop %v1852
    %v1854 = vmul.f32 %v1751, %v1853
    %v1855 = vmul.f32 %v1838, %v1854
    %v1857 = vrot.slane %v1855, 7
    %v1859 = vsub.f32 %v1751, %v1857
    %v1860 = vlaneseq
    %v1861 = vshrl.u32 %v1860, 7
    %v1862 = vsub.s32 1, %v1861
    %v1863 = vrot.slane %v1854, %v1862
    %v1864 = vmul.f32 %v1823, %v1863
    %v1865 = vmul.f32 %v1828, %v1863
    %v1866 = vlaneseq
    %v1867 = vshrl.u32 %v1866, 7
    %v1868 = vsub.s32 2, %v1867
    %v1869 = vrot.slane %v1859, %v1868
    %v1870 = vadd.f32 %v1864, %v1869
    %v1871 = vadd.f32 %v1865, %v1869
    %v1872 = vmax.f32 %v1870, 0.0
    %v1873 = vmax.f32 %v1871, 0.0
    %s1874 = scalar_lea.vmem [#allocation2], 1536
    %v1875 = vld [vmem:[%s1874] sm:$0xff]
    %v1876 = vld [vmem:[%s1874 + $0x8] sm:$0xff]
    %v1877 = vld [vmem:[%s1874 + $0x10] sm:$0xff]
    %v1878 = vld [vmem:[%s1874 + $0x18] sm:$0xff]
    %v1879 = vld [vmem:[%s1874 + $0x20] sm:$0xff]
    %v1880 = vld [vmem:[%s1874 + $0x28] sm:$0xff]
    %v1881 = vld [vmem:[%s1874 + $0x30] sm:$0xff]
    %v1882 = vld [vmem:[%s1874 + $0x38] sm:$0xff]
    %v1883 = vld [vmem:[%s1874 + $0x40] sm:$0xff]
    %v1884 = vld [vmem:[%s1874 + $0x48] sm:$0xff]
    %v1885 = vld [vmem:[%s1874 + $0x50] sm:$0xff]
    %v1886 = vld [vmem:[%s1874 + $0x58] sm:$0xff]
    %v1887 = vld [vmem:[%s1874 + $0x60] sm:$0xff]
    %v1888 = vld [vmem:[%s1874 + $0x68] sm:$0xff]
    %v1889 = vld [vmem:[%s1874 + $0x70] sm:$0xff]
    %v1890 = vld [vmem:[%s1874 + $0x78] sm:$0xff]
    %s1891 = scalar_lea.vmem [#allocation6], 96
    %v1892 = vld [vmem:[%s1891] sm:$0xff]
    %v1893 = vlaneseq
    %v1894 = vshrl.u32 %v1893, 7
    %v1895 = vsub.s32 0, %v1894
    %v1896 = vrot.slane %v1892, %v1895
    %1897 = vmatprep.subr.mxu0 0.0
    %1898 = vmatpush1.msra.mxu0 %v1875
    %1899 = vmatprep.subr.mxu0 0.0
    %1900 = vmatpush1.msra.mxu0 %v1876
    %1901 = vmatprep.subr.mxu0 0.0
    %1902 = vmatpush1.msra.mxu0 %v1877
    %1903 = vmatprep.subr.mxu0 0.0
    %1904 = vmatpush1.msra.mxu0 %v1878
    %1905 = vmatprep.subr.mxu0 0.0
    %1906 = vmatpush1.msra.mxu0 %v1879
    %1907 = vmatprep.subr.mxu0 0.0
    %1908 = vmatpush1.msra.mxu0 %v1880
    %1909 = vmatprep.subr.mxu0 0.0
    %1910 = vmatpush1.msra.mxu0 %v1881
    %1911 = vmatprep.subr.mxu0 0.0
    %1912 = vmatpush1.msra.mxu0 %v1882
    %1913 = vmatprep.subr.mxu0 0.0
    %1914 = vmatpush1.msra.mxu0 %v1883
    %1915 = vmatprep.subr.mxu0 0.0
    %1916 = vmatpush1.msra.mxu0 %v1884
    %1917 = vmatprep.subr.mxu0 0.0
    %1918 = vmatpush1.msra.mxu0 %v1885
    %1919 = vmatprep.subr.mxu0 0.0
    %1920 = vmatpush1.msra.mxu0 %v1886
    %1921 = vmatprep.subr.mxu0 0.0
    %1922 = vmatpush1.msra.mxu0 %v1887
    %1923 = vmatprep.subr.mxu0 0.0
    %1924 = vmatpush1.msra.mxu0 %v1888
    %1925 = vmatprep.subr.mxu0 0.0
    %1926 = vmatpush1.msra.mxu0 %v1889
    %1927 = vmatprep.subr.mxu0 0.0
    %1928 = vmatpush1.msra.mxu0 %v1890
    %1929 = vmatprep.subr.mxu0 0.0
    %1930 = vmatpush1.msra.mxu0 0.0
    %1931 = vmatprep.subr.mxu0 0.0
    %1932 = vmatpush1.msra.mxu0 0.0
    %1933 = vmatprep.subr.mxu0 0.0
    %1934 = vmatpush1.msra.mxu0 0.0
    %1935 = vmatprep.subr.mxu0 0.0
    %1936 = vmatpush1.msra.mxu0 0.0
    %1937 = vmatprep.subr.mxu0 0.0
    %1938 = vmatpush1.msra.mxu0 0.0
    %1939 = vmatprep.subr.mxu0 0.0
    %1940 = vmatpush1.msra.mxu0 0.0
    %1941 = vmatprep.subr.mxu0 0.0
    %1942 = vmatpush1.msra.mxu0 0.0
    %1943 = vmatprep.subr.mxu0 0.0
    %1944 = vmatpush1.msra.mxu0 0.0
    %1945 = vmatprep.subr.mxu0 0.0
    %1946 = vmatpush1.msra.mxu0 0.0
    %1947 = vmatprep.subr.mxu0 0.0
    %1948 = vmatpush1.msra.mxu0 0.0
    %1949 = vmatprep.subr.mxu0 0.0
    %1950 = vmatpush1.msra.mxu0 0.0
    %1951 = vmatprep.subr.mxu0 0.0
    %1952 = vmatpush1.msra.mxu0 0.0
    %1953 = vmatprep.subr.mxu0 0.0
    %1954 = vmatpush1.msra.mxu0 0.0
    %1955 = vmatprep.subr.mxu0 0.0
    %1956 = vmatpush1.msra.mxu0 0.0
    %1957 = vmatprep.subr.mxu0 0.0
    %1958 = vmatpush1.msra.mxu0 0.0
    %1959 = vmatprep.subr.mxu0 0.0
    %1960 = vmatpush1.msra.mxu0 0.0
    %1961 = vmatprep.mubr.f32.mxu0 0.0
    %1962 = vmatmul.mubr.f32.gmra.mrb[0].mxu0 %v1872
    %v1963 = vpop.f32.mrb[0].mxu0
    %v1964 = vadd.f32 %v1896, %v1963
    %v1965 = vpop.f32.mrb[0].mxu0
    %1966 = vmatprep.mubr.f32.mxu0 0.0
    %1967 = vmatmul.mubr.f32.gmra.mrb[0].mxu0 %v1873
    %v1968 = vpop.f32.mrb[0].mxu0
    %v1969 = vadd.f32 %v1896, %v1968
    %v1970 = vpop.f32.mrb[0].mxu0
    %1971 = vdwg.mxu0
    %v1972 = vadd.f32 %v1964, %v1969
    %v1973 = vrot.slane %v1972, 4
    %v1974 = vadd.f32 %v1972, %v1973
    %v1975 = vrot.slane %v1974, 2
    %v1976 = vadd.f32 %v1974, %v1975
    %v1977 = vrot.slane %v1976, 1
    %v1978 = vadd.f32 %v1976, %v1977
    %v1979 = vmul.f32 %v1978, 0.0625
    %v1980 = vmul.f32 %v1964, %v1964
    %v1981 = vmul.f32 %v1969, %v1969
    %v1982 = vadd.f32 %v1980, %v1981
    %v1983 = vrot.slane %v1982, 4
    %v1984 = vadd.f32 %v1982, %v1983
    %v1985 = vrot.slane %v1984, 2
    %v1986 = vadd.f32 %v1984, %v1985
    %v1987 = vrot.slane %v1986, 1
    %v1988 = vadd.f32 %v1986, %v1987
    %v1989 = vmul.f32 %v1988, 0.0625
    %v1990 = vmul.f32 %v1979, %v1979
    %v1991 = vsub.f32 %v1989, %v1990
    %v1992 = vmax.f32 %v1991, 0.0
    %v1993 = vadd.f32 %v1992, 1e-05
    %v1994 = vrsqrt.pop %v1993
    %v1995 = vmul.f32 %v1892, %v1994
    %v1996 = vmul.f32 %v1979, %v1995
    %v1998 = vrot.slane %v1996, 7
    %v2000 = vsub.f32 %v1892, %v1998
    %v2001 = vlaneseq
    %v2002 = vshrl.u32 %v2001, 7
    %v2003 = vsub.s32 1, %v2002
    %v2004 = vrot.slane %v1995, %v2003
    %v2005 = vmul.f32 %v1964, %v2004
    %v2006 = vmul.f32 %v1969, %v2004
    %v2007 = vlaneseq
    %v2008 = vshrl.u32 %v2007, 7
    %v2009 = vsub.s32 2, %v2008
    %v2010 = vrot.slane %v2000, %v2009
    %v2011 = vadd.f32 %v2005, %v2010
    %v2012 = vadd.f32 %v2006, %v2010
    %v2013 = vmax.f32 %v2011, 0.0
    %v2014 = vmax.f32 %v2012, 0.0
    %s2015 = scalar_lea.vmem [#allocation2], 1664
    %v2016 = vld [vmem:[%s2015] sm:$0xff]
    %v2017 = vld [vmem:[%s2015 + $0x8] sm:$0xff]
    %v2018 = vld [vmem:[%s2015 + $0x10] sm:$0xff]
    %v2019 = vld [vmem:[%s2015 + $0x18] sm:$0xff]
    %v2020 = vld [vmem:[%s2015 + $0x20] sm:$0xff]
    %v2021 = vld [vmem:[%s2015 + $0x28] sm:$0xff]
    %v2022 = vld [vmem:[%s2015 + $0x30] sm:$0xff]
    %v2023 = vld [vmem:[%s2015 + $0x38] sm:$0xff]
    %v2024 = vld [vmem:[%s2015 + $0x40] sm:$0xff]
    %v2025 = vld [vmem:[%s2015 + $0x48] sm:$0xff]
    %v2026 = vld [vmem:[%s2015 + $0x50] sm:$0xff]
    %v2027 = vld [vmem:[%s2015 + $0x58] sm:$0xff]
    %v2028 = vld [vmem:[%s2015 + $0x60] sm:$0xff]
    %v2029 = vld [vmem:[%s2015 + $0x68] sm:$0xff]
    %v2030 = vld [vmem:[%s2015 + $0x70] sm:$0xff]
    %v2031 = vld [vmem:[%s2015 + $0x78] sm:$0xff]
    %s2032 = scalar_lea.vmem [#allocation4], 128
    %v2033 = vld [vmem:[%s2032] sm:$0xff]
    %v2034 = vld [vmem:[%s2032 + $0x8] sm:$0xff]
    %v2035 = vld [vmem:[%s2032 + $0x10] sm:$0xff]
    %v2036 = vld [vmem:[%s2032 + $0x18] sm:$0xff]
    %v2037 = vld [vmem:[%s2032 + $0x20] sm:$0xff]
    %v2038 = vld [vmem:[%s2032 + $0x28] sm:$0xff]
    %v2039 = vld [vmem:[%s2032 + $0x30] sm:$0xff]
    %v2040 = vld [vmem:[%s2032 + $0x38] sm:$0xff]
    %v2041 = vld [vmem:[%s2032 + $0x40] sm:$0xff]
    %v2042 = vld [vmem:[%s2032 + $0x48] sm:$0xff]
    %v2043 = vld [vmem:[%s2032 + $0x50] sm:$0xff]
    %v2044 = vld [vmem:[%s2032 + $0x58] sm:$0xff]
    %v2045 = vld [vmem:[%s2032 + $0x60] sm:$0xff]
    %v2046 = vld [vmem:[%s2032 + $0x68] sm:$0xff]
    %v2047 = vld [vmem:[%s2032 + $0x70] sm:$0xff]
    %v2048 = vld [vmem:[%s2032 + $0x78] sm:$0xff]
    %2049 = vmatprep.subr.mxu0 0.0
    %2050 = vmatpush1.msra.mxu0 %v2033
    %2051 = vmatprep.subr.mxu0 0.0
    %2052 = vmatpush1.msra.mxu0 %v2034
    %2053 = vmatprep.subr.mxu0 0.0
    %2054 = vmatpush1.msra.mxu0 %v2035
    %2055 = vmatprep.subr.mxu0 0.0
    %2056 = vmatpush1.msra.mxu0 %v2036
    %2057 = vmatprep.subr.mxu0 0.0
    %2058 = vmatpush1.msra.mxu0 %v2037
    %2059 = vmatprep.subr.mxu0 0.0
    %2060 = vmatpush1.msra.mxu0 %v2038
    %2061 = vmatprep.subr.mxu0 0.0
    %2062 = vmatpush1.msra.mxu0 %v2039
    %2063 = vmatprep.subr.mxu0 0.0
    %2064 = vmatpush1.msra.mxu0 %v2040
    %2065 = vmatprep.subr.mxu0 0.0
    %2066 = vmatpush1.msra.mxu0 %v2041
    %2067 = vmatprep.subr.mxu0 0.0
    %2068 = vmatpush1.msra.mxu0 %v2042
    %2069 = vmatprep.subr.mxu0 0.0
    %2070 = vmatpush1.msra.mxu0 %v2043
    %2071 = vmatprep.subr.mxu0 0.0
    %2072 = vmatpush1.msra.mxu0 %v2044
    %2073 = vmatprep.subr.mxu0 0.0
    %2074 = vmatpush1.msra.mxu0 %v2045
    %2075 = vmatprep.subr.mxu0 0.0
    %2076 = vmatpush1.msra.mxu0 %v2046
    %2077 = vmatprep.subr.mxu0 0.0
    %2078 = vmatpush1.msra.mxu0 %v2047
    %2079 = vmatprep.subr.mxu0 0.0
    %2080 = vmatpush1.msra.mxu0 %v2048
    %2081 = vmatprep.subr.mxu0 0.0
    %2082 = vmatpush1.msra.mxu0 0.0
    %2083 = vmatprep.subr.mxu0 0.0
    %2084 = vmatpush1.msra.mxu0 0.0
    %2085 = vmatprep.subr.mxu0 0.0
    %2086 = vmatpush1.msra.mxu0 0.0
    %2087 = vmatprep.subr.mxu0 0.0
    %2088 = vmatpush1.msra.mxu0 0.0
    %2089 = vmatprep.subr.mxu0 0.0
    %2090 = vmatpush1.msra.mxu0 0.0
    %2091 = vmatprep.subr.mxu0 0.0
    %2092 = vmatpush1.msra.mxu0 0.0
    %2093 = vmatprep.subr.mxu0 0.0
    %2094 = vmatpush1.msra.mxu0 0.0
    %2095 = vmatprep.subr.mxu0 0.0
    %2096 = vmatpush1.msra.mxu0 0.0
    %2097 = vmatprep.subr.mxu0 0.0
    %2098 = vmatpush1.msra.mxu0 0.0
    %2099 = vmatprep.subr.mxu0 0.0
    %2100 = vmatpush1.msra.mxu0 0.0
    %2101 = vmatprep.subr.mxu0 0.0
    %2102 = vmatpush1.msra.mxu0 0.0
    %2103 = vmatprep.subr.mxu0 0.0
    %2104 = vmatpush1.msra.mxu0 0.0
    %2105 = vmatprep.subr.mxu0 0.0
    %2106 = vmatpush1.msra.mxu0 0.0
    %2107 = vmatprep.subr.mxu0 0.0
    %2108 = vmatpush1.msra.mxu0 0.0
    %2109 = vmatprep.subr.mxu0 0.0
    %2110 = vmatpush1.msra.mxu0 0.0
    %2111 = vmatprep.subr.mxu0 0.0
    %2112 = vmatpush1.msra.mxu0 0.0
    %2113 = vmatprep.mubr.f32.mxu0 0.0
    %2114 = vmatmul.mubr.f32.gmra.mrb[0].mxu0 %v89
    %v2115 = vpop.f32.mrb[0].mxu0
    %v2116 = vadd.f32 0.0, %v2115
    %v2117 = vpop.f32.mrb[0].mxu0
    %2118 = vmatprep.mubr.f32.mxu0 0.0
    %2119 = vmatmul.mubr.f32.gmra.mrb[0].mxu0 %v90
    %v2120 = vpop.f32.mrb[0].mxu0
    %v2121 = vadd.f32 0.0, %v2120
    %v2122 = vpop.f32.mrb[0].mxu0
    %2123 = vdwg.mxu0
    %2124 = vmatprep.subr.mxu0 0.0
    %2125 = vmatpush1.msra.mxu0 %v2016
    %2126 = vmatprep.subr.mxu0 0.0
    %2127 = vmatpush1.msra.mxu0 %v2017
    %2128 = vmatprep.subr.mxu0 0.0
    %2129 = vmatpush1.msra.mxu0 %v2018
    %2130 = vmatprep.subr.mxu0 0.0
    %2131 = vmatpush1.msra.mxu0 %v2019
    %2132 = vmatprep.subr.mxu0 0.0
    %2133 = vmatpush1.msra.mxu0 %v2020
    %2134 = vmatprep.subr.mxu0 0.0
    %2135 = vmatpush1.msra.mxu0 %v2021
    %2136 = vmatprep.subr.mxu0 0.0
    %2137 = vmatpush1.msra.mxu0 %v2022
    %2138 = vmatprep.subr.mxu0 0.0
    %2139 = vmatpush1.msra.mxu0 %v2023
    %2140 = vmatprep.subr.mxu0 0.0
    %2141 = vmatpush1.msra.mxu0 %v2024
    %2142 = vmatprep.subr.mxu0 0.0
    %2143 = vmatpush1.msra.mxu0 %v2025
    %2144 = vmatprep.subr.mxu0 0.0
    %2145 = vmatpush1.msra.mxu0 %v2026
    %2146 = vmatprep.subr.mxu0 0.0
    %2147 = vmatpush1.msra.mxu0 %v2027
    %2148 = vmatprep.subr.mxu0 0.0
    %2149 = vmatpush1.msra.mxu0 %v2028
    %2150 = vmatprep.subr.mxu0 0.0
    %2151 = vmatpush1.msra.mxu0 %v2029
    %2152 = vmatprep.subr.mxu0 0.0
    %2153 = vmatpush1.msra.mxu0 %v2030
    %2154 = vmatprep.subr.mxu0 0.0
    %2155 = vmatpush1.msra.mxu0 %v2031
    %2156 = vmatprep.subr.mxu0 0.0
    %2157 = vmatpush1.msra.mxu0 0.0
    %2158 = vmatprep.subr.mxu0 0.0
    %2159 = vmatpush1.msra.mxu0 0.0
    %2160 = vmatprep.subr.mxu0 0.0
    %2161 = vmatpush1.msra.mxu0 0.0
    %2162 = vmatprep.subr.mxu0 0.0
    %2163 = vmatpush1.msra.mxu0 0.0
    %2164 = vmatprep.subr.mxu0 0.0
    %2165 = vmatpush1.msra.mxu0 0.0
    %2166 = vmatprep.subr.mxu0 0.0
    %2167 = vmatpush1.msra.mxu0 0.0
    %2168 = vmatprep.subr.mxu0 0.0
    %2169 = vmatpush1.msra.mxu0 0.0
    %2170 = vmatprep.subr.mxu0 0.0
    %2171 = vmatpush1.msra.mxu0 0.0
    %2172 = vmatprep.subr.mxu0 0.0
    %2173 = vmatpush1.msra.mxu0 0.0
    %2174 = vmatprep.subr.mxu0 0.0
    %2175 = vmatpush1.msra.mxu0 0.0
    %2176 = vmatprep.subr.mxu0 0.0
    %2177 = vmatpush1.msra.mxu0 0.0
    %2178 = vmatprep.subr.mxu0 0.0
    %2179 = vmatpush1.msra.mxu0 0.0
    %2180 = vmatprep.subr.mxu0 0.0
    %2181 = vmatpush1.msra.mxu0 0.0
    %2182 = vmatprep.subr.mxu0 0.0
    %2183 = vmatpush1.msra.mxu0 0.0
    %2184 = vmatprep.subr.mxu0 0.0
    %2185 = vmatpush1.msra.mxu0 0.0
    %2186 = vmatprep.subr.mxu0 0.0
    %2187 = vmatpush1.msra.mxu0 0.0
    %2188 = vmatprep.mubr.f32.mxu0 0.0
    %2189 = vmatmul.mubr.f32.gmra.mrb[0].mxu0 %v2013
    %v2190 = vpop.f32.mrb[0].mxu0
    %v2191 = vadd.f32 %v2116, %v2190
    %v2192 = vpop.f32.mrb[0].mxu0
    %2193 = vmatprep.mubr.f32.mxu0 0.0
    %2194 = vmatmul.mubr.f32.gmra.mrb[0].mxu0 %v2014
    %v2195 = vpop.f32.mrb[0].mxu0
    %v2196 = vadd.f32 %v2121, %v2195
    %v2197 = vpop.f32.mrb[0].mxu0
    %2198 = vdwg.mxu0
    %s2199 = scalar_lea.vmem [#allocation6], 104
    %v2200 = vld [vmem:[%s2199] sm:$0xff]
    %v2201 = vlaneseq
    %v2202 = vshrl.u32 %v2201, 7
    %v2203 = vsub.s32 0, %v2202
    %v2204 = vrot.slane %v2200, %v2203
    %v2205 = vadd.f32 %v2191, %v2204
    %v2206 = vadd.f32 %v2196, %v2204
    %v2207 = vadd.f32 %v2205, %v2206
    %v2208 = vrot.slane %v2207, 4
    %v2209 = vadd.f32 %v2207, %v2208
    %v2210 = vrot.slane %v2209, 2
    %v2211 = vadd.f32 %v2209, %v2210
    %v2212 = vrot.slane %v2211, 1
    %v2213 = vadd.f32 %v2211, %v2212
    %v2214 = vmul.f32 %v2213, 0.0625
    %v2215 = vmul.f32 %v2205, %v2205
    %v2216 = vmul.f32 %v2206, %v2206
    %v2217 = vadd.f32 %v2215, %v2216
    %v2218 = vrot.slane %v2217, 4
    %v2219 = vadd.f32 %v2217, %v2218
    %v2220 = vrot.slane %v2219, 2
    %v2221 = vadd.f32 %v2219, %v2220
    %v2222 = vrot.slane %v2221, 1
    %v2223 = vadd.f32 %v2221, %v2222
    %v2224 = vmul.f32 %v2223, 0.0625
    %v2225 = vmul.f32 %v2214, %v2214
    %v2226 = vsub.f32 %v2224, %v2225
    %v2227 = vmax.f32 %v2226, 0.0
    %v2228 = vadd.f32 %v2227, 1e-05
    %v2229 = vrsqrt.pop %v2228
    %v2230 = vmul.f32 %v2200, %v2229
    %v2231 = vmul.f32 %v2214, %v2230
    %v2233 = vrot.slane %v2231, 7
    %v2235 = vsub.f32 %v2200, %v2233
    %v2236 = vlaneseq
    %v2237 = vshrl.u32 %v2236, 7
    %v2238 = vsub.s32 1, %v2237
    %v2239 = vrot.slane %v2230, %v2238
    %v2240 = vmul.f32 %v2205, %v2239
    %v2241 = vmul.f32 %v2206, %v2239
    %v2242 = vlaneseq
    %v2243 = vshrl.u32 %v2242, 7
    %v2244 = vsub.s32 2, %v2243
    %v2245 = vrot.slane %v2235, %v2244
    %v2246 = vadd.f32 %v2240, %v2245
    %v2247 = vadd.f32 %v2241, %v2245
    %v2248 = vmax.f32 %v2246, 0.0
    %v2249 = vmax.f32 %v2247, 0.0
    %s2250 = scalar_lea.vmem [#allocation2], 1792
    %v2251 = vld [vmem:[%s2250] sm:$0xff]
    %v2252 = vld [vmem:[%s2250 + $0x8] sm:$0xff]
    %v2253 = vld [vmem:[%s2250 + $0x10] sm:$0xff]
    %v2254 = vld [vmem:[%s2250 + $0x18] sm:$0xff]
    %v2255 = vld [vmem:[%s2250 + $0x20] sm:$0xff]
    %v2256 = vld [vmem:[%s2250 + $0x28] sm:$0xff]
    %v2257 = vld [vmem:[%s2250 + $0x30] sm:$0xff]
    %v2258 = vld [vmem:[%s2250 + $0x38] sm:$0xff]
    %v2259 = vld [vmem:[%s2250 + $0x40] sm:$0xff]
    %v2260 = vld [vmem:[%s2250 + $0x48] sm:$0xff]
    %v2261 = vld [vmem:[%s2250 + $0x50] sm:$0xff]
    %v2262 = vld [vmem:[%s2250 + $0x58] sm:$0xff]
    %v2263 = vld [vmem:[%s2250 + $0x60] sm:$0xff]
    %v2264 = vld [vmem:[%s2250 + $0x68] sm:$0xff]
    %v2265 = vld [vmem:[%s2250 + $0x70] sm:$0xff]
    %v2266 = vld [vmem:[%s2250 + $0x78] sm:$0xff]
    %s2267 = scalar_lea.vmem [#allocation6], 112
    %v2268 = vld [vmem:[%s2267] sm:$0xff]
    %v2269 = vlaneseq
    %v2270 = vshrl.u32 %v2269, 7
    %v2271 = vsub.s32 0, %v2270
    %v2272 = vrot.slane %v2268, %v2271
    %2273 = vmatprep.subr.mxu0 0.0
    %2274 = vmatpush1.msra.mxu0 %v2251
    %2275 = vmatprep.subr.mxu0 0.0
    %2276 = vmatpush1.msra.mxu0 %v2252
    %2277 = vmatprep.subr.mxu0 0.0
    %2278 = vmatpush1.msra.mxu0 %v2253
    %2279 = vmatprep.subr.mxu0 0.0
    %2280 = vmatpush1.msra.mxu0 %v2254
    %2281 = vmatprep.subr.mxu0 0.0
    %2282 = vmatpush1.msra.mxu0 %v2255
    %2283 = vmatprep.subr.mxu0 0.0
    %2284 = vmatpush1.msra.mxu0 %v2256
    %2285 = vmatprep.subr.mxu0 0.0
    %2286 = vmatpush1.msra.mxu0 %v2257
    %2287 = vmatprep.subr.mxu0 0.0
    %2288 = vmatpush1.msra.mxu0 %v2258
    %2289 = vmatprep.subr.mxu0 0.0
    %2290 = vmatpush1.msra.mxu0 %v2259
    %2291 = vmatprep.subr.mxu0 0.0
    %2292 = vmatpush1.msra.mxu0 %v2260
    %2293 = vmatprep.subr.mxu0 0.0
    %2294 = vmatpush1.msra.mxu0 %v2261
    %2295 = vmatprep.subr.mxu0 0.0
    %2296 = vmatpush1.msra.mxu0 %v2262
    %2297 = vmatprep.subr.mxu0 0.0
    %2298 = vmatpush1.msra.mxu0 %v2263
    %2299 = vmatprep.subr.mxu0 0.0
    %2300 = vmatpush1.msra.mxu0 %v2264
    %2301 = vmatprep.subr.mxu0 0.0
    %2302 = vmatpush1.msra.mxu0 %v2265
    %2303 = vmatprep.subr.mxu0 0.0
    %2304 = vmatpush1.msra.mxu0 %v2266
    %2305 = vmatprep.subr.mxu0 0.0
    %2306 = vmatpush1.msra.mxu0 0.0
    %2307 = vmatprep.subr.mxu0 0.0
    %2308 = vmatpush1.msra.mxu0 0.0
    %2309 = vmatprep.subr.mxu0 0.0
    %2310 = vmatpush1.msra.mxu0 0.0
    %2311 = vmatprep.subr.mxu0 0.0
    %2312 = vmatpush1.msra.mxu0 0.0
    %2313 = vmatprep.subr.mxu0 0.0
    %2314 = vmatpush1.msra.mxu0 0.0
    %2315 = vmatprep.subr.mxu0 0.0
    %2316 = vmatpush1.msra.mxu0 0.0
    %2317 = vmatprep.subr.mxu0 0.0
    %2318 = vmatpush1.msra.mxu0 0.0
    %2319 = vmatprep.subr.mxu0 0.0
    %2320 = vmatpush1.msra.mxu0 0.0
    %2321 = vmatprep.subr.mxu0 0.0
    %2322 = vmatpush1.msra.mxu0 0.0
    %2323 = vmatprep.subr.mxu0 0.0
    %2324 = vmatpush1.msra.mxu0 0.0
    %2325 = vmatprep.subr.mxu0 0.0
    %2326 = vmatpush1.msra.mxu0 0.0
    %2327 = vmatprep.subr.mxu0 0.0
    %2328 = vmatpush1.msra.mxu0 0.0
    %2329 = vmatprep.subr.mxu0 0.0
    %2330 = vmatpush1.msra.mxu0 0.0
    %2331 = vmatprep.subr.mxu0 0.0
    %2332 = vmatpush1.msra.mxu0 0.0
    %2333 = vmatprep.subr.mxu0 0.0
    %2334 = vmatpush1.msra.mxu0 0.0
    %2335 = vmatprep.subr.mxu0 0.0
    %2336 = vmatpush1.msra.mxu0 0.0
    %2337 = vmatprep.mubr.f32.mxu0 0.0
    %2338 = vmatmul.mubr.f32.gmra.mrb[0].mxu0 %v2248
    %v2339 = vpop.f32.mrb[0].mxu0
    %v2340 = vadd.f32 %v2272, %v2339
    %v2341 = vpop.f32.mrb[0].mxu0
    %2342 = vmatprep.mubr.f32.mxu0 0.0
    %2343 = vmatmul.mubr.f32.gmra.mrb[0].mxu0 %v2249
    %v2344 = vpop.f32.mrb[0].mxu0
    %v2345 = vadd.f32 %v2272, %v2344
    %v2346 = vpop.f32.mrb[0].mxu0
    %2347 = vdwg.mxu0
    %v2348 = vadd.f32 %v2340, %v2345
    %v2349 = vrot.slane %v2348, 4
    %v2350 = vadd.f32 %v2348, %v2349
    %v2351 = vrot.slane %v2350, 2
    %v2352 = vadd.f32 %v2350, %v2351
    %v2353 = vrot.slane %v2352, 1
    %v2354 = vadd.f32 %v2352, %v2353
    %v2355 = vmul.f32 %v2354, 0.0625
    %v2356 = vmul.f32 %v2340, %v2340
    %v2357 = vmul.f32 %v2345, %v2345
    %v2358 = vadd.f32 %v2356, %v2357
    %v2359 = vrot.slane %v2358, 4
    %v2360 = vadd.f32 %v2358, %v2359
    %v2361 = vrot.slane %v2360, 2
    %v2362 = vadd.f32 %v2360, %v2361
    %v2363 = vrot.slane %v2362, 1
    %v2364 = vadd.f32 %v2362, %v2363
    %v2365 = vmul.f32 %v2364, 0.0625
    %v2366 = vmul.f32 %v2355, %v2355
    %v2367 = vsub.f32 %v2365, %v2366
    %v2368 = vmax.f32 %v2367, 0.0
    %v2369 = vadd.f32 %v2368, 1e-05
    %v2370 = vrsqrt.pop %v2369
    %v2371 = vmul.f32 %v2268, %v2370
    %v2372 = vmul.f32 %v2355, %v2371
    %v2374 = vrot.slane %v2372, 7
    %v2376 = vsub.f32 %v2268, %v2374
    %v2377 = vlaneseq
    %v2378 = vshrl.u32 %v2377, 7
    %v2379 = vsub.s32 1, %v2378
    %v2380 = vrot.slane %v2371, %v2379
    %v2381 = vmul.f32 %v2340, %v2380
    %v2382 = vmul.f32 %v2345, %v2380
    %v2383 = vlaneseq
    %v2384 = vshrl.u32 %v2383, 7
    %v2385 = vsub.s32 2, %v2384
    %v2386 = vrot.slane %v2376, %v2385
    %v2387 = vadd.f32 %v2381, %v2386
    %v2388 = vadd.f32 %v2382, %v2386
    %v2389 = vmax.f32 %v2387, 0.0
    %v2390 = vmax.f32 %v2388, 0.0
    %s2391 = scalar_lea.vmem [#allocation2], 1920
    %v2392 = vld [vmem:[%s2391] sm:$0xff]
    %v2393 = vld [vmem:[%s2391 + $0x8] sm:$0xff]
    %v2394 = vld [vmem:[%s2391 + $0x10] sm:$0xff]
    %v2395 = vld [vmem:[%s2391 + $0x18] sm:$0xff]
    %v2396 = vld [vmem:[%s2391 + $0x20] sm:$0xff]
    %v2397 = vld [vmem:[%s2391 + $0x28] sm:$0xff]
    %v2398 = vld [vmem:[%s2391 + $0x30] sm:$0xff]
    %v2399 = vld [vmem:[%s2391 + $0x38] sm:$0xff]
    %v2400 = vld [vmem:[%s2391 + $0x40] sm:$0xff]
    %v2401 = vld [vmem:[%s2391 + $0x48] sm:$0xff]
    %v2402 = vld [vmem:[%s2391 + $0x50] sm:$0xff]
    %v2403 = vld [vmem:[%s2391 + $0x58] sm:$0xff]
    %v2404 = vld [vmem:[%s2391 + $0x60] sm:$0xff]
    %v2405 = vld [vmem:[%s2391 + $0x68] sm:$0xff]
    %v2406 = vld [vmem:[%s2391 + $0x70] sm:$0xff]
    %v2407 = vld [vmem:[%s2391 + $0x78] sm:$0xff]
    %s2408 = scalar_lea.vmem [#allocation6], 120
    %v2409 = vld [vmem:[%s2408] sm:$0xff]
    %v2410 = vlaneseq
    %v2411 = vshrl.u32 %v2410, 7
    %v2412 = vsub.s32 0, %v2411
    %v2413 = vrot.slane %v2409, %v2412
    %2414 = vmatprep.subr.mxu0 0.0
    %2415 = vmatpush1.msra.mxu0 %v2392
    %2416 = vmatprep.subr.mxu0 0.0
    %2417 = vmatpush1.msra.mxu0 %v2393
    %2418 = vmatprep.subr.mxu0 0.0
    %2419 = vmatpush1.msra.mxu0 %v2394
    %2420 = vmatprep.subr.mxu0 0.0
    %2421 = vmatpush1.msra.mxu0 %v2395
    %2422 = vmatprep.subr.mxu0 0.0
    %2423 = vmatpush1.msra.mxu0 %v2396
    %2424 = vmatprep.subr.mxu0 0.0
    %2425 = vmatpush1.msra.mxu0 %v2397
    %2426 = vmatprep.subr.mxu0 0.0
    %2427 = vmatpush1.msra.mxu0 %v2398
    %2428 = vmatprep.subr.mxu0 0.0
    %2429 = vmatpush1.msra.mxu0 %v2399
    %2430 = vmatprep.subr.mxu0 0.0
    %2431 = vmatpush1.msra.mxu0 %v2400
    %2432 = vmatprep.subr.mxu0 0.0
    %2433 = vmatpush1.msra.mxu0 %v2401
    %2434 = vmatprep.subr.mxu0 0.0
    %2435 = vmatpush1.msra.mxu0 %v2402
    %2436 = vmatprep.subr.mxu0 0.0
    %2437 = vmatpush1.msra.mxu0 %v2403
    %2438 = vmatprep.subr.mxu0 0.0
    %2439 = vmatpush1.msra.mxu0 %v2404
    %2440 = vmatprep.subr.mxu0 0.0
    %2441 = vmatpush1.msra.mxu0 %v2405
    %2442 = vmatprep.subr.mxu0 0.0
    %2443 = vmatpush1.msra.mxu0 %v2406
    %2444 = vmatprep.subr.mxu0 0.0
    %2445 = vmatpush1.msra.mxu0 %v2407
    %2446 = vmatprep.subr.mxu0 0.0
    %2447 = vmatpush1.msra.mxu0 0.0
    %2448 = vmatprep.subr.mxu0 0.0
    %2449 = vmatpush1.msra.mxu0 0.0
    %2450 = vmatprep.subr.mxu0 0.0
    %2451 = vmatpush1.msra.mxu0 0.0
    %2452 = vmatprep.subr.mxu0 0.0
    %2453 = vmatpush1.msra.mxu0 0.0
    %2454 = vmatprep.subr.mxu0 0.0
    %2455 = vmatpush1.msra.mxu0 0.0
    %2456 = vmatprep.subr.mxu0 0.0
    %2457 = vmatpush1.msra.mxu0 0.0
    %2458 = vmatprep.subr.mxu0 0.0
    %2459 = vmatpush1.msra.mxu0 0.0
    %2460 = vmatprep.subr.mxu0 0.0
    %2461 = vmatpush1.msra.mxu0 0.0
    %2462 = vmatprep.subr.mxu0 0.0
    %2463 = vmatpush1.msra.mxu0 0.0
    %2464 = vmatprep.subr.mxu0 0.0
    %2465 = vmatpush1.msra.mxu0 0.0
    %2466 = vmatprep.subr.mxu0 0.0
    %2467 = vmatpush1.msra.mxu0 0.0
    %2468 = vmatprep.subr.mxu0 0.0
    %2469 = vmatpush1.msra.mxu0 0.0
    %2470 = vmatprep.subr.mxu0 0.0
    %2471 = vmatpush1.msra.mxu0 0.0
    %2472 = vmatprep.subr.mxu0 0.0
    %2473 = vmatpush1.msra.mxu0 0.0
    %2474 = vmatprep.subr.mxu0 0.0
    %2475 = vmatpush1.msra.mxu0 0.0
    %2476 = vmatprep.subr.mxu0 0.0
    %2477 = vmatpush1.msra.mxu0 0.0
    %2478 = vmatprep.mubr.f32.mxu0 0.0
    %2479 = vmatmul.mubr.f32.gmra.mrb[0].mxu0 %v2389
    %v2480 = vpop.f32.mrb[0].mxu0
    %v2481 = vadd.f32 %v2413, %v2480
    %v2482 = vpop.f32.mrb[0].mxu0
    %2483 = vmatprep.mubr.f32.mxu0 0.0
    %2484 = vmatmul.mubr.f32.gmra.mrb[0].mxu0 %v2390
    %v2485 = vpop.f32.mrb[0].mxu0
    %v2486 = vadd.f32 %v2413, %v2485
    %v2487 = vpop.f32.mrb[0].mxu0
    %2488 = vdwg.mxu0
    %v2489 = vadd.f32 %v2481, %v2486
    %v2490 = vrot.slane %v2489, 4
    %v2491 = vadd.f32 %v2489, %v2490
    %v2492 = vrot.slane %v2491, 2
    %v2493 = vadd.f32 %v2491, %v2492
    %v2494 = vrot.slane %v2493, 1
    %v2495 = vadd.f32 %v2493, %v2494
    %v2496 = vmul.f32 %v2495, 0.0625
    %v2497 = vmul.f32 %v2481, %v2481
    %v2498 = vmul.f32 %v2486, %v2486
    %v2499 = vadd.f32 %v2497, %v2498
    %v2500 = vrot.slane %v2499, 4
    %v2501 = vadd.f32 %v2499, %v2500
    %v2502 = vrot.slane %v2501, 2
    %v2503 = vadd.f32 %v2501, %v2502
    %v2504 = vrot.slane %v2503, 1
    %v2505 = vadd.f32 %v2503, %v2504
    %v2506 = vmul.f32 %v2505, 0.0625
    %v2507 = vmul.f32 %v2496, %v2496
    %v2508 = vsub.f32 %v2506, %v2507
    %v2509 = vmax.f32 %v2508, 0.0
    %v2510 = vadd.f32 %v2509, 1e-05
    %v2511 = vrsqrt.pop %v2510
    %v2512 = vmul.f32 %v2409, %v2511
    %v2513 = vmul.f32 %v2496, %v2512
    %v2515 = vrot.slane %v2513, 7
    %v2517 = vsub.f32 %v2409, %v2515
    %v2518 = vlaneseq
    %v2519 = vshrl.u32 %v2518, 7
    %v2520 = vsub.s32 1, %v2519
    %v2521 = vrot.slane %v2512, %v2520
    %v2522 = vmul.f32 %v2481, %v2521
    %v2523 = vmul.f32 %v2486, %v2521
    %v2524 = vlaneseq
    %v2525 = vshrl.u32 %v2524, 7
    %v2526 = vsub.s32 2, %v2525
    %v2527 = vrot.slane %v2517, %v2526
    %v2528 = vadd.f32 %v2522, %v2527
    %v2529 = vadd.f32 %v2523, %v2527
    %v2530 = vmax.f32 %v2528, 0.0
    %v2531 = vmax.f32 %v2529, 0.0
    %s2532 = scalar_lea.vmem [#allocation2], 2048
    %v2533 = vld [vmem:[%s2532] sm:$0xff]
    %v2534 = vld [vmem:[%s2532 + $0x8] sm:$0xff]
    %v2535 = vld [vmem:[%s2532 + $0x10] sm:$0xff]
    %v2536 = vld [vmem:[%s2532 + $0x18] sm:$0xff]
    %v2537 = vld [vmem:[%s2532 + $0x20] sm:$0xff]
    %v2538 = vld [vmem:[%s2532 + $0x28] sm:$0xff]
    %v2539 = vld [vmem:[%s2532 + $0x30] sm:$0xff]
    %v2540 = vld [vmem:[%s2532 + $0x38] sm:$0xff]
    %v2541 = vld [vmem:[%s2532 + $0x40] sm:$0xff]
    %v2542 = vld [vmem:[%s2532 + $0x48] sm:$0xff]
    %v2543 = vld [vmem:[%s2532 + $0x50] sm:$0xff]
    %v2544 = vld [vmem:[%s2532 + $0x58] sm:$0xff]
    %v2545 = vld [vmem:[%s2532 + $0x60] sm:$0xff]
    %v2546 = vld [vmem:[%s2532 + $0x68] sm:$0xff]
    %v2547 = vld [vmem:[%s2532 + $0x70] sm:$0xff]
    %v2548 = vld [vmem:[%s2532 + $0x78] sm:$0xff]
    %s2549 = scalar_lea.vmem [#allocation6], 128
    %v2550 = vld [vmem:[%s2549] sm:$0xff]
    %v2551 = vlaneseq
    %v2552 = vshrl.u32 %v2551, 7
    %v2553 = vsub.s32 0, %v2552
    %v2554 = vrot.slane %v2550, %v2553
    %2555 = vmatprep.subr.mxu0 0.0
    %2556 = vmatpush1.msra.mxu0 %v2533
    %2557 = vmatprep.subr.mxu0 0.0
    %2558 = vmatpush1.msra.mxu0 %v2534
    %2559 = vmatprep.subr.mxu0 0.0
    %2560 = vmatpush1.msra.mxu0 %v2535
    %2561 = vmatprep.subr.mxu0 0.0
    %2562 = vmatpush1.msra.mxu0 %v2536
    %2563 = vmatprep.subr.mxu0 0.0
    %2564 = vmatpush1.msra.mxu0 %v2537
    %2565 = vmatprep.subr.mxu0 0.0
    %2566 = vmatpush1.msra.mxu0 %v2538
    %2567 = vmatprep.subr.mxu0 0.0
    %2568 = vmatpush1.msra.mxu0 %v2539
    %2569 = vmatprep.subr.mxu0 0.0
    %2570 = vmatpush1.msra.mxu0 %v2540
    %2571 = vmatprep.subr.mxu0 0.0
    %2572 = vmatpush1.msra.mxu0 %v2541
    %2573 = vmatprep.subr.mxu0 0.0
    %2574 = vmatpush1.msra.mxu0 %v2542
    %2575 = vmatprep.subr.mxu0 0.0
    %2576 = vmatpush1.msra.mxu0 %v2543
    %2577 = vmatprep.subr.mxu0 0.0
    %2578 = vmatpush1.msra.mxu0 %v2544
    %2579 = vmatprep.subr.mxu0 0.0
    %2580 = vmatpush1.msra.mxu0 %v2545
    %2581 = vmatprep.subr.mxu0 0.0
    %2582 = vmatpush1.msra.mxu0 %v2546
    %2583 = vmatprep.subr.mxu0 0.0
    %2584 = vmatpush1.msra.mxu0 %v2547
    %2585 = vmatprep.subr.mxu0 0.0
    %2586 = vmatpush1.msra.mxu0 %v2548
    %2587 = vmatprep.subr.mxu0 0.0
    %2588 = vmatpush1.msra.mxu0 0.0
    %2589 = vmatprep.subr.mxu0 0.0
    %2590 = vmatpush1.msra.mxu0 0.0
    %2591 = vmatprep.subr.mxu0 0.0
    %2592 = vmatpush1.msra.mxu0 0.0
    %2593 = vmatprep.subr.mxu0 0.0
    %2594 = vmatpush1.msra.mxu0 0.0
    %2595 = vmatprep.subr.mxu0 0.0
    %2596 = vmatpush1.msra.mxu0 0.0
    %2597 = vmatprep.subr.mxu0 0.0
    %2598 = vmatpush1.msra.mxu0 0.0
    %2599 = vmatprep.subr.mxu0 0.0
    %2600 = vmatpush1.msra.mxu0 0.0
    %2601 = vmatprep.subr.mxu0 0.0
    %2602 = vmatpush1.msra.mxu0 0.0
    %2603 = vmatprep.subr.mxu0 0.0
    %2604 = vmatpush1.msra.mxu0 0.0
    %2605 = vmatprep.subr.mxu0 0.0
    %2606 = vmatpush1.msra.mxu0 0.0
    %2607 = vmatprep.subr.mxu0 0.0
    %2608 = vmatpush1.msra.mxu0 0.0
    %2609 = vmatprep.subr.mxu0 0.0
    %2610 = vmatpush1.msra.mxu0 0.0
    %2611 = vmatprep.subr.mxu0 0.0
    %2612 = vmatpush1.msra.mxu0 0.0
    %2613 = vmatprep.subr.mxu0 0.0
    %2614 = vmatpush1.msra.mxu0 0.0
    %2615 = vmatprep.subr.mxu0 0.0
    %2616 = vmatpush1.msra.mxu0 0.0
    %2617 = vmatprep.subr.mxu0 0.0
    %2618 = vmatpush1.msra.mxu0 0.0
    %2619 = vmatprep.mubr.f32.mxu0 0.0
    %2620 = vmatmul.mubr.f32.gmra.mrb[0].mxu0 %v2530
    %v2621 = vpop.f32.mrb[0].mxu0
    %v2622 = vadd.f32 %v2554, %v2621
    %v2623 = vpop.f32.mrb[0].mxu0
    %2624 = vmatprep.mubr.f32.mxu0 0.0
    %2625 = vmatmul.mubr.f32.gmra.mrb[0].mxu0 %v2531
    %v2626 = vpop.f32.mrb[0].mxu0
    %v2627 = vadd.f32 %v2554, %v2626
    %v2628 = vpop.f32.mrb[0].mxu0
    %2629 = vdwg.mxu0
    %v2630 = vadd.f32 %v2622, %v2627
    %v2631 = vrot.slane %v2630, 4
    %v2632 = vadd.f32 %v2630, %v2631
    %v2633 = vrot.slane %v2632, 2
    %v2634 = vadd.f32 %v2632, %v2633
    %v2635 = vrot.slane %v2634, 1
    %v2636 = vadd.f32 %v2634, %v2635
    %v2637 = vmul.f32 %v2636, 0.0625
    %v2638 = vmul.f32 %v2622, %v2622
    %v2639 = vmul.f32 %v2627, %v2627
    %v2640 = vadd.f32 %v2638, %v2639
    %v2641 = vrot.slane %v2640, 4
    %v2642 = vadd.f32 %v2640, %v2641
    %v2643 = vrot.slane %v2642, 2
    %v2644 = vadd.f32 %v2642, %v2643
    %v2645 = vrot.slane %v2644, 1
    %v2646 = vadd.f32 %v2644, %v2645
    %v2647 = vmul.f32 %v2646, 0.0625
    %v2648 = vmul.f32 %v2637, %v2637
    %v2649 = vsub.f32 %v2647, %v2648
    %v2650 = vmax.f32 %v2649, 0.0
    %v2651 = vadd.f32 %v2650, 1e-05
    %v2652 = vrsqrt.pop %v2651
    %v2653 = vmul.f32 %v2550, %v2652
    %v2654 = vmul.f32 %v2637, %v2653
    %v2656 = vrot.slane %v2654, 7
    %v2658 = vsub.f32 %v2550, %v2656
    %v2659 = vlaneseq
    %v2660 = vshrl.u32 %v2659, 7
    %v2661 = vsub.s32 1, %v2660
    %v2662 = vrot.slane %v2653, %v2661
    %v2663 = vmul.f32 %v2622, %v2662
    %v2664 = vmul.f32 %v2627, %v2662
    %v2665 = vlaneseq
    %v2666 = vshrl.u32 %v2665, 7
    %v2667 = vsub.s32 2, %v2666
    %v2668 = vrot.slane %v2658, %v2667
    %v2669 = vadd.f32 %v2663, %v2668
    %v2670 = vadd.f32 %v2664, %v2668
    %v2671 = vmax.f32 %v2669, 0.0
    %v2672 = vmax.f32 %v2670, 0.0
    %s2673 = scalar_lea.vmem [#allocation2], 2176
    %v2674 = vld [vmem:[%s2673] sm:$0xff]
    %v2675 = vld [vmem:[%s2673 + $0x8] sm:$0xff]
    %v2676 = vld [vmem:[%s2673 + $0x10] sm:$0xff]
    %v2677 = vld [vmem:[%s2673 + $0x18] sm:$0xff]
    %v2678 = vld [vmem:[%s2673 + $0x20] sm:$0xff]
    %v2679 = vld [vmem:[%s2673 + $0x28] sm:$0xff]
    %v2680 = vld [vmem:[%s2673 + $0x30] sm:$0xff]
    %v2681 = vld [vmem:[%s2673 + $0x38] sm:$0xff]
    %v2682 = vld [vmem:[%s2673 + $0x40] sm:$0xff]
    %v2683 = vld [vmem:[%s2673 + $0x48] sm:$0xff]
    %v2684 = vld [vmem:[%s2673 + $0x50] sm:$0xff]
    %v2685 = vld [vmem:[%s2673 + $0x58] sm:$0xff]
    %v2686 = vld [vmem:[%s2673 + $0x60] sm:$0xff]
    %v2687 = vld [vmem:[%s2673 + $0x68] sm:$0xff]
    %v2688 = vld [vmem:[%s2673 + $0x70] sm:$0xff]
    %v2689 = vld [vmem:[%s2673 + $0x78] sm:$0xff]
    %s2690 = scalar_lea.vmem [#allocation6], 136
    %v2691 = vld [vmem:[%s2690] sm:$0xff]
    %v2692 = vlaneseq
    %v2693 = vshrl.u32 %v2692, 7
    %v2694 = vsub.s32 0, %v2693
    %v2695 = vrot.slane %v2691, %v2694
    %2696 = vmatprep.subr.mxu0 0.0
    %2697 = vmatpush1.msra.mxu0 %v2674
    %2698 = vmatprep.subr.mxu0 0.0
    %2699 = vmatpush1.msra.mxu0 %v2675
    %2700 = vmatprep.subr.mxu0 0.0
    %2701 = vmatpush1.msra.mxu0 %v2676
    %2702 = vmatprep.subr.mxu0 0.0
    %2703 = vmatpush1.msra.mxu0 %v2677
    %2704 = vmatprep.subr.mxu0 0.0
    %2705 = vmatpush1.msra.mxu0 %v2678
    %2706 = vmatprep.subr.mxu0 0.0
    %2707 = vmatpush1.msra.mxu0 %v2679
    %2708 = vmatprep.subr.mxu0 0.0
    %2709 = vmatpush1.msra.mxu0 %v2680
    %2710 = vmatprep.subr.mxu0 0.0
    %2711 = vmatpush1.msra.mxu0 %v2681
    %2712 = vmatprep.subr.mxu0 0.0
    %2713 = vmatpush1.msra.mxu0 %v2682
    %2714 = vmatprep.subr.mxu0 0.0
    %2715 = vmatpush1.msra.mxu0 %v2683
    %2716 = vmatprep.subr.mxu0 0.0
    %2717 = vmatpush1.msra.mxu0 %v2684
    %2718 = vmatprep.subr.mxu0 0.0
    %2719 = vmatpush1.msra.mxu0 %v2685
    %2720 = vmatprep.subr.mxu0 0.0
    %2721 = vmatpush1.msra.mxu0 %v2686
    %2722 = vmatprep.subr.mxu0 0.0
    %2723 = vmatpush1.msra.mxu0 %v2687
    %2724 = vmatprep.subr.mxu0 0.0
    %2725 = vmatpush1.msra.mxu0 %v2688
    %2726 = vmatprep.subr.mxu0 0.0
    %2727 = vmatpush1.msra.mxu0 %v2689
    %2728 = vmatprep.subr.mxu0 0.0
    %2729 = vmatpush1.msra.mxu0 0.0
    %2730 = vmatprep.subr.mxu0 0.0
    %2731 = vmatpush1.msra.mxu0 0.0
    %2732 = vmatprep.subr.mxu0 0.0
    %2733 = vmatpush1.msra.mxu0 0.0
    %2734 = vmatprep.subr.mxu0 0.0
    %2735 = vmatpush1.msra.mxu0 0.0
    %2736 = vmatprep.subr.mxu0 0.0
    %2737 = vmatpush1.msra.mxu0 0.0
    %2738 = vmatprep.subr.mxu0 0.0
    %2739 = vmatpush1.msra.mxu0 0.0
    %2740 = vmatprep.subr.mxu0 0.0
    %2741 = vmatpush1.msra.mxu0 0.0
    %2742 = vmatprep.subr.mxu0 0.0
    %2743 = vmatpush1.msra.mxu0 0.0
    %2744 = vmatprep.subr.mxu0 0.0
    %2745 = vmatpush1.msra.mxu0 0.0
    %2746 = vmatprep.subr.mxu0 0.0
    %2747 = vmatpush1.msra.mxu0 0.0
    %2748 = vmatprep.subr.mxu0 0.0
    %2749 = vmatpush1.msra.mxu0 0.0
    %2750 = vmatprep.subr.mxu0 0.0
    %2751 = vmatpush1.msra.mxu0 0.0
    %2752 = vmatprep.subr.mxu0 0.0
    %2753 = vmatpush1.msra.mxu0 0.0
    %2754 = vmatprep.subr.mxu0 0.0
    %2755 = vmatpush1.msra.mxu0 0.0
    %2756 = vmatprep.subr.mxu0 0.0
    %2757 = vmatpush1.msra.mxu0 0.0
    %2758 = vmatprep.subr.mxu0 0.0
    %2759 = vmatpush1.msra.mxu0 0.0
    %2760 = vmatprep.mubr.f32.mxu0 0.0
    %2761 = vmatmul.mubr.f32.gmra.mrb[0].mxu0 %v2671
    %v2762 = vpop.f32.mrb[0].mxu0
    %v2763 = vadd.f32 %v2695, %v2762
    %v2764 = vpop.f32.mrb[0].mxu0
    %2765 = vmatprep.mubr.f32.mxu0 0.0
    %2766 = vmatmul.mubr.f32.gmra.mrb[0].mxu0 %v2672
    %v2767 = vpop.f32.mrb[0].mxu0
    %v2768 = vadd.f32 %v2695, %v2767
    %v2769 = vpop.f32.mrb[0].mxu0
    %2770 = vdwg.mxu0
    %v2771 = vadd.f32 %v2763, %v2768
    %v2772 = vrot.slane %v2771, 4
    %v2773 = vadd.f32 %v2771, %v2772
    %v2774 = vrot.slane %v2773, 2
    %v2775 = vadd.f32 %v2773, %v2774
    %v2776 = vrot.slane %v2775, 1
    %v2777 = vadd.f32 %v2775, %v2776
    %v2778 = vmul.f32 %v2777, 0.0625
    %v2779 = vmul.f32 %v2763, %v2763
    %v2780 = vmul.f32 %v2768, %v2768
    %v2781 = vadd.f32 %v2779, %v2780
    %v2782 = vrot.slane %v2781, 4
    %v2783 = vadd.f32 %v2781, %v2782
    %v2784 = vrot.slane %v2783, 2
    %v2785 = vadd.f32 %v2783, %v2784
    %v2786 = vrot.slane %v2785, 1
    %v2787 = vadd.f32 %v2785, %v2786
    %v2788 = vmul.f32 %v2787, 0.0625
    %v2789 = vmul.f32 %v2778, %v2778
    %v2790 = vsub.f32 %v2788, %v2789
    %v2791 = vmax.f32 %v2790, 0.0
    %v2792 = vadd.f32 %v2791, 1e-05
    %v2793 = vrsqrt.pop %v2792
    %v2794 = vmul.f32 %v2691, %v2793
    %v2795 = vmul.f32 %v2778, %v2794
    %v2797 = vrot.slane %v2795, 7
    %v2799 = vsub.f32 %v2691, %v2797
    %v2800 = vlaneseq
    %v2801 = vshrl.u32 %v2800, 7
    %v2802 = vsub.s32 1, %v2801
    %v2803 = vrot.slane %v2794, %v2802
    %v2804 = vmul.f32 %v2763, %v2803
    %v2805 = vmul.f32 %v2768, %v2803
    %v2806 = vlaneseq
    %v2807 = vshrl.u32 %v2806, 7
    %v2808 = vsub.s32 2, %v2807
    %v2809 = vrot.slane %v2799, %v2808
    %v2810 = vadd.f32 %v2804, %v2809
    %v2811 = vadd.f32 %v2805, %v2809
    %v2812 = vmax.f32 %v2810, 0.0
    %v2813 = vmax.f32 %v2811, 0.0
    %s2814 = scalar_lea.vmem [#allocation2], 2304
    %v2815 = vld [vmem:[%s2814] sm:$0xff]
    %v2816 = vld [vmem:[%s2814 + $0x8] sm:$0xff]
    %v2817 = vld [vmem:[%s2814 + $0x10] sm:$0xff]
    %v2818 = vld [vmem:[%s2814 + $0x18] sm:$0xff]
    %v2819 = vld [vmem:[%s2814 + $0x20] sm:$0xff]
    %v2820 = vld [vmem:[%s2814 + $0x28] sm:$0xff]
    %v2821 = vld [vmem:[%s2814 + $0x30] sm:$0xff]
    %v2822 = vld [vmem:[%s2814 + $0x38] sm:$0xff]
    %v2823 = vld [vmem:[%s2814 + $0x40] sm:$0xff]
    %v2824 = vld [vmem:[%s2814 + $0x48] sm:$0xff]
    %v2825 = vld [vmem:[%s2814 + $0x50] sm:$0xff]
    %v2826 = vld [vmem:[%s2814 + $0x58] sm:$0xff]
    %v2827 = vld [vmem:[%s2814 + $0x60] sm:$0xff]
    %v2828 = vld [vmem:[%s2814 + $0x68] sm:$0xff]
    %v2829 = vld [vmem:[%s2814 + $0x70] sm:$0xff]
    %v2830 = vld [vmem:[%s2814 + $0x78] sm:$0xff]
    %s2831 = scalar_lea.vmem [#allocation6], 144
    %v2832 = vld [vmem:[%s2831] sm:$0xff]
    %v2833 = vlaneseq
    %v2834 = vshrl.u32 %v2833, 7
    %v2835 = vsub.s32 0, %v2834
    %v2836 = vrot.slane %v2832, %v2835
    %2837 = vmatprep.subr.mxu0 0.0
    %2838 = vmatpush1.msra.mxu0 %v2815
    %2839 = vmatprep.subr.mxu0 0.0
    %2840 = vmatpush1.msra.mxu0 %v2816
    %2841 = vmatprep.subr.mxu0 0.0
    %2842 = vmatpush1.msra.mxu0 %v2817
    %2843 = vmatprep.subr.mxu0 0.0
    %2844 = vmatpush1.msra.mxu0 %v2818
    %2845 = vmatprep.subr.mxu0 0.0
    %2846 = vmatpush1.msra.mxu0 %v2819
    %2847 = vmatprep.subr.mxu0 0.0
    %2848 = vmatpush1.msra.mxu0 %v2820
    %2849 = vmatprep.subr.mxu0 0.0
    %2850 = vmatpush1.msra.mxu0 %v2821
    %2851 = vmatprep.subr.mxu0 0.0
    %2852 = vmatpush1.msra.mxu0 %v2822
    %2853 = vmatprep.subr.mxu0 0.0
    %2854 = vmatpush1.msra.mxu0 %v2823
    %2855 = vmatprep.subr.mxu0 0.0
    %2856 = vmatpush1.msra.mxu0 %v2824
    %2857 = vmatprep.subr.mxu0 0.0
    %2858 = vmatpush1.msra.mxu0 %v2825
    %2859 = vmatprep.subr.mxu0 0.0
    %2860 = vmatpush1.msra.mxu0 %v2826
    %2861 = vmatprep.subr.mxu0 0.0
    %2862 = vmatpush1.msra.mxu0 %v2827
    %2863 = vmatprep.subr.mxu0 0.0
    %2864 = vmatpush1.msra.mxu0 %v2828
    %2865 = vmatprep.subr.mxu0 0.0
    %2866 = vmatpush1.msra.mxu0 %v2829
    %2867 = vmatprep.subr.mxu0 0.0
    %2868 = vmatpush1.msra.mxu0 %v2830
    %2869 = vmatprep.subr.mxu0 0.0
    %2870 = vmatpush1.msra.mxu0 0.0
    %2871 = vmatprep.subr.mxu0 0.0
    %2872 = vmatpush1.msra.mxu0 0.0
    %2873 = vmatprep.subr.mxu0 0.0
    %2874 = vmatpush1.msra.mxu0 0.0
    %2875 = vmatprep.subr.mxu0 0.0
    %2876 = vmatpush1.msra.mxu0 0.0
    %2877 = vmatprep.subr.mxu0 0.0
    %2878 = vmatpush1.msra.mxu0 0.0
    %2879 = vmatprep.subr.mxu0 0.0
    %2880 = vmatpush1.msra.mxu0 0.0
    %2881 = vmatprep.subr.mxu0 0.0
    %2882 = vmatpush1.msra.mxu0 0.0
    %2883 = vmatprep.subr.mxu0 0.0
    %2884 = vmatpush1.msra.mxu0 0.0
    %2885 = vmatprep.subr.mxu0 0.0
    %2886 = vmatpush1.msra.mxu0 0.0
    %2887 = vmatprep.subr.mxu0 0.0
    %2888 = vmatpush1.msra.mxu0 0.0
    %2889 = vmatprep.subr.mxu0 0.0
    %2890 = vmatpush1.msra.mxu0 0.0
    %2891 = vmatprep.subr.mxu0 0.0
    %2892 = vmatpush1.msra.mxu0 0.0
    %2893 = vmatprep.subr.mxu0 0.0
    %2894 = vmatpush1.msra.mxu0 0.0
    %2895 = vmatprep.subr.mxu0 0.0
    %2896 = vmatpush1.msra.mxu0 0.0
    %2897 = vmatprep.subr.mxu0 0.0
    %2898 = vmatpush1.msra.mxu0 0.0
    %2899 = vmatprep.subr.mxu0 0.0
    %2900 = vmatpush1.msra.mxu0 0.0
    %2901 = vmatprep.mubr.f32.mxu0 0.0
    %2902 = vmatmul.mubr.f32.gmra.mrb[0].mxu0 %v2812
    %v2903 = vpop.f32.mrb[0].mxu0
    %v2904 = vadd.f32 %v2836, %v2903
    %v2905 = vpop.f32.mrb[0].mxu0
    %2906 = vmatprep.mubr.f32.mxu0 0.0
    %2907 = vmatmul.mubr.f32.gmra.mrb[0].mxu0 %v2813
    %v2908 = vpop.f32.mrb[0].mxu0
    %v2909 = vadd.f32 %v2836, %v2908
    %v2910 = vpop.f32.mrb[0].mxu0
    %2911 = vdwg.mxu0
    %v2912 = vadd.f32 %v2904, %v2909
    %v2913 = vrot.slane %v2912, 4
    %v2914 = vadd.f32 %v2912, %v2913
    %v2915 = vrot.slane %v2914, 2
    %v2916 = vadd.f32 %v2914, %v2915
    %v2917 = vrot.slane %v2916, 1
    %v2918 = vadd.f32 %v2916, %v2917
    %v2919 = vmul.f32 %v2918, 0.0625
    %v2920 = vmul.f32 %v2904, %v2904
    %v2921 = vmul.f32 %v2909, %v2909
    %v2922 = vadd.f32 %v2920, %v2921
    %v2923 = vrot.slane %v2922, 4
    %v2924 = vadd.f32 %v2922, %v2923
    %v2925 = vrot.slane %v2924, 2
    %v2926 = vadd.f32 %v2924, %v2925
    %v2927 = vrot.slane %v2926, 1
    %v2928 = vadd.f32 %v2926, %v2927
    %v2929 = vmul.f32 %v2928, 0.0625
    %v2930 = vmul.f32 %v2919, %v2919
    %v2931 = vsub.f32 %v2929, %v2930
    %v2932 = vmax.f32 %v2931, 0.0
    %v2933 = vadd.f32 %v2932, 1e-05
    %v2934 = vrsqrt.pop %v2933
    %v2935 = vmul.f32 %v2832, %v2934
    %v2936 = vmul.f32 %v2919, %v2935
    %v2938 = vrot.slane %v2936, 7
    %v2940 = vsub.f32 %v2832, %v2938
    %v2941 = vlaneseq
    %v2942 = vshrl.u32 %v2941, 7
    %v2943 = vsub.s32 1, %v2942
    %v2944 = vrot.slane %v2935, %v2943
    %v2945 = vmul.f32 %v2904, %v2944
    %v2946 = vmul.f32 %v2909, %v2944
    %v2947 = vlaneseq
    %v2948 = vshrl.u32 %v2947, 7
    %v2949 = vsub.s32 2, %v2948
    %v2950 = vrot.slane %v2940, %v2949
    %v2951 = vadd.f32 %v2945, %v2950
    %v2952 = vadd.f32 %v2946, %v2950
    %v2953 = vmax.f32 %v2951, 0.0
    %v2954 = vmax.f32 %v2952, 0.0
    %v2955 = vld [vmem:[#allocation7] sm:$0xff]
    %v2956 = vld [vmem:[#allocation7 + $0x8] sm:$0xff]
    %v2957 = vld [vmem:[#allocation7 + $0x10] sm:$0xff]
    %v2958 = vld [vmem:[#allocation7 + $0x18] sm:$0xff]
    %v2959 = vld [vmem:[#allocation7 + $0x20] sm:$0xff]
    %v2960 = vld [vmem:[#allocation7 + $0x28] sm:$0xff]
    %v2961 = vld [vmem:[#allocation7 + $0x30] sm:$0xff]
    %v2962 = vld [vmem:[#allocation7 + $0x38] sm:$0xff]
    %v2963 = vld [vmem:[#allocation7 + $0x40] sm:$0xff]
    %v2964 = vld [vmem:[#allocation7 + $0x48] sm:$0xff]
    %v2965 = vld [vmem:[#allocation7 + $0x50] sm:$0xff]
    %v2966 = vld [vmem:[#allocation7 + $0x58] sm:$0xff]
    %v2967 = vld [vmem:[#allocation7 + $0x60] sm:$0xff]
    %v2968 = vld [vmem:[#allocation7 + $0x68] sm:$0xff]
    %v2969 = vld [vmem:[#allocation7 + $0x70] sm:$0xff]
    %v2970 = vld [vmem:[#allocation7 + $0x78] sm:$0xff]
    %v2971 = vld [vmem:[#allocation9] sm:$0x1]
    %v2973 = vlaneseq
    %v2974 = vshrl.u32 %v2973, 7
    %v2975 = vsub.s32 0, %v2974
    %v2976 = vrot.slane %v2971, %v2975
    %2978 = vmatprep.subr.mxu0 0.0
    %2979 = vmatpush1.msra.mxu0 %v2955
    %2980 = vmatprep.subr.mxu0 0.0
    %2981 = vmatpush1.msra.mxu0 %v2956
    %2982 = vmatprep.subr.mxu0 0.0
    %2983 = vmatpush1.msra.mxu0 %v2957
    %2984 = vmatprep.subr.mxu0 0.0
    %2985 = vmatpush1.msra.mxu0 %v2958
    %2986 = vmatprep.subr.mxu0 0.0
    %2987 = vmatpush1.msra.mxu0 %v2959
    %2988 = vmatprep.subr.mxu0 0.0
    %2989 = vmatpush1.msra.mxu0 %v2960
    %2990 = vmatprep.subr.mxu0 0.0
    %2991 = vmatpush1.msra.mxu0 %v2961
    %2992 = vmatprep.subr.mxu0 0.0
    %2993 = vmatpush1.msra.mxu0 %v2962
    %2994 = vmatprep.subr.mxu0 0.0
    %2995 = vmatpush1.msra.mxu0 %v2963
    %2996 = vmatprep.subr.mxu0 0.0
    %2997 = vmatpush1.msra.mxu0 %v2964
    %2998 = vmatprep.subr.mxu0 0.0
    %2999 = vmatpush1.msra.mxu0 %v2965
    %3000 = vmatprep.subr.mxu0 0.0
    %3001 = vmatpush1.msra.mxu0 %v2966
    %3002 = vmatprep.subr.mxu0 0.0
    %3003 = vmatpush1.msra.mxu0 %v2967
    %3004 = vmatprep.subr.mxu0 0.0
    %3005 = vmatpush1.msra.mxu0 %v2968
    %3006 = vmatprep.subr.mxu0 0.0
    %3007 = vmatpush1.msra.mxu0 %v2969
    %3008 = vmatprep.subr.mxu0 0.0
    %3009 = vmatpush1.msra.mxu0 %v2970
    %3010 = vmatprep.subr.mxu0 0.0
    %3011 = vmatpush1.msra.mxu0 0.0
    %3012 = vmatprep.subr.mxu0 0.0
    %3013 = vmatpush1.msra.mxu0 0.0
    %3014 = vmatprep.subr.mxu0 0.0
    %3015 = vmatpush1.msra.mxu0 0.0
    %3016 = vmatprep.subr.mxu0 0.0
    %3017 = vmatpush1.msra.mxu0 0.0
    %3018 = vmatprep.subr.mxu0 0.0
    %3019 = vmatpush1.msra.mxu0 0.0
    %3020 = vmatprep.subr.mxu0 0.0
    %3021 = vmatpush1.msra.mxu0 0.0
    %3022 = vmatprep.subr.mxu0 0.0
    %3023 = vmatpush1.msra.mxu0 0.0
    %3024 = vmatprep.subr.mxu0 0.0
    %3025 = vmatpush1.msra.mxu0 0.0
    %3026 = vmatprep.subr.mxu0 0.0
    %3027 = vmatpush1.msra.mxu0 0.0
    %3028 = vmatprep.subr.mxu0 0.0
    %3029 = vmatpush1.msra.mxu0 0.0
    %3030 = vmatprep.subr.mxu0 0.0
    %3031 = vmatpush1.msra.mxu0 0.0
    %3032 = vmatprep.subr.mxu0 0.0
    %3033 = vmatpush1.msra.mxu0 0.0
    %3034 = vmatprep.subr.mxu0 0.0
    %3035 = vmatpush1.msra.mxu0 0.0
    %3036 = vmatprep.subr.mxu0 0.0
    %3037 = vmatpush1.msra.mxu0 0.0
    %3038 = vmatprep.subr.mxu0 0.0
    %3039 = vmatpush1.msra.mxu0 0.0
    %3040 = vmatprep.subr.mxu0 0.0
    %3041 = vmatpush1.msra.mxu0 0.0
    %3042 = vmatprep.mubr.f32.mxu0 0.0
    %3043 = vmatmul.mubr.f32.gmra.mrb[0].mxu0 %v2953
    %v3044 = vpop.f32.mrb[0].mxu0
    %v3045 = vadd.f32 %v2976, %v3044
    %v3046 = vpop.f32.mrb[0].mxu0
    %3047 = vmatprep.mubr.f32.mxu0 0.0
    %3048 = vmatmul.mubr.f32.gmra.mrb[0].mxu0 %v2954
    %v3049 = vpop.f32.mrb[0].mxu0
    %v3050 = vadd.f32 %v2976, %v3049
    %v3051 = vpop.f32.mrb[0].mxu0
    %3052 = vdwg.mxu0
    %3053 = vst [vmem:[%s6] sm:$0xff] %v3045
    %3054 = vst [vmem:[%s6 + $0x8] sm:$0xff] %v3050
    // Predicated region
    $region46: #{neural_net_forward.1} parent=1 // pred_check
      _
    $region47: #{neural_net_forward.1} parent=1 // pred_check_branch
      %3056 = sbr.rel (0) target = $region49
    $region48: #{neural_net_forward.1} parent=1 // pred_region
      _
    $region49: #{neural_net_forward.1} parent=1 // pred_fallthru
      _
    // Predicated region
    $region50: #{neural_net_forward.1} parent=1 // pred_check
      _
    $region51: #{neural_net_forward.1} parent=1 // pred_check_branch
      %3058 = sbr.rel (0) target = $region53
    $region52: #{neural_net_forward.1} parent=1 // pred_region
      _
    $region53: #{neural_net_forward.1} parent=1 // pred_fallthru
      _
    %3059 = vsyncpa [#allocation3], 1
    %3060 = vsyncpa [#allocation5], 1
    %3061 = vsyncpa [#allocation8], 1

</llo_original>
